<compile_context>
chip_gen: v5e
topology: v5e:2x2
jax: 0.10.0
libtpu: 0.0.40
codegen_flags: <defaults>
</compile_context>

<pallas_src>
import functools

import jax
import jax.numpy as jnp
from jax import lax
from jax.experimental import pallas as pl
from jax.experimental.pallas import tpu as pltpu

# ---- Module hyper-parameters (Feature_Encoder.__init__ args) ----------------
IN_CHANNELS = 8
OUT_CHANNELS = 16
WAVENET_STACK = 2
CONV_STACK = 3
KERNEL_SIZE = 3
DILATION_RATE = 2
DROPOUT_RATE = 0.0   # inference / rate 0 -> dropout is identity

BATCH = 2
TIME = 32

OUT_LANES = 128      # lane-dense output slab width (means ‖ stds ‖ zero pad)

# receptive half-width must stay below T for the batch-folded roll + validity
# masking to be exact (review correctness concern).
_MAX_PAD = (KERNEL_SIZE - 1) * DILATION_RATE ** (CONV_STACK - 1) // 2
assert _MAX_PAD < TIME, "receptive half-width must be < T"


# -----------------------------------------------------------------------------
# Kernel (single invocation, batch folded into rows, packed [x ‖ skips] state)
# -----------------------------------------------------------------------------
def feature_encoder_kernel(
    lengths_ref,                       # [B] int32 (SMEM scalar prefetch)
    feat_ref,                          # [B*T, Cin]
    wpre_ref, bpre_ref,                # [Cin, 2C], [1, 2C]   (x half ‖ zeros)
    wgate_ref,                         # [S, L, K*2C, 2C]     (tanh ‖ sigmoid, x rows only)
    wrs_ref,                           # [S, L, C, 2C]        (residual/skip, orientation-packed)
    bg_ref, brs_ref,                   # [S, L, 1, 2C] each
    wproj_ref, bproj_ref,              # [2C, 128], [1, 128]  (mean ‖ std ‖ zero pad)
    out_ref,                           # [B*T, 128]
    *, batch, time,
):
    C = OUT_CHANNELS
    C2 = 2 * C
    T = time
    BT = batch * time

    # ---- per-row bookkeeping: only t_idx + mask stay live (16 vregs) --------
    row = lax.broadcasted_iota(jnp.int32, (BT, 1), 0)
    if T & (T - 1) == 0:
        t_idx = jnp.bitwise_and(row, T - 1)              # cheap power-of-two rem
    else:
        t_idx = row
        for b in range(1, batch):
            t_idx = jnp.where(row >= b * T, row - b * T, t_idx)
    len_row = jnp.zeros((BT, 1), jnp.int32) + lengths_ref[0]
    for b in range(1, batch):
        len_row = jnp.where(row >= b * T, lengths_ref[b], len_row)
    mask = (t_idx < len_row).astype(jnp.float32)          # [BT, 1]; 1.0 = valid

    lane = lax.broadcasted_iota(jnp.int32, (1, C2), 1)    # for stack-boundary keep masks

    def shift(x, off):
        """y[r] = x[r + off] within the row's batch element, zero elsewhere.
        Validity is recomputed per use (VALU only) instead of pinning [BT,1]
        buffers in vregs; it also stops the batch-folded roll from leaking
        across batch boundaries / wrapping."""
        if off == 0:
            return x
        to = t_idx + off
        valid = ((to >= 0) & (to < T)).astype(jnp.float32)
        return pltpu.roll(x, shift=(-off) % BT, axis=0) * valid

    # prenet (1x1 conv): packed state = [x ‖ skips]; skips half starts at zero
    # because the prenet weight/bias columns for that half are zero-padded.
    x_in = feat_ref[...]                                  # [BT, Cin]
    state = (jnp.dot(x_in, wpre_ref[...], preferred_element_type=jnp.float32)
             + bpre_ref[...]) * mask                      # [BT, 2C]

    # WaveNet stacks. Block s keeps x in lanes [x_off, x_off+C) with
    # x_off = (s % 2) * C (orientation alternates; baked into packed weights).
    for s in range(WAVENET_STACK):
        for l in range(CONV_STACK):
            d = DILATION_RATE ** l
            pad = (KERNEL_SIZE - 1) * d // 2
            # fuse the K dilated taps along channels -> one MXU push per layer
            # (kept fused: per-tap MRB accumulation only pays off on v7x).
            xs_cat = jnp.concatenate(
                [shift(state, k * d - pad) for k in range(KERNEL_SIZE)], axis=1)
            gate = (jnp.dot(xs_cat, wgate_ref[s, l],
                            preferred_element_type=jnp.float32)
                    + bg_ref[s, l])                       # [BT, 2C] (tanh ‖ sigmoid)
            acts = jnp.tanh(gate[:, :C]) * jax.nn.sigmoid(gate[:, C:])  # [BT, C]
            # TODO(synk): torch.nn.Dropout treated as identity (eval / rate 0.0).
            rs = (jnp.dot(acts, wrs_ref[s, l],
                          preferred_element_type=jnp.float32)
                  + brs_ref[s, l])                        # [BT, 2C] residual/skip, packed
            # single fused update: x half gets +residual, skips half gets +skip
            state = (state + rs) * mask
        if s + 1 < WAVENET_STACK:
            # hand this block's skips half to the next block as its x; zero the
            # retired x half (next block's skip accumulator) with a constant
            # lane mask -- no roll, no slice.
            skips_off = C - (s % 2) * C
            keep = ((lane >= skips_off) & (lane < skips_off + C)).astype(jnp.float32)
            state = state * keep

    # projection (1x1 conv) straight to a lane-dense [BT, 128] slab:
    # means in lanes [0,C), stds in [C,2C), zeros beyond (zero-padded weights).
    proj = (jnp.dot(state, wproj_ref[...], preferred_element_type=jnp.float32)
            + bproj_ref[...])                             # [BT, 128]
    out_lane = lax.broadcasted_iota(jnp.int32, (1, OUT_LANES), 1)
    softplus = jnp.maximum(proj, 0.0) + jnp.log1p(jnp.exp(-jnp.abs(proj)))
    out_ref[...] = jnp.where(out_lane >= C, softplus, proj)


# -----------------------------------------------------------------------------
# Wrapper (single jit: layout ops fuse with the pallas_call in one XLA program)
# -----------------------------------------------------------------------------
@jax.jit
def feature_encoder(features_nct, lengths, packed):
    """features_nct: [B, Cin, T] (PyTorch NCT), lengths: [B] int.
    packed: pre-packed parameters (see pack_params).
    Returns (means, stds), each [B, Cout, T]."""
    B, C_in, T = features_nct.shape
    C = OUT_CHANNELS
    BT = B * T
    assert (KERNEL_SIZE - 1) * DILATION_RATE ** (CONV_STACK - 1) // 2 < T

    feats = (jnp.transpose(features_nct, (0, 2, 1))
             .astype(jnp.float32).reshape(BT, C_in))      # [B*T, Cin]

    def full(arr):
        nd = arr.ndim
        return pl.BlockSpec(arr.shape, lambda i, lens, _nd=nd: (0,) * _nd)

    kernel = functools.partial(feature_encoder_kernel, batch=B, time=T)

    grid_spec = pltpu.PrefetchScalarGridSpec(
        num_scalar_prefetch=1,            # lengths -> SMEM
        grid=(1,),                        # single invocation (latency-bound problem)
        # NOTE: a 'parallel' batch axis would help v7x's 2 TensorCores only.
        in_specs=[
            pl.BlockSpec((BT, C_in), lambda i, lens: (0, 0)),
            full(packed['w_pre']), full(packed['b_pre']),
            full(packed['w_gate']), full(packed['w_rs']),
            full(packed['b_gate']), full(packed['b_rs']),
            full(packed['w_proj']), full(packed['b_proj']),
        ],
        out_specs=pl.BlockSpec((BT, OUT_LANES), lambda i, lens: (0, 0)),
    )

    out = pl.pallas_call(
        kernel,
        out_shape=jax.ShapeDtypeStruct((BT, OUT_LANES), jnp.float32),
        grid_spec=grid_spec,
        compiler_params=pltpu.CompilerParams(
            dimension_semantics=("arbitrary",)),
    )(lengths.astype(jnp.int32), feats,
      packed['w_pre'], packed['b_pre'],
      packed['w_gate'], packed['w_rs'],
      packed['b_gate'], packed['b_rs'],
      packed['w_proj'], packed['b_proj'])

    out_bct = jnp.transpose(out.reshape(B, T, OUT_LANES), (0, 2, 1))  # [B, 128, T]
    means = out_bct[:, :C, :]
    stds = out_bct[:, C:2 * C, :]
    return means, stds


# -----------------------------------------------------------------------------
# Deterministic raw parameters (shapes follow __init__) + packed-state packing
# -----------------------------------------------------------------------------
def make_params(key):
    C_in, C = IN_CHANNELS, OUT_CHANNELS
    S, L, K = WAVENET_STACK, CONV_STACK, KERNEL_SIZE
    keys = jax.random.split(key, 12)

    def n(k, shape, scale=0.1):
        return (scale * jax.random.normal(k, shape)).astype(jnp.float32)

    return dict(
        # prenet Conv1d(Cin -> C, k=1)
        prew=n(keys[0], (C_in, C)), preb=n(keys[1], (1, C), 0.01),
        # input_convs Conv1d(C -> 2C, k=K, dilated); split into tanh/sigmoid halves
        inwt=n(keys[2], (S, L, K, C, C)), inws=n(keys[3], (S, L, K, C, C)),
        inbt=n(keys[4], (S, L, 1, C), 0.01), inbs=n(keys[5], (S, L, 1, C), 0.01),
        # residual_and_skip_convs Conv1d(C -> 2C, k=1); split into residual/skip
        rswr=n(keys[6], (S, L, C, C)), rswk=n(keys[7], (S, L, C, C)),
        rsbr=n(keys[8], (S, L, 1, C), 0.01), rsbk=n(keys[9], (S, L, 1, C), 0.01),
        # projection Conv1d(C -> 2C, k=1); split into mean/std
        pwm=n(keys[10], (C, C)), pws=n(keys[11], (C, C)),
        pbm=jnp.zeros((1, C), jnp.float32), pbs=jnp.zeros((1, C), jnp.float32),
    )


def pack_params(p):
    """Pre-pack weights for the packed [x ‖ skips] state layout.

    Block s keeps x in lanes [x_off, x_off+C) with x_off = (s % 2) * C; the
    residual/skip output halves and the gate-weight input rows are arranged to
    match, so the kernel never slices the state."""
    C, K, S, L = OUT_CHANNELS, KERNEL_SIZE, WAVENET_STACK, CONV_STACK
    C2 = 2 * C
    zC = jnp.zeros((p['prew'].shape[0], C), jnp.float32)

    # prenet -> state lanes [:C] (block 0 orientation); skips half zero
    w_pre = jnp.concatenate([p['prew'], zC], axis=-1)                 # [Cin, 2C]
    b_pre = jnp.concatenate([p['preb'], jnp.zeros((1, C), jnp.float32)], axis=-1)

    w_gate = jnp.zeros((S, L, K * C2, C2), jnp.float32)
    w_rs = jnp.zeros((S, L, C, C2), jnp.float32)
    b_gate = jnp.zeros((S, L, 1, C2), jnp.float32)
    b_rs = jnp.zeros((S, L, 1, C2), jnp.float32)
    for s in range(S):
        x_off = (s % 2) * C
        for l in range(L):
            for k in range(K):
                blk = jnp.concatenate(
                    [p['inwt'][s, l, k], p['inws'][s, l, k]], axis=-1)  # [C, 2C]
                r0 = k * C2 + x_off
                w_gate = w_gate.at[s, l, r0:r0 + C, :].set(blk)
            b_gate = b_gate.at[s, l].set(
                jnp.concatenate([p['inbt'][s, l], p['inbs'][s, l]], axis=-1))
            if x_off == 0:   # state = [x ‖ skips]  -> rs = [residual ‖ skip]
                w_rs = w_rs.at[s, l].set(
                    jnp.concatenate([p['rswr'][s, l], p['rswk'][s, l]], axis=-1))
                b_rs = b_rs.at[s, l].set(
                    jnp.concatenate([p['rsbr'][s, l], p['rsbk'][s, l]], axis=-1))
            else:            # state = [skips ‖ x]  -> rs = [skip ‖ residual]
                w_rs = w_rs.at[s, l].set(
                    jnp.concatenate([p['rswk'][s, l], p['rswr'][s, l]], axis=-1))
                b_rs = b_rs.at[s, l].set(
                    jnp.concatenate([p['rsbk'][s, l], p['rsbr'][s, l]], axis=-1))

    # projection reads the skips half of the last block; pad output lanes to 128
    skips_off_last = C - ((S - 1) % 2) * C
    wp = jnp.concatenate([p['pwm'], p['pws']], axis=-1)                # [C, 2C]
    wp = jnp.pad(wp, ((0, 0), (0, OUT_LANES - C2)))                    # [C, 128]
    w_proj = jnp.zeros((C2, OUT_LANES), jnp.float32)
    w_proj = w_proj.at[skips_off_last:skips_off_last + C, :].set(wp)
    b_proj = jnp.pad(jnp.concatenate([p['pbm'], p['pbs']], axis=-1),
                     ((0, 0), (0, OUT_LANES - C2)))                    # [1, 128]

    return dict(w_pre=w_pre, b_pre=b_pre,
                w_gate=w_gate, w_rs=w_rs, b_gate=b_gate, b_rs=b_rs,
                w_proj=w_proj, b_proj=b_proj)


# -----------------------------------------------------------------------------
# Pure-JAX reference (unfused, uses the raw parameters) for correctness check
# -----------------------------------------------------------------------------
def _shift_ref(x, offset):  # x: [B, T, C]
    T = x.shape[1]
    if offset == 0:
        return x
    if offset > 0:
        return jnp.pad(x[:, offset:, :], ((0, 0), (0, offset), (0, 0)))
    return jnp.pad(x[:, :T + offset, :], ((0, 0), (-offset, 0), (0, 0)))


def reference(features_nct, lengths, params):
    B, C_in, T = features_nct.shape
    C = OUT_CHANNELS
    dot = functools.partial(jnp.einsum, precision=lax.Precision.HIGHEST)
    x_in = jnp.transpose(features_nct, (0, 2, 1)).astype(jnp.float32)
    mask = (jnp.arange(T)[None, :] < lengths[:, None]).astype(jnp.float32)[:, :, None]

    enc = (dot('btc,cd->btd', x_in, params['prew']) + params['preb']) * mask
    for s in range(WAVENET_STACK):
        x = enc
        skips_sum = jnp.zeros((B, T, C), jnp.float32)
        for l in range(CONV_STACK):
            dilation = DILATION_RATE ** l
            pad = (KERNEL_SIZE - 1) * dilation // 2
            y_t = jnp.zeros((B, T, C), jnp.float32)
            y_s = jnp.zeros((B, T, C), jnp.float32)
            for k in range(KERNEL_SIZE):
                xs = _shift_ref(x, k * dilation - pad)
                y_t = y_t + dot('btc,cd->btd', xs, params['inwt'][s, l, k])
                y_s = y_s + dot('btc,cd->btd', xs, params['inws'][s, l, k])
            y_t = y_t + params['inbt'][s, l]
            y_s = y_s + params['inbs'][s, l]
            acts = jnp.tanh(y_t) * jax.nn.sigmoid(y_s)
            residuals = dot('btc,cd->btd', acts, params['rswr'][s, l]) + params['rsbr'][s, l]
            skips = dot('btc,cd->btd', acts, params['rswk'][s, l]) + params['rsbk'][s, l]
            x = (x + residuals) * mask
            skips_sum = skips_sum + skips
        enc = skips_sum * mask
    means = dot('btc,cd->btd', enc, params['pwm']) + params['pbm']
    raw_s = dot('btc,cd->btd', enc, params['pws']) + params['pbs']
    stds = jax.nn.softplus(raw_s)
    return jnp.transpose(means, (0, 2, 1)), jnp.transpose(stds, (0, 2, 1))


# -----------------------------------------------------------------------------
if __name__ == "__main__":
    key = jax.random.PRNGKey(0)
    k_feat, k_par = jax.random.split(key)
    features = jax.random.normal(k_feat, (BATCH, IN_CHANNELS, TIME), dtype=jnp.float32)
    lengths = jnp.array([TIME, 20], dtype=jnp.int32)
    raw_params = make_params(k_par)
    packed_params = pack_params(raw_params)

    means, stds = feature_encoder(features, lengths, packed_params)
    jax.block_until_ready((means, stds))

    assert means.shape == (BATCH, OUT_CHANNELS, TIME)
    assert stds.shape == (BATCH, OUT_CHANNELS, TIME)
    assert bool(jnp.all(jnp.isfinite(means))) and bool(jnp.all(jnp.isfinite(stds)))

    ref_m, ref_s = reference(features, lengths, raw_params)
    assert bool(jnp.allclose(means, ref_m, atol=2e-3, rtol=2e-3)), "means mismatch"
    assert bool(jnp.allclose(stds, ref_s, atol=2e-3, rtol=2e-3)), "stds mismatch"

    print("KERNEL_OK")
</pallas_src>

<mosaic_0001>
module attributes {stable_mosaic.version = 11 : i64} {
  func.func @feature_encoder_kernel(%arg0: i32, %arg1: memref<2xi32, #tpu.memory_space<smem>>, %arg2: memref<64x8xf32, #tpu.memory_space<vmem>>, %arg3: memref<8x32xf32, #tpu.memory_space<vmem>>, %arg4: memref<1x32xf32, #tpu.memory_space<vmem>>, %arg5: memref<2x3x96x32xf32, #tpu.memory_space<vmem>>, %arg6: memref<2x3x16x32xf32, #tpu.memory_space<vmem>>, %arg7: memref<2x3x1x32xf32, #tpu.memory_space<vmem>>, %arg8: memref<2x3x1x32xf32, #tpu.memory_space<vmem>>, %arg9: memref<32x128xf32, #tpu.memory_space<vmem>>, %arg10: memref<1x128xf32, #tpu.memory_space<vmem>>, %arg11: memref<64x128xf32, #tpu.memory_space<vmem>>) attributes {dimension_semantics = [#tpu.dimension_semantics<arbitrary>], iteration_bounds = array<i64: 1>, scalar_prefetch = 1 : i64, scratch_operands = 0 : i64, tpu.core_type = #tpu.core_type<tc>, window_params = [{pipeline_mode = #tpu.pipeline_mode<synchronous>, transform_indices = @transform_0, window_bounds = array<i64: 64, 8>}, {pipeline_mode = #tpu.pipeline_mode<synchronous>, transform_indices = @transform_1, window_bounds = array<i64: 8, 32>}, {pipeline_mode = #tpu.pipeline_mode<synchronous>, transform_indices = @transform_2, window_bounds = array<i64: 1, 32>}, {pipeline_mode = #tpu.pipeline_mode<synchronous>, transform_indices = @transform_3, window_bounds = array<i64: 2, 3, 96, 32>}, {pipeline_mode = #tpu.pipeline_mode<synchronous>, transform_indices = @transform_4, window_bounds = array<i64: 2, 3, 16, 32>}, {pipeline_mode = #tpu.pipeline_mode<synchronous>, transform_indices = @transform_5, window_bounds = array<i64: 2, 3, 1, 32>}, {pipeline_mode = #tpu.pipeline_mode<synchronous>, transform_indices = @transform_6, window_bounds = array<i64: 2, 3, 1, 32>}, {pipeline_mode = #tpu.pipeline_mode<synchronous>, transform_indices = @transform_7, window_bounds = array<i64: 32, 128>}, {pipeline_mode = #tpu.pipeline_mode<synchronous>, transform_indices = @transform_8, window_bounds = array<i64: 1, 128>}, {pipeline_mode = #tpu.pipeline_mode<synchronous>, transform_indices = @transform_9, window_bounds = array<i64: 64, 128>}]} {
    %0 = tpu.iota {dimensions = array<i32: 0>} : vector<64x1xi32>
    %c31_i32 = arith.constant 31 : i32
    %1 = vector.broadcast %c31_i32 : i32 to vector<64x1xi32>
    %2 = arith.andi %0, %1 : vector<64x1xi32>
    %c0_i32 = arith.constant 0 : i32
    %3 = vector.broadcast %c0_i32 : i32 to vector<64x1xi32>
    %c0 = arith.constant 0 : index
    %4 = memref.load %arg1[%c0] : memref<2xi32, #tpu.memory_space<smem>>
    %5 = vector.broadcast %4 : i32 to vector<64x1xi32>
    %6 = arith.addi %3, %5 : vector<64x1xi32>
    %c32_i32 = arith.constant 32 : i32
    %7 = vector.broadcast %c32_i32 : i32 to vector<64x1xi32>
    %8 = arith.cmpi sge, %0, %7 : vector<64x1xi32>
    %c1 = arith.constant 1 : index
    %9 = memref.load %arg1[%c1] : memref<2xi32, #tpu.memory_space<smem>>
    %10 = vector.broadcast %9 : i32 to vector<64x1xi32>
    %11 = arith.select %8, %10, %6 : vector<64x1xi1>, vector<64x1xi32>
    %12 = arith.cmpi slt, %2, %11 : vector<64x1xi32>
    %13 = arith.extui %12 : vector<64x1xi1> to vector<64x1xi32>
    %14 = arith.sitofp %13 : vector<64x1xi32> to vector<64x1xf32>
    %15 = tpu.iota {dimensions = array<i32: 1>} : vector<1x32xi32>
    %c0_0 = arith.constant 0 : index
    %c0_1 = arith.constant 0 : index
    %16 = vector.load %arg2[%c0_0, %c0_1] : memref<64x8xf32, #tpu.memory_space<vmem>>, vector<64x8xf32>
    %c0_2 = arith.constant 0 : index
    %c0_3 = arith.constant 0 : index
    %17 = vector.load %arg3[%c0_2, %c0_3] : memref<8x32xf32, #tpu.memory_space<vmem>>, vector<8x32xf32>
    %cst = arith.constant dense<0.000000e+00> : vector<64x32xf32>
    %18 = tpu.matmul %16, %17, %cst {dimension_numbers = #tpu.dot_dimension_numbers<[1], [0], [0], [1], [0, 0, 1, 1], [], []>} : vector<64x8xf32>, vector<8x32xf32>, vector<64x32xf32> -> vector<64x32xf32>
    %c0_4 = arith.constant 0 : index
    %c0_5 = arith.constant 0 : index
    %19 = vector.load %arg4[%c0_4, %c0_5] : memref<1x32xf32, #tpu.memory_space<vmem>>, vector<1x32xf32>
    %20 = vector.broadcast %19 : vector<1x32xf32> to vector<64x32xf32>
    %21 = arith.addf %18, %20 : vector<64x32xf32>
    %22 = vector.broadcast %14 : vector<64x1xf32> to vector<64x32xf32>
    %23 = arith.mulf %21, %22 : vector<64x32xf32>
    %c-1_i32 = arith.constant -1 : i32
    %24 = vector.broadcast %c-1_i32 : i32 to vector<64x1xi32>
    %25 = arith.addi %2, %24 : vector<64x1xi32>
    %c0_i32_6 = arith.constant 0 : i32
    %26 = vector.broadcast %c0_i32_6 : i32 to vector<64x1xi32>
    %27 = arith.cmpi sge, %25, %26 : vector<64x1xi32>
    %c32_i32_7 = arith.constant 32 : i32
    %28 = vector.broadcast %c32_i32_7 : i32 to vector<64x1xi32>
    %29 = arith.cmpi slt, %25, %28 : vector<64x1xi32>
    %30 = arith.andi %27, %29 : vector<64x1xi1>
    %31 = arith.extui %30 : vector<64x1xi1> to vector<64x1xi32>
    %32 = arith.sitofp %31 : vector<64x1xi32> to vector<64x1xf32>
    %c1_i32 = arith.constant 1 : i32
    %33 = tpu.dynamic_rotate %23 by %c1_i32 dim 0 : vector<64x32xf32>, i32 -> vector<64x32xf32>
    %34 = vector.broadcast %32 : vector<64x1xf32> to vector<64x32xf32>
    %35 = arith.mulf %33, %34 : vector<64x32xf32>
    %c1_i32_8 = arith.constant 1 : i32
    %36 = vector.broadcast %c1_i32_8 : i32 to vector<64x1xi32>
    %37 = arith.addi %2, %36 : vector<64x1xi32>
    %c0_i32_9 = arith.constant 0 : i32
    %38 = vector.broadcast %c0_i32_9 : i32 to vector<64x1xi32>
    %39 = arith.cmpi sge, %37, %38 : vector<64x1xi32>
    %c32_i32_10 = arith.constant 32 : i32
    %40 = vector.broadcast %c32_i32_10 : i32 to vector<64x1xi32>
    %41 = arith.cmpi slt, %37, %40 : vector<64x1xi32>
    %42 = arith.andi %39, %41 : vector<64x1xi1>
    %43 = arith.extui %42 : vector<64x1xi1> to vector<64x1xi32>
    %44 = arith.sitofp %43 : vector<64x1xi32> to vector<64x1xf32>
    %c63_i32 = arith.constant 63 : i32
    %45 = tpu.dynamic_rotate %23 by %c63_i32 dim 0 : vector<64x32xf32>, i32 -> vector<64x32xf32>
    %46 = vector.broadcast %44 : vector<64x1xf32> to vector<64x32xf32>
    %47 = arith.mulf %45, %46 : vector<64x32xf32>
    %48 = tpu.concatenate %35, %23, %47 in 1 : vector<64x32xf32>, vector<64x32xf32>, vector<64x32xf32> -> vector<64x96xf32>
    %c0_11 = arith.constant 0 : index
    %c0_12 = arith.constant 0 : index
    %c0_13 = arith.constant 0 : index
    %c0_14 = arith.constant 0 : index
    %49 = vector.load %arg5[%c0_11, %c0_12, %c0_13, %c0_14] : memref<2x3x96x32xf32, #tpu.memory_space<vmem>>, vector<1x1x96x32xf32>
    %50 = vector.shape_cast %49 : vector<1x1x96x32xf32> to vector<96x32xf32>
    %cst_15 = arith.constant dense<0.000000e+00> : vector<64x32xf32>
    %51 = tpu.matmul %48, %50, %cst_15 {dimension_numbers = #tpu.dot_dimension_numbers<[1], [0], [0], [1], [0, 0, 1, 1], [], []>} : vector<64x96xf32>, vector<96x32xf32>, vector<64x32xf32> -> vector<64x32xf32>
    %c0_16 = arith.constant 0 : index
    %c0_17 = arith.constant 0 : index
    %c0_18 = arith.constant 0 : index
    %c0_19 = arith.constant 0 : index
    %52 = vector.load %arg7[%c0_16, %c0_17, %c0_18, %c0_19] : memref<2x3x1x32xf32, #tpu.memory_space<vmem>>, vector<1x1x1x32xf32>
    %53 = vector.shape_cast %52 : vector<1x1x1x32xf32> to vector<1x32xf32>
    %54 = vector.broadcast %53 : vector<1x32xf32> to vector<64x32xf32>
    %55 = arith.addf %51, %54 : vector<64x32xf32>
    %56 = vector.extract_strided_slice %55 {offsets = [0, 0], sizes = [64, 16], strides = [1, 1]} : vector<64x32xf32> to vector<64x16xf32>
    %57 = math.tanh %56 : vector<64x16xf32>
    %58 = vector.extract_strided_slice %55 {offsets = [0, 16], sizes = [64, 16], strides = [1, 1]} : vector<64x32xf32> to vector<64x16xf32>
    %59 = arith.negf %58 : vector<64x16xf32>
    %60 = math.exp %59 : vector<64x16xf32>
    %cst_20 = arith.constant 1.000000e+00 : f32
    %61 = vector.broadcast %cst_20 : f32 to vector<64x16xf32>
    %62 = arith.addf %61, %60 : vector<64x16xf32>
    %63 = arith.divf %61, %62 : vector<64x16xf32>
    %64 = arith.mulf %57, %63 : vector<64x16xf32>
    %c0_21 = arith.constant 0 : index
    %c0_22 = arith.constant 0 : index
    %c0_23 = arith.constant 0 : index
    %c0_24 = arith.constant 0 : index
    %65 = vector.load %arg6[%c0_21, %c0_22, %c0_23, %c0_24] : memref<2x3x16x32xf32, #tpu.memory_space<vmem>>, vector<1x1x16x32xf32>
    %66 = vector.shape_cast %65 : vector<1x1x16x32xf32> to vector<16x32xf32>
    %cst_25 = arith.constant dense<0.000000e+00> : vector<64x32xf32>
    %67 = tpu.matmul %64, %66, %cst_25 {dimension_numbers = #tpu.dot_dimension_numbers<[1], [0], [0], [1], [0, 0, 1, 1], [], []>} : vector<64x16xf32>, vector<16x32xf32>, vector<64x32xf32> -> vector<64x32xf32>
    %c0_26 = arith.constant 0 : index
    %c0_27 = arith.constant 0 : index
    %c0_28 = arith.constant 0 : index
    %c0_29 = arith.constant 0 : index
    %68 = vector.load %arg8[%c0_26, %c0_27, %c0_28, %c0_29] : memref<2x3x1x32xf32, #tpu.memory_space<vmem>>, vector<1x1x1x32xf32>
    %69 = vector.shape_cast %68 : vector<1x1x1x32xf32> to vector<1x32xf32>
    %70 = vector.broadcast %69 : vector<1x32xf32> to vector<64x32xf32>
    %71 = arith.addf %67, %70 : vector<64x32xf32>
    %72 = arith.addf %23, %71 : vector<64x32xf32>
    %73 = vector.broadcast %14 : vector<64x1xf32> to vector<64x32xf32>
    %74 = arith.mulf %72, %73 : vector<64x32xf32>
    %c-2_i32 = arith.constant -2 : i32
    %75 = vector.broadcast %c-2_i32 : i32 to vector<64x1xi32>
    %76 = arith.addi %2, %75 : vector<64x1xi32>
    %c0_i32_30 = arith.constant 0 : i32
    %77 = vector.broadcast %c0_i32_30 : i32 to vector<64x1xi32>
    %78 = arith.cmpi sge, %76, %77 : vector<64x1xi32>
    %c32_i32_31 = arith.constant 32 : i32
    %79 = vector.broadcast %c32_i32_31 : i32 to vector<64x1xi32>
    %80 = arith.cmpi slt, %76, %79 : vector<64x1xi32>
    %81 = arith.andi %78, %80 : vector<64x1xi1>
    %82 = arith.extui %81 : vector<64x1xi1> to vector<64x1xi32>
    %83 = arith.sitofp %82 : vector<64x1xi32> to vector<64x1xf32>
    %c2_i32 = arith.constant 2 : i32
    %84 = tpu.dynamic_rotate %74 by %c2_i32 dim 0 : vector<64x32xf32>, i32 -> vector<64x32xf32>
    %85 = vector.broadcast %83 : vector<64x1xf32> to vector<64x32xf32>
    %86 = arith.mulf %84, %85 : vector<64x32xf32>
    %c2_i32_32 = arith.constant 2 : i32
    %87 = vector.broadcast %c2_i32_32 : i32 to vector<64x1xi32>
    %88 = arith.addi %2, %87 : vector<64x1xi32>
    %c0_i32_33 = arith.constant 0 : i32
    %89 = vector.broadcast %c0_i32_33 : i32 to vector<64x1xi32>
    %90 = arith.cmpi sge, %88, %89 : vector<64x1xi32>
    %c32_i32_34 = arith.constant 32 : i32
    %91 = vector.broadcast %c32_i32_34 : i32 to vector<64x1xi32>
    %92 = arith.cmpi slt, %88, %91 : vector<64x1xi32>
    %93 = arith.andi %90, %92 : vector<64x1xi1>
    %94 = arith.extui %93 : vector<64x1xi1> to vector<64x1xi32>
    %95 = arith.sitofp %94 : vector<64x1xi32> to vector<64x1xf32>
    %c62_i32 = arith.constant 62 : i32
    %96 = tpu.dynamic_rotate %74 by %c62_i32 dim 0 : vector<64x32xf32>, i32 -> vector<64x32xf32>
    %97 = vector.broadcast %95 : vector<64x1xf32> to vector<64x32xf32>
    %98 = arith.mulf %96, %97 : vector<64x32xf32>
    %99 = tpu.concatenate %86, %74, %98 in 1 : vector<64x32xf32>, vector<64x32xf32>, vector<64x32xf32> -> vector<64x96xf32>
    %c0_35 = arith.constant 0 : index
    %c1_36 = arith.constant 1 : index
    %c0_37 = arith.constant 0 : index
    %c0_38 = arith.constant 0 : index
    %100 = vector.load %arg5[%c0_35, %c1_36, %c0_37, %c0_38] : memref<2x3x96x32xf32, #tpu.memory_space<vmem>>, vector<1x1x96x32xf32>
    %101 = vector.shape_cast %100 : vector<1x1x96x32xf32> to vector<96x32xf32>
    %cst_39 = arith.constant dense<0.000000e+00> : vector<64x32xf32>
    %102 = tpu.matmul %99, %101, %cst_39 {dimension_numbers = #tpu.dot_dimension_numbers<[1], [0], [0], [1], [0, 0, 1, 1], [], []>} : vector<64x96xf32>, vector<96x32xf32>, vector<64x32xf32> -> vector<64x32xf32>
    %c0_40 = arith.constant 0 : index
    %c1_41 = arith.constant 1 : index
    %c0_42 = arith.constant 0 : index
    %c0_43 = arith.constant 0 : index
    %103 = vector.load %arg7[%c0_40, %c1_41, %c0_42, %c0_43] : memref<2x3x1x32xf32, #tpu.memory_space<vmem>>, vector<1x1x1x32xf32>
    %104 = vector.shape_cast %103 : vector<1x1x1x32xf32> to vector<1x32xf32>
    %105 = vector.broadcast %104 : vector<1x32xf32> to vector<64x32xf32>
    %106 = arith.addf %102, %105 : vector<64x32xf32>
    %107 = vector.extract_strided_slice %106 {offsets = [0, 0], sizes = [64, 16], strides = [1, 1]} : vector<64x32xf32> to vector<64x16xf32>
    %108 = math.tanh %107 : vector<64x16xf32>
    %109 = vector.extract_strided_slice %106 {offsets = [0, 16], sizes = [64, 16], strides = [1, 1]} : vector<64x32xf32> to vector<64x16xf32>
    %110 = arith.negf %109 : vector<64x16xf32>
    %111 = math.exp %110 : vector<64x16xf32>
    %cst_44 = arith.constant 1.000000e+00 : f32
    %112 = vector.broadcast %cst_44 : f32 to vector<64x16xf32>
    %113 = arith.addf %112, %111 : vector<64x16xf32>
    %114 = arith.divf %112, %113 : vector<64x16xf32>
    %115 = arith.mulf %108, %114 : vector<64x16xf32>
    %c0_45 = arith.constant 0 : index
    %c1_46 = arith.constant 1 : index
    %c0_47 = arith.constant 0 : index
    %c0_48 = arith.constant 0 : index
    %116 = vector.load %arg6[%c0_45, %c1_46, %c0_47, %c0_48] : memref<2x3x16x32xf32, #tpu.memory_space<vmem>>, vector<1x1x16x32xf32>
    %117 = vector.shape_cast %116 : vector<1x1x16x32xf32> to vector<16x32xf32>
    %cst_49 = arith.constant dense<0.000000e+00> : vector<64x32xf32>
    %118 = tpu.matmul %115, %117, %cst_49 {dimension_numbers = #tpu.dot_dimension_numbers<[1], [0], [0], [1], [0, 0, 1, 1], [], []>} : vector<64x16xf32>, vector<16x32xf32>, vector<64x32xf32> -> vector<64x32xf32>
    %c0_50 = arith.constant 0 : index
    %c1_51 = arith.constant 1 : index
    %c0_52 = arith.constant 0 : index
    %c0_53 = arith.constant 0 : index
    %119 = vector.load %arg8[%c0_50, %c1_51, %c0_52, %c0_53] : memref<2x3x1x32xf32, #tpu.memory_space<vmem>>, vector<1x1x1x32xf32>
    %120 = vector.shape_cast %119 : vector<1x1x1x32xf32> to vector<1x32xf32>
    %121 = vector.broadcast %120 : vector<1x32xf32> to vector<64x32xf32>
    %122 = arith.addf %118, %121 : vector<64x32xf32>
    %123 = arith.addf %74, %122 : vector<64x32xf32>
    %124 = vector.broadcast %14 : vector<64x1xf32> to vector<64x32xf32>
    %125 = arith.mulf %123, %124 : vector<64x32xf32>
    %c-4_i32 = arith.constant -4 : i32
    %126 = vector.broadcast %c-4_i32 : i32 to vector<64x1xi32>
    %127 = arith.addi %2, %126 : vector<64x1xi32>
    %c0_i32_54 = arith.constant 0 : i32
    %128 = vector.broadcast %c0_i32_54 : i32 to vector<64x1xi32>
    %129 = arith.cmpi sge, %127, %128 : vector<64x1xi32>
    %c32_i32_55 = arith.constant 32 : i32
    %130 = vector.broadcast %c32_i32_55 : i32 to vector<64x1xi32>
    %131 = arith.cmpi slt, %127, %130 : vector<64x1xi32>
    %132 = arith.andi %129, %131 : vector<64x1xi1>
    %133 = arith.extui %132 : vector<64x1xi1> to vector<64x1xi32>
    %134 = arith.sitofp %133 : vector<64x1xi32> to vector<64x1xf32>
    %c4_i32 = arith.constant 4 : i32
    %135 = tpu.dynamic_rotate %125 by %c4_i32 dim 0 : vector<64x32xf32>, i32 -> vector<64x32xf32>
    %136 = vector.broadcast %134 : vector<64x1xf32> to vector<64x32xf32>
    %137 = arith.mulf %135, %136 : vector<64x32xf32>
    %c4_i32_56 = arith.constant 4 : i32
    %138 = vector.broadcast %c4_i32_56 : i32 to vector<64x1xi32>
    %139 = arith.addi %2, %138 : vector<64x1xi32>
    %c0_i32_57 = arith.constant 0 : i32
    %140 = vector.broadcast %c0_i32_57 : i32 to vector<64x1xi32>
    %141 = arith.cmpi sge, %139, %140 : vector<64x1xi32>
    %c32_i32_58 = arith.constant 32 : i32
    %142 = vector.broadcast %c32_i32_58 : i32 to vector<64x1xi32>
    %143 = arith.cmpi slt, %139, %142 : vector<64x1xi32>
    %144 = arith.andi %141, %143 : vector<64x1xi1>
    %145 = arith.extui %144 : vector<64x1xi1> to vector<64x1xi32>
    %146 = arith.sitofp %145 : vector<64x1xi32> to vector<64x1xf32>
    %c60_i32 = arith.constant 60 : i32
    %147 = tpu.dynamic_rotate %125 by %c60_i32 dim 0 : vector<64x32xf32>, i32 -> vector<64x32xf32>
    %148 = vector.broadcast %146 : vector<64x1xf32> to vector<64x32xf32>
    %149 = arith.mulf %147, %148 : vector<64x32xf32>
    %150 = tpu.concatenate %137, %125, %149 in 1 : vector<64x32xf32>, vector<64x32xf32>, vector<64x32xf32> -> vector<64x96xf32>
    %c0_59 = arith.constant 0 : index
    %c2 = arith.constant 2 : index
    %c0_60 = arith.constant 0 : index
    %c0_61 = arith.constant 0 : index
    %151 = vector.load %arg5[%c0_59, %c2, %c0_60, %c0_61] : memref<2x3x96x32xf32, #tpu.memory_space<vmem>>, vector<1x1x96x32xf32>
    %152 = vector.shape_cast %151 : vector<1x1x96x32xf32> to vector<96x32xf32>
    %cst_62 = arith.constant dense<0.000000e+00> : vector<64x32xf32>
    %153 = tpu.matmul %150, %152, %cst_62 {dimension_numbers = #tpu.dot_dimension_numbers<[1], [0], [0], [1], [0, 0, 1, 1], [], []>} : vector<64x96xf32>, vector<96x32xf32>, vector<64x32xf32> -> vector<64x32xf32>
    %c0_63 = arith.constant 0 : index
    %c2_64 = arith.constant 2 : index
    %c0_65 = arith.constant 0 : index
    %c0_66 = arith.constant 0 : index
    %154 = vector.load %arg7[%c0_63, %c2_64, %c0_65, %c0_66] : memref<2x3x1x32xf32, #tpu.memory_space<vmem>>, vector<1x1x1x32xf32>
    %155 = vector.shape_cast %154 : vector<1x1x1x32xf32> to vector<1x32xf32>
    %156 = vector.broadcast %155 : vector<1x32xf32> to vector<64x32xf32>
    %157 = arith.addf %153, %156 : vector<64x32xf32>
    %158 = vector.extract_strided_slice %157 {offsets = [0, 0], sizes = [64, 16], strides = [1, 1]} : vector<64x32xf32> to vector<64x16xf32>
    %159 = math.tanh %158 : vector<64x16xf32>
    %160 = vector.extract_strided_slice %157 {offsets = [0, 16], sizes = [64, 16], strides = [1, 1]} : vector<64x32xf32> to vector<64x16xf32>
    %161 = arith.negf %160 : vector<64x16xf32>
    %162 = math.exp %161 : vector<64x16xf32>
    %cst_67 = arith.constant 1.000000e+00 : f32
    %163 = vector.broadcast %cst_67 : f32 to vector<64x16xf32>
    %164 = arith.addf %163, %162 : vector<64x16xf32>
    %165 = arith.divf %163, %164 : vector<64x16xf32>
    %166 = arith.mulf %159, %165 : vector<64x16xf32>
    %c0_68 = arith.constant 0 : index
    %c2_69 = arith.constant 2 : index
    %c0_70 = arith.constant 0 : index
    %c0_71 = arith.constant 0 : index
    %167 = vector.load %arg6[%c0_68, %c2_69, %c0_70, %c0_71] : memref<2x3x16x32xf32, #tpu.memory_space<vmem>>, vector<1x1x16x32xf32>
    %168 = vector.shape_cast %167 : vector<1x1x16x32xf32> to vector<16x32xf32>
    %cst_72 = arith.constant dense<0.000000e+00> : vector<64x32xf32>
    %169 = tpu.matmul %166, %168, %cst_72 {dimension_numbers = #tpu.dot_dimension_numbers<[1], [0], [0], [1], [0, 0, 1, 1], [], []>} : vector<64x16xf32>, vector<16x32xf32>, vector<64x32xf32> -> vector<64x32xf32>
    %c0_73 = arith.constant 0 : index
    %c2_74 = arith.constant 2 : index
    %c0_75 = arith.constant 0 : index
    %c0_76 = arith.constant 0 : index
    %170 = vector.load %arg8[%c0_73, %c2_74, %c0_75, %c0_76] : memref<2x3x1x32xf32, #tpu.memory_space<vmem>>, vector<1x1x1x32xf32>
    %171 = vector.shape_cast %170 : vector<1x1x1x32xf32> to vector<1x32xf32>
    %172 = vector.broadcast %171 : vector<1x32xf32> to vector<64x32xf32>
    %173 = arith.addf %169, %172 : vector<64x32xf32>
    %174 = arith.addf %125, %173 : vector<64x32xf32>
    %175 = vector.broadcast %14 : vector<64x1xf32> to vector<64x32xf32>
    %176 = arith.mulf %174, %175 : vector<64x32xf32>
    %c16_i32 = arith.constant 16 : i32
    %177 = vector.broadcast %c16_i32 : i32 to vector<1x32xi32>
    %178 = arith.cmpi sge, %15, %177 : vector<1x32xi32>
    %c32_i32_77 = arith.constant 32 : i32
    %179 = vector.broadcast %c32_i32_77 : i32 to vector<1x32xi32>
    %180 = arith.cmpi slt, %15, %179 : vector<1x32xi32>
    %181 = arith.andi %178, %180 : vector<1x32xi1>
    %182 = arith.extui %181 : vector<1x32xi1> to vector<1x32xi32>
    %183 = arith.sitofp %182 : vector<1x32xi32> to vector<1x32xf32>
    %184 = vector.broadcast %183 : vector<1x32xf32> to vector<64x32xf32>
    %185 = arith.mulf %176, %184 : vector<64x32xf32>
    %c-1_i32_78 = arith.constant -1 : i32
    %186 = vector.broadcast %c-1_i32_78 : i32 to vector<64x1xi32>
    %187 = arith.addi %2, %186 : vector<64x1xi32>
    %c0_i32_79 = arith.constant 0 : i32
    %188 = vector.broadcast %c0_i32_79 : i32 to vector<64x1xi32>
    %189 = arith.cmpi sge, %187, %188 : vector<64x1xi32>
    %c32_i32_80 = arith.constant 32 : i32
    %190 = vector.broadcast %c32_i32_80 : i32 to vector<64x1xi32>
    %191 = arith.cmpi slt, %187, %190 : vector<64x1xi32>
    %192 = arith.andi %189, %191 : vector<64x1xi1>
    %193 = arith.extui %192 : vector<64x1xi1> to vector<64x1xi32>
    %194 = arith.sitofp %193 : vector<64x1xi32> to vector<64x1xf32>
    %c1_i32_81 = arith.constant 1 : i32
    %195 = tpu.dynamic_rotate %185 by %c1_i32_81 dim 0 : vector<64x32xf32>, i32 -> vector<64x32xf32>
    %196 = vector.broadcast %194 : vector<64x1xf32> to vector<64x32xf32>
    %197 = arith.mulf %195, %196 : vector<64x32xf32>
    %c1_i32_82 = arith.constant 1 : i32
    %198 = vector.broadcast %c1_i32_82 : i32 to vector<64x1xi32>
    %199 = arith.addi %2, %198 : vector<64x1xi32>
    %c0_i32_83 = arith.constant 0 : i32
    %200 = vector.broadcast %c0_i32_83 : i32 to vector<64x1xi32>
    %201 = arith.cmpi sge, %199, %200 : vector<64x1xi32>
    %c32_i32_84 = arith.constant 32 : i32
    %202 = vector.broadcast %c32_i32_84 : i32 to vector<64x1xi32>
    %203 = arith.cmpi slt, %199, %202 : vector<64x1xi32>
    %204 = arith.andi %201, %203 : vector<64x1xi1>
    %205 = arith.extui %204 : vector<64x1xi1> to vector<64x1xi32>
    %206 = arith.sitofp %205 : vector<64x1xi32> to vector<64x1xf32>
    %c63_i32_85 = arith.constant 63 : i32
    %207 = tpu.dynamic_rotate %185 by %c63_i32_85 dim 0 : vector<64x32xf32>, i32 -> vector<64x32xf32>
    %208 = vector.broadcast %206 : vector<64x1xf32> to vector<64x32xf32>
    %209 = arith.mulf %207, %208 : vector<64x32xf32>
    %210 = tpu.concatenate %197, %185, %209 in 1 : vector<64x32xf32>, vector<64x32xf32>, vector<64x32xf32> -> vector<64x96xf32>
    %c1_86 = arith.constant 1 : index
    %c0_87 = arith.constant 0 : index
    %c0_88 = arith.constant 0 : index
    %c0_89 = arith.constant 0 : index
    %211 = vector.load %arg5[%c1_86, %c0_87, %c0_88, %c0_89] : memref<2x3x96x32xf32, #tpu.memory_space<vmem>>, vector<1x1x96x32xf32>
    %212 = vector.shape_cast %211 : vector<1x1x96x32xf32> to vector<96x32xf32>
    %cst_90 = arith.constant dense<0.000000e+00> : vector<64x32xf32>
    %213 = tpu.matmul %210, %212, %cst_90 {dimension_numbers = #tpu.dot_dimension_numbers<[1], [0], [0], [1], [0, 0, 1, 1], [], []>} : vector<64x96xf32>, vector<96x32xf32>, vector<64x32xf32> -> vector<64x32xf32>
    %c1_91 = arith.constant 1 : index
    %c0_92 = arith.constant 0 : index
    %c0_93 = arith.constant 0 : index
    %c0_94 = arith.constant 0 : index
    %214 = vector.load %arg7[%c1_91, %c0_92, %c0_93, %c0_94] : memref<2x3x1x32xf32, #tpu.memory_space<vmem>>, vector<1x1x1x32xf32>
    %215 = vector.shape_cast %214 : vector<1x1x1x32xf32> to vector<1x32xf32>
    %216 = vector.broadcast %215 : vector<1x32xf32> to vector<64x32xf32>
    %217 = arith.addf %213, %216 : vector<64x32xf32>
    %218 = vector.extract_strided_slice %217 {offsets = [0, 0], sizes = [64, 16], strides = [1, 1]} : vector<64x32xf32> to vector<64x16xf32>
    %219 = math.tanh %218 : vector<64x16xf32>
    %220 = vector.extract_strided_slice %217 {offsets = [0, 16], sizes = [64, 16], strides = [1, 1]} : vector<64x32xf32> to vector<64x16xf32>
    %221 = arith.negf %220 : vector<64x16xf32>
    %222 = math.exp %221 : vector<64x16xf32>
    %cst_95 = arith.constant 1.000000e+00 : f32
    %223 = vector.broadcast %cst_95 : f32 to vector<64x16xf32>
    %224 = arith.addf %223, %222 : vector<64x16xf32>
    %225 = arith.divf %223, %224 : vector<64x16xf32>
    %226 = arith.mulf %219, %225 : vector<64x16xf32>
    %c1_96 = arith.constant 1 : index
    %c0_97 = arith.constant 0 : index
    %c0_98 = arith.constant 0 : index
    %c0_99 = arith.constant 0 : index
    %227 = vector.load %arg6[%c1_96, %c0_97, %c0_98, %c0_99] : memref<2x3x16x32xf32, #tpu.memory_space<vmem>>, vector<1x1x16x32xf32>
    %228 = vector.shape_cast %227 : vector<1x1x16x32xf32> to vector<16x32xf32>
    %cst_100 = arith.constant dense<0.000000e+00> : vector<64x32xf32>
    %229 = tpu.matmul %226, %228, %cst_100 {dimension_numbers = #tpu.dot_dimension_numbers<[1], [0], [0], [1], [0, 0, 1, 1], [], []>} : vector<64x16xf32>, vector<16x32xf32>, vector<64x32xf32> -> vector<64x32xf32>
    %c1_101 = arith.constant 1 : index
    %c0_102 = arith.constant 0 : index
    %c0_103 = arith.constant 0 : index
    %c0_104 = arith.constant 0 : index
    %230 = vector.load %arg8[%c1_101, %c0_102, %c0_103, %c0_104] : memref<2x3x1x32xf32, #tpu.memory_space<vmem>>, vector<1x1x1x32xf32>
    %231 = vector.shape_cast %230 : vector<1x1x1x32xf32> to vector<1x32xf32>
    %232 = vector.broadcast %231 : vector<1x32xf32> to vector<64x32xf32>
    %233 = arith.addf %229, %232 : vector<64x32xf32>
    %234 = arith.addf %185, %233 : vector<64x32xf32>
    %235 = vector.broadcast %14 : vector<64x1xf32> to vector<64x32xf32>
    %236 = arith.mulf %234, %235 : vector<64x32xf32>
    %c-2_i32_105 = arith.constant -2 : i32
    %237 = vector.broadcast %c-2_i32_105 : i32 to vector<64x1xi32>
    %238 = arith.addi %2, %237 : vector<64x1xi32>
    %c0_i32_106 = arith.constant 0 : i32
    %239 = vector.broadcast %c0_i32_106 : i32 to vector<64x1xi32>
    %240 = arith.cmpi sge, %238, %239 : vector<64x1xi32>
    %c32_i32_107 = arith.constant 32 : i32
    %241 = vector.broadcast %c32_i32_107 : i32 to vector<64x1xi32>
    %242 = arith.cmpi slt, %238, %241 : vector<64x1xi32>
    %243 = arith.andi %240, %242 : vector<64x1xi1>
    %244 = arith.extui %243 : vector<64x1xi1> to vector<64x1xi32>
    %245 = arith.sitofp %244 : vector<64x1xi32> to vector<64x1xf32>
    %c2_i32_108 = arith.constant 2 : i32
    %246 = tpu.dynamic_rotate %236 by %c2_i32_108 dim 0 : vector<64x32xf32>, i32 -> vector<64x32xf32>
    %247 = vector.broadcast %245 : vector<64x1xf32> to vector<64x32xf32>
    %248 = arith.mulf %246, %247 : vector<64x32xf32>
    %c2_i32_109 = arith.constant 2 : i32
    %249 = vector.broadcast %c2_i32_109 : i32 to vector<64x1xi32>
    %250 = arith.addi %2, %249 : vector<64x1xi32>
    %c0_i32_110 = arith.constant 0 : i32
    %251 = vector.broadcast %c0_i32_110 : i32 to vector<64x1xi32>
    %252 = arith.cmpi sge, %250, %251 : vector<64x1xi32>
    %c32_i32_111 = arith.constant 32 : i32
    %253 = vector.broadcast %c32_i32_111 : i32 to vector<64x1xi32>
    %254 = arith.cmpi slt, %250, %253 : vector<64x1xi32>
    %255 = arith.andi %252, %254 : vector<64x1xi1>
    %256 = arith.extui %255 : vector<64x1xi1> to vector<64x1xi32>
    %257 = arith.sitofp %256 : vector<64x1xi32> to vector<64x1xf32>
    %c62_i32_112 = arith.constant 62 : i32
    %258 = tpu.dynamic_rotate %236 by %c62_i32_112 dim 0 : vector<64x32xf32>, i32 -> vector<64x32xf32>
    %259 = vector.broadcast %257 : vector<64x1xf32> to vector<64x32xf32>
    %260 = arith.mulf %258, %259 : vector<64x32xf32>
    %261 = tpu.concatenate %248, %236, %260 in 1 : vector<64x32xf32>, vector<64x32xf32>, vector<64x32xf32> -> vector<64x96xf32>
    %c1_113 = arith.constant 1 : index
    %c1_114 = arith.constant 1 : index
    %c0_115 = arith.constant 0 : index
    %c0_116 = arith.constant 0 : index
    %262 = vector.load %arg5[%c1_113, %c1_114, %c0_115, %c0_116] : memref<2x3x96x32xf32, #tpu.memory_space<vmem>>, vector<1x1x96x32xf32>
    %263 = vector.shape_cast %262 : vector<1x1x96x32xf32> to vector<96x32xf32>
    %cst_117 = arith.constant dense<0.000000e+00> : vector<64x32xf32>
    %264 = tpu.matmul %261, %263, %cst_117 {dimension_numbers = #tpu.dot_dimension_numbers<[1], [0], [0], [1], [0, 0, 1, 1], [], []>} : vector<64x96xf32>, vector<96x32xf32>, vector<64x32xf32> -> vector<64x32xf32>
    %c1_118 = arith.constant 1 : index
    %c1_119 = arith.constant 1 : index
    %c0_120 = arith.constant 0 : index
    %c0_121 = arith.constant 0 : index
    %265 = vector.load %arg7[%c1_118, %c1_119, %c0_120, %c0_121] : memref<2x3x1x32xf32, #tpu.memory_space<vmem>>, vector<1x1x1x32xf32>
    %266 = vector.shape_cast %265 : vector<1x1x1x32xf32> to vector<1x32xf32>
    %267 = vector.broadcast %266 : vector<1x32xf32> to vector<64x32xf32>
    %268 = arith.addf %264, %267 : vector<64x32xf32>
    %269 = vector.extract_strided_slice %268 {offsets = [0, 0], sizes = [64, 16], strides = [1, 1]} : vector<64x32xf32> to vector<64x16xf32>
    %270 = math.tanh %269 : vector<64x16xf32>
    %271 = vector.extract_strided_slice %268 {offsets = [0, 16], sizes = [64, 16], strides = [1, 1]} : vector<64x32xf32> to vector<64x16xf32>
    %272 = arith.negf %271 : vector<64x16xf32>
    %273 = math.exp %272 : vector<64x16xf32>
    %cst_122 = arith.constant 1.000000e+00 : f32
    %274 = vector.broadcast %cst_122 : f32 to vector<64x16xf32>
    %275 = arith.addf %274, %273 : vector<64x16xf32>
    %276 = arith.divf %274, %275 : vector<64x16xf32>
    %277 = arith.mulf %270, %276 : vector<64x16xf32>
    %c1_123 = arith.constant 1 : index
    %c1_124 = arith.constant 1 : index
    %c0_125 = arith.constant 0 : index
    %c0_126 = arith.constant 0 : index
    %278 = vector.load %arg6[%c1_123, %c1_124, %c0_125, %c0_126] : memref<2x3x16x32xf32, #tpu.memory_space<vmem>>, vector<1x1x16x32xf32>
    %279 = vector.shape_cast %278 : vector<1x1x16x32xf32> to vector<16x32xf32>
    %cst_127 = arith.constant dense<0.000000e+00> : vector<64x32xf32>
    %280 = tpu.matmul %277, %279, %cst_127 {dimension_numbers = #tpu.dot_dimension_numbers<[1], [0], [0], [1], [0, 0, 1, 1], [], []>} : vector<64x16xf32>, vector<16x32xf32>, vector<64x32xf32> -> vector<64x32xf32>
    %c1_128 = arith.constant 1 : index
    %c1_129 = arith.constant 1 : index
    %c0_130 = arith.constant 0 : index
    %c0_131 = arith.constant 0 : index
    %281 = vector.load %arg8[%c1_128, %c1_129, %c0_130, %c0_131] : memref<2x3x1x32xf32, #tpu.memory_space<vmem>>, vector<1x1x1x32xf32>
    %282 = vector.shape_cast %281 : vector<1x1x1x32xf32> to vector<1x32xf32>
    %283 = vector.broadcast %282 : vector<1x32xf32> to vector<64x32xf32>
    %284 = arith.addf %280, %283 : vector<64x32xf32>
    %285 = arith.addf %236, %284 : vector<64x32xf32>
    %286 = vector.broadcast %14 : vector<64x1xf32> to vector<64x32xf32>
    %287 = arith.mulf %285, %286 : vector<64x32xf32>
    %c-4_i32_132 = arith.constant -4 : i32
    %288 = vector.broadcast %c-4_i32_132 : i32 to vector<64x1xi32>
    %289 = arith.addi %2, %288 : vector<64x1xi32>
    %c0_i32_133 = arith.constant 0 : i32
    %290 = vector.broadcast %c0_i32_133 : i32 to vector<64x1xi32>
    %291 = arith.cmpi sge, %289, %290 : vector<64x1xi32>
    %c32_i32_134 = arith.constant 32 : i32
    %292 = vector.broadcast %c32_i32_134 : i32 to vector<64x1xi32>
    %293 = arith.cmpi slt, %289, %292 : vector<64x1xi32>
    %294 = arith.andi %291, %293 : vector<64x1xi1>
    %295 = arith.extui %294 : vector<64x1xi1> to vector<64x1xi32>
    %296 = arith.sitofp %295 : vector<64x1xi32> to vector<64x1xf32>
    %c4_i32_135 = arith.constant 4 : i32
    %297 = tpu.dynamic_rotate %287 by %c4_i32_135 dim 0 : vector<64x32xf32>, i32 -> vector<64x32xf32>
    %298 = vector.broadcast %296 : vector<64x1xf32> to vector<64x32xf32>
    %299 = arith.mulf %297, %298 : vector<64x32xf32>
    %c4_i32_136 = arith.constant 4 : i32
    %300 = vector.broadcast %c4_i32_136 : i32 to vector<64x1xi32>
    %301 = arith.addi %2, %300 : vector<64x1xi32>
    %c0_i32_137 = arith.constant 0 : i32
    %302 = vector.broadcast %c0_i32_137 : i32 to vector<64x1xi32>
    %303 = arith.cmpi sge, %301, %302 : vector<64x1xi32>
    %c32_i32_138 = arith.constant 32 : i32
    %304 = vector.broadcast %c32_i32_138 : i32 to vector<64x1xi32>
    %305 = arith.cmpi slt, %301, %304 : vector<64x1xi32>
    %306 = arith.andi %303, %305 : vector<64x1xi1>
    %307 = arith.extui %306 : vector<64x1xi1> to vector<64x1xi32>
    %308 = arith.sitofp %307 : vector<64x1xi32> to vector<64x1xf32>
    %c60_i32_139 = arith.constant 60 : i32
    %309 = tpu.dynamic_rotate %287 by %c60_i32_139 dim 0 : vector<64x32xf32>, i32 -> vector<64x32xf32>
    %310 = vector.broadcast %308 : vector<64x1xf32> to vector<64x32xf32>
    %311 = arith.mulf %309, %310 : vector<64x32xf32>
    %312 = tpu.concatenate %299, %287, %311 in 1 : vector<64x32xf32>, vector<64x32xf32>, vector<64x32xf32> -> vector<64x96xf32>
    %c1_140 = arith.constant 1 : index
    %c2_141 = arith.constant 2 : index
    %c0_142 = arith.constant 0 : index
    %c0_143 = arith.constant 0 : index
    %313 = vector.load %arg5[%c1_140, %c2_141, %c0_142, %c0_143] : memref<2x3x96x32xf32, #tpu.memory_space<vmem>>, vector<1x1x96x32xf32>
    %314 = vector.shape_cast %313 : vector<1x1x96x32xf32> to vector<96x32xf32>
    %cst_144 = arith.constant dense<0.000000e+00> : vector<64x32xf32>
    %315 = tpu.matmul %312, %314, %cst_144 {dimension_numbers = #tpu.dot_dimension_numbers<[1], [0], [0], [1], [0, 0, 1, 1], [], []>} : vector<64x96xf32>, vector<96x32xf32>, vector<64x32xf32> -> vector<64x32xf32>
    %c1_145 = arith.constant 1 : index
    %c2_146 = arith.constant 2 : index
    %c0_147 = arith.constant 0 : index
    %c0_148 = arith.constant 0 : index
    %316 = vector.load %arg7[%c1_145, %c2_146, %c0_147, %c0_148] : memref<2x3x1x32xf32, #tpu.memory_space<vmem>>, vector<1x1x1x32xf32>
    %317 = vector.shape_cast %316 : vector<1x1x1x32xf32> to vector<1x32xf32>
    %318 = vector.broadcast %317 : vector<1x32xf32> to vector<64x32xf32>
    %319 = arith.addf %315, %318 : vector<64x32xf32>
    %320 = vector.extract_strided_slice %319 {offsets = [0, 0], sizes = [64, 16], strides = [1, 1]} : vector<64x32xf32> to vector<64x16xf32>
    %321 = math.tanh %320 : vector<64x16xf32>
    %322 = vector.extract_strided_slice %319 {offsets = [0, 16], sizes = [64, 16], strides = [1, 1]} : vector<64x32xf32> to vector<64x16xf32>
    %323 = arith.negf %322 : vector<64x16xf32>
    %324 = math.exp %323 : vector<64x16xf32>
    %cst_149 = arith.constant 1.000000e+00 : f32
    %325 = vector.broadcast %cst_149 : f32 to vector<64x16xf32>
    %326 = arith.addf %325, %324 : vector<64x16xf32>
    %327 = arith.divf %325, %326 : vector<64x16xf32>
    %328 = arith.mulf %321, %327 : vector<64x16xf32>
    %c1_150 = arith.constant 1 : index
    %c2_151 = arith.constant 2 : index
    %c0_152 = arith.constant 0 : index
    %c0_153 = arith.constant 0 : index
    %329 = vector.load %arg6[%c1_150, %c2_151, %c0_152, %c0_153] : memref<2x3x16x32xf32, #tpu.memory_space<vmem>>, vector<1x1x16x32xf32>
    %330 = vector.shape_cast %329 : vector<1x1x16x32xf32> to vector<16x32xf32>
    %cst_154 = arith.constant dense<0.000000e+00> : vector<64x32xf32>
    %331 = tpu.matmul %328, %330, %cst_154 {dimension_numbers = #tpu.dot_dimension_numbers<[1], [0], [0], [1], [0, 0, 1, 1], [], []>} : vector<64x16xf32>, vector<16x32xf32>, vector<64x32xf32> -> vector<64x32xf32>
    %c1_155 = arith.constant 1 : index
    %c2_156 = arith.constant 2 : index
    %c0_157 = arith.constant 0 : index
    %c0_158 = arith.constant 0 : index
    %332 = vector.load %arg8[%c1_155, %c2_156, %c0_157, %c0_158] : memref<2x3x1x32xf32, #tpu.memory_space<vmem>>, vector<1x1x1x32xf32>
    %333 = vector.shape_cast %332 : vector<1x1x1x32xf32> to vector<1x32xf32>
    %334 = vector.broadcast %333 : vector<1x32xf32> to vector<64x32xf32>
    %335 = arith.addf %331, %334 : vector<64x32xf32>
    %336 = arith.addf %287, %335 : vector<64x32xf32>
    %337 = vector.broadcast %14 : vector<64x1xf32> to vector<64x32xf32>
    %338 = arith.mulf %336, %337 : vector<64x32xf32>
    %c0_159 = arith.constant 0 : index
    %c0_160 = arith.constant 0 : index
    %339 = vector.load %arg9[%c0_159, %c0_160] : memref<32x128xf32, #tpu.memory_space<vmem>>, vector<32x128xf32>
    %cst_161 = arith.constant dense<0.000000e+00> : vector<64x128xf32>
    %340 = tpu.matmul %338, %339, %cst_161 {dimension_numbers = #tpu.dot_dimension_numbers<[1], [0], [0], [1], [0, 0, 1, 1], [], []>} : vector<64x32xf32>, vector<32x128xf32>, vector<64x128xf32> -> vector<64x128xf32>
    %c0_162 = arith.constant 0 : index
    %c0_163 = arith.constant 0 : index
    %341 = vector.load %arg10[%c0_162, %c0_163] : memref<1x128xf32, #tpu.memory_space<vmem>>, vector<1x128xf32>
    %342 = vector.broadcast %341 : vector<1x128xf32> to vector<64x128xf32>
    %343 = arith.addf %340, %342 : vector<64x128xf32>
    %344 = tpu.iota {dimensions = array<i32: 1>} : vector<1x128xi32>
    %cst_164 = arith.constant 0.000000e+00 : f32
    %345 = vector.broadcast %cst_164 : f32 to vector<64x128xf32>
    %346 = arith.maximumf %343, %345 : vector<64x128xf32>
    %347 = math.absf %343 : vector<64x128xf32>
    %cst_165 = arith.constant 0.000000e+00 : f32
    %348 = vector.broadcast %cst_165 : f32 to vector<64x128xf32>
    %349 = arith.subf %348, %347 : vector<64x128xf32>
    %350 = math.exp %349 : vector<64x128xf32>
    %351 = math.log1p %350 : vector<64x128xf32>
    %352 = arith.addf %346, %351 : vector<64x128xf32>
    %c16_i32_166 = arith.constant 16 : i32
    %353 = vector.broadcast %c16_i32_166 : i32 to vector<1x128xi32>
    %354 = arith.cmpi sge, %344, %353 : vector<1x128xi32>
    %355 = vector.shape_cast %354 : vector<1x128xi1> to vector<1x128xi1>
    %356 = vector.broadcast %355 : vector<1x128xi1> to vector<64x128xi1>
    %357 = arith.select %356, %352, %343 : vector<64x128xi1>, vector<64x128xf32>
    %c0_167 = arith.constant 0 : index
    %c0_168 = arith.constant 0 : index
    %358 = vector.load %arg11[%c0_167, %c0_168] : memref<64x128xf32, #tpu.memory_space<vmem>>, vector<64x128xf32>
    tpu.vector_store %arg11[%c0_167, %c0_168], %357 {strides = array<i32>} : memref<64x128xf32, #tpu.memory_space<vmem>>, vector<64x128xf32>,
    return
  }
  func.func @transform_0(%arg0: i32, %arg1: memref<2xi32, #tpu.memory_space<smem>>) -> (i32, i32) {
    %c0_i32 = arith.constant 0 : i32
    %c0_i32_0 = arith.constant 0 : i32
    %c0_i32_1 = arith.constant 0 : i32
    return %c0_i32, %c0_i32_0 : i32, i32
  }
  func.func @transform_1(%arg0: i32, %arg1: memref<2xi32, #tpu.memory_space<smem>>) -> (i32, i32) {
    %c0_i32 = arith.constant 0 : i32
    %c0_i32_0 = arith.constant 0 : i32
    %c0_i32_1 = arith.constant 0 : i32
    return %c0_i32, %c0_i32_0 : i32, i32
  }
  func.func @transform_2(%arg0: i32, %arg1: memref<2xi32, #tpu.memory_space<smem>>) -> (i32, i32) {
    %c0_i32 = arith.constant 0 : i32
    %c0_i32_0 = arith.constant 0 : i32
    %c0_i32_1 = arith.constant 0 : i32
    return %c0_i32, %c0_i32_0 : i32, i32
  }
  func.func @transform_3(%arg0: i32, %arg1: memref<2xi32, #tpu.memory_space<smem>>) -> (i32, i32, i32, i32) {
    %c0_i32 = arith.constant 0 : i32
    %c0_i32_0 = arith.constant 0 : i32
    %c0_i32_1 = arith.constant 0 : i32
    %c0_i32_2 = arith.constant 0 : i32
    %c0_i32_3 = arith.constant 0 : i32
    return %c0_i32, %c0_i32_0, %c0_i32_1, %c0_i32_2 : i32, i32, i32, i32
  }
  func.func @transform_4(%arg0: i32, %arg1: memref<2xi32, #tpu.memory_space<smem>>) -> (i32, i32, i32, i32) {
    %c0_i32 = arith.constant 0 : i32
    %c0_i32_0 = arith.constant 0 : i32
    %c0_i32_1 = arith.constant 0 : i32
    %c0_i32_2 = arith.constant 0 : i32
    %c0_i32_3 = arith.constant 0 : i32
    return %c0_i32, %c0_i32_0, %c0_i32_1, %c0_i32_2 : i32, i32, i32, i32
  }
  func.func @transform_5(%arg0: i32, %arg1: memref<2xi32, #tpu.memory_space<smem>>) -> (i32, i32, i32, i32) {
    %c0_i32 = arith.constant 0 : i32
    %c0_i32_0 = arith.constant 0 : i32
    %c0_i32_1 = arith.constant 0 : i32
    %c0_i32_2 = arith.constant 0 : i32
    %c0_i32_3 = arith.constant 0 : i32
    return %c0_i32, %c0_i32_0, %c0_i32_1, %c0_i32_2 : i32, i32, i32, i32
  }
  func.func @transform_6(%arg0: i32, %arg1: memref<2xi32, #tpu.memory_space<smem>>) -> (i32, i32, i32, i32) {
    %c0_i32 = arith.constant 0 : i32
    %c0_i32_0 = arith.constant 0 : i32
    %c0_i32_1 = arith.constant 0 : i32
    %c0_i32_2 = arith.constant 0 : i32
    %c0_i32_3 = arith.constant 0 : i32
    return %c0_i32, %c0_i32_0, %c0_i32_1, %c0_i32_2 : i32, i32, i32, i32
  }
  func.func @transform_7(%arg0: i32, %arg1: memref<2xi32, #tpu.memory_space<smem>>) -> (i32, i32) {
    %c0_i32 = arith.constant 0 : i32
    %c0_i32_0 = arith.constant 0 : i32
    %c0_i32_1 = arith.constant 0 : i32
    return %c0_i32, %c0_i32_0 : i32, i32
  }
  func.func @transform_8(%arg0: i32, %arg1: memref<2xi32, #tpu.memory_space<smem>>) -> (i32, i32) {
    %c0_i32 = arith.constant 0 : i32
    %c0_i32_0 = arith.constant 0 : i32
    %c0_i32_1 = arith.constant 0 : i32
    return %c0_i32, %c0_i32_0 : i32, i32
  }
  func.func @transform_9(%arg0: i32, %arg1: memref<2xi32, #tpu.memory_space<smem>>) -> (i32, i32) {
    %c0_i32 = arith.constant 0 : i32
    %c0_i32_0 = arith.constant 0 : i32
    %c0_i32_1 = arith.constant 0 : i32
    return %c0_i32, %c0_i32_0 : i32, i32
  }
}

</mosaic_0001>

<llo_original>
// kernel: feature_encoder.1
$region0: #{feature_encoder.1}
  #allocation0 [shape = 'u32[]', space=smem, size = 0x4, offset = 0x4, fixed_abs, tag = 'smem constant byte address 0x4 - core index']
  #allocation1 [shape = 'u32[72,128]{1,0:T(1,128)}', space=vmem, size = 0x9000, scoped, tag = 'internal scratch']
  #allocation2 [shape = 's32[1]{0}', space=sflag, size = 0x4, scoped, tag = 'scoped memory for feature_encoder.1']
  #allocation3 [shape = 'u8[512]{0}', space=smem, size = 0x200, scoped, tag = 'prefetched SMEM operand 0']
  %s0 = inlined_call_operand.vmem [shape: s32[2], index: 0, kind: input, shape index: {}]
  %s1 = inlined_call_operand.vmem [shape: f32[64,8], index: 1, kind: input, shape index: {}]
  %s2 = inlined_call_operand.vmem [shape: f32[8,32], index: 2, kind: input, shape index: {}]
  %s3 = inlined_call_operand.vmem [shape: f32[1,32], index: 3, kind: input, shape index: {}]
  %s4 = inlined_call_operand.vmem [shape: f32[2,3,96,32], index: 4, kind: input, shape index: {}]
  %s5 = inlined_call_operand.vmem [shape: f32[2,3,16,32], index: 5, kind: input, shape index: {}]
  %s6 = inlined_call_operand.vmem [shape: f32[2,3,1,32], index: 6, kind: input, shape index: {}]
  %s7 = inlined_call_operand.vmem [shape: f32[2,3,1,32], index: 7, kind: input, shape index: {}]
  %s8 = inlined_call_operand.vmem [shape: f32[32,128], index: 8, kind: input, shape index: {}]
  %s9 = inlined_call_operand.vmem [shape: f32[1,128], index: 9, kind: input, shape index: {}]
  %s10 = inlined_call_operand.vmem [shape: f32[64,128], index: 10, kind: output, shape index: {}]
  %s11 = sld [smem:[#allocation0]]
  $region46: #{feature_encoder.1} parent=0
    _
  %s13 = ssub.s32 1, %s11
  %s14 = scalar_select 0, %s13, %s11
  %s16 = sshll.u32 %s0, 4
  %s17 = int_to_ptr.vmem [resolvable:$true] %s16
  %19 = dma.vmem_to_smem %s17, 16, [#allocation3], [#allocation2]
  %21 = dma.done [#allocation2], 16
  %22 = sfence
  // Predicated region
  $region2: #{feature_encoder.1} parent=0 // pred_check
    _
  $region3: #{feature_encoder.1} parent=0 // pred_check_branch
    %24 = sbr.rel (0) target = $region5
  $region4: #{feature_encoder.1} parent=0 // pred_region
    _
  $region5: #{feature_encoder.1} parent=0 // pred_fallthru
    _
  // Predicated region
  $region6: #{feature_encoder.1} parent=0 // pred_check
    _
  $region7: #{feature_encoder.1} parent=0 // pred_check_branch
    %26 = sbr.rel (0) target = $region9
  $region8: #{feature_encoder.1} parent=0 // pred_region
    _
  $region9: #{feature_encoder.1} parent=0 // pred_fallthru
    _
  // Predicated region
  $region10: #{feature_encoder.1} parent=0 // pred_check
    _
  $region11: #{feature_encoder.1} parent=0 // pred_check_branch
    %28 = sbr.rel (0) target = $region13
  $region12: #{feature_encoder.1} parent=0 // pred_region
    _
  $region13: #{feature_encoder.1} parent=0 // pred_fallthru
    _
  // Predicated region
  $region14: #{feature_encoder.1} parent=0 // pred_check
    _
  $region15: #{feature_encoder.1} parent=0 // pred_check_branch
    %30 = sbr.rel (0) target = $region17
  $region16: #{feature_encoder.1} parent=0 // pred_region
    _
  $region17: #{feature_encoder.1} parent=0 // pred_fallthru
    _
  // Predicated region
  $region18: #{feature_encoder.1} parent=0 // pred_check
    _
  $region19: #{feature_encoder.1} parent=0 // pred_check_branch
    %32 = sbr.rel (0) target = $region21
  $region20: #{feature_encoder.1} parent=0 // pred_region
    _
  $region21: #{feature_encoder.1} parent=0 // pred_fallthru
    _
  // Predicated region
  $region22: #{feature_encoder.1} parent=0 // pred_check
    _
  $region23: #{feature_encoder.1} parent=0 // pred_check_branch
    %34 = sbr.rel (0) target = $region25
  $region24: #{feature_encoder.1} parent=0 // pred_region
    _
  $region25: #{feature_encoder.1} parent=0 // pred_fallthru
    _
  // Predicated region
  $region26: #{feature_encoder.1} parent=0 // pred_check
    _
  $region27: #{feature_encoder.1} parent=0 // pred_check_branch
    %36 = sbr.rel (0) target = $region29
  $region28: #{feature_encoder.1} parent=0 // pred_region
    _
  $region29: #{feature_encoder.1} parent=0 // pred_fallthru
    _
  // Predicated region
  $region30: #{feature_encoder.1} parent=0 // pred_check
    _
  $region31: #{feature_encoder.1} parent=0 // pred_check_branch
    %38 = sbr.rel (0) target = $region33
  $region32: #{feature_encoder.1} parent=0 // pred_region
    _
  $region33: #{feature_encoder.1} parent=0 // pred_fallthru
    _
  // Predicated region
  $region34: #{feature_encoder.1} parent=0 // pred_check
    _
  $region35: #{feature_encoder.1} parent=0 // pred_check_branch
    %40 = sbr.rel (0) target = $region37
  $region36: #{feature_encoder.1} parent=0 // pred_region
    _
  $region37: #{feature_encoder.1} parent=0 // pred_fallthru
    _
  %v41 = vlaneseq
  %v42 = vshrl.u32 %v41, 7
  %v43 = vadd.s32 %v42, 8
  %v44 = vadd.s32 %v42, 16
  %v45 = vadd.s32 %v42, 24
  %v46 = vadd.s32 %v42, 32
  %v47 = vadd.s32 %v42, 40
  %v48 = vadd.s32 %v42, 48
  %v49 = vadd.s32 %v42, 56
  %v50 = vand.u32 %v42, 31
  %v51 = vand.u32 %v43, 31
  %v52 = vand.u32 %v44, 31
  %v53 = vand.u32 %v45, 31
  %v54 = vand.u32 %v46, 31
  %v55 = vand.u32 %v47, 31
  %v56 = vand.u32 %v48, 31
  %v57 = vand.u32 %v49, 31
  %s58 = sld [smem:[#allocation3]]
  %v59 = vstv %s58
  %vm60 = vcmp.ge.s32.totalorder %v42, 32
  %vm61 = vcmp.ge.s32.totalorder %v43, 32
  %vm62 = vcmp.ge.s32.totalorder %v44, 32
  %vm63 = vcmp.ge.s32.totalorder %v45, 32
  %vm64 = vcmp.ge.s32.totalorder %v46, 32
  %vm65 = vcmp.ge.s32.totalorder %v47, 32
  %vm66 = vcmp.ge.s32.totalorder %v48, 32
  %vm67 = vcmp.ge.s32.totalorder %v49, 32
  %s68 = sld [smem:[#allocation3 + $0x1]]
  %v69 = vstv %s68
  %v70 = vsel %vm60, %v69, %v59
  %v71 = vsel %vm61, %v69, %v59
  %v72 = vsel %vm62, %v69, %v59
  %v73 = vsel %vm63, %v69, %v59
  %v74 = vsel %vm64, %v69, %v59
  %v75 = vsel %vm65, %v69, %v59
  %v76 = vsel %vm66, %v69, %v59
  %v77 = vsel %vm67, %v69, %v59
  %vm78 = vcmp.lt.s32.totalorder %v50, %v70
  %vm79 = vcmp.lt.s32.totalorder %v51, %v71
  %vm80 = vcmp.lt.s32.totalorder %v52, %v72
  %vm81 = vcmp.lt.s32.totalorder %v53, %v73
  %vm82 = vcmp.lt.s32.totalorder %v54, %v74
  %vm83 = vcmp.lt.s32.totalorder %v55, %v75
  %vm84 = vcmp.lt.s32.totalorder %v56, %v76
  %vm85 = vcmp.lt.s32.totalorder %v57, %v77
  %v86 = vsel %vm78, 1, 0
  %v87 = vsel %vm79, 1, 0
  %v88 = vsel %vm80, 1, 0
  %v89 = vsel %vm81, 1, 0
  %v90 = vsel %vm82, 1, 0
  %v91 = vsel %vm83, 1, 0
  %v92 = vsel %vm84, 1, 0
  %v93 = vsel %vm85, 1, 0
  %v94 = vcvt.s32.f32 %v86
  %v95 = vcvt.s32.f32 %v87
  %v96 = vcvt.s32.f32 %v88
  %v97 = vcvt.s32.f32 %v89
  %v98 = vcvt.s32.f32 %v90
  %v99 = vcvt.s32.f32 %v91
  %v100 = vcvt.s32.f32 %v92
  %v101 = vcvt.s32.f32 %v93
  %v102 = vlaneseq
  %v103 = vand.u32 %v102, 127
  %v104 = vld [vmem:[%s1] sm:$0xff]
  %v105 = vld [vmem:[%s1 + $0x8] sm:$0xff]
  %v106 = vld [vmem:[%s1 + $0x10] sm:$0xff]
  %v107 = vld [vmem:[%s1 + $0x18] sm:$0xff]
  %v108 = vld [vmem:[%s1 + $0x20] sm:$0xff]
  %v109 = vld [vmem:[%s1 + $0x28] sm:$0xff]
  %v110 = vld [vmem:[%s1 + $0x30] sm:$0xff]
  %v111 = vld [vmem:[%s1 + $0x38] sm:$0xff]
  %v112 = vld [vmem:[%s2] sm:$0xff]
  %v113 = vld [vmem:[%s3] sm:$0x1]
  %v115 = vperm.slane %v113, 0
  %vm117 = vcmask 64512
  %v119 = vsel %vm117, %v104, 0
  %v122 = vsel %vm117, %v105, 0
  %v125 = vsel %vm117, %v106, 0
  %v128 = vsel %vm117, %v107, 0
  %v131 = vsel %vm117, %v108, 0
  %v134 = vsel %vm117, %v109, 0
  %v137 = vsel %vm117, %v110, 0
  %v140 = vsel %vm117, %v111, 0
  %142 = vmatpush.msra.mxu0 0.0
  %143 = vmatpush.msra.mxu0 0.0
  %144 = vmatpush.msra.mxu0 0.0
  %145 = vmatpush.msra.mxu0 0.0
  %146 = vmatpush.msra.mxu0 0.0
  %147 = vmatpush.msra.mxu0 0.0
  %148 = vmatpush.msra.mxu0 0.0
  %149 = vmatpush.msra.mxu0 0.0
  %150 = vmatpush.msra.mxu0 0.0
  %151 = vmatpush.msra.mxu0 0.0
  %152 = vmatpush.msra.mxu0 0.0
  %153 = vmatpush.msra.mxu0 0.0
  %154 = vmatpush.msra.mxu0 0.0
  %155 = vmatpush.msra.mxu0 0.0
  %156 = vmatpush.msra.mxu0 0.0
  %157 = vmatpush.msra.mxu0 %v112
  %158 = vmatmul.f32.gmra.mxu0 %v119
  %v159 = vpop.f32.mrf.mxu0
  %v160 = vadd.f32 %v115, %v159
  %161 = vmatmul.f32.gmra.mxu0 %v122
  %v162 = vpop.f32.mrf.mxu0
  %v163 = vadd.f32 %v115, %v162
  %164 = vmatmul.f32.gmra.mxu0 %v125
  %v165 = vpop.f32.mrf.mxu0
  %v166 = vadd.f32 %v115, %v165
  %167 = vmatmul.f32.gmra.mxu0 %v128
  %v168 = vpop.f32.mrf.mxu0
  %v169 = vadd.f32 %v115, %v168
  %170 = vmatmul.f32.gmra.mxu0 %v131
  %v171 = vpop.f32.mrf.mxu0
  %v172 = vadd.f32 %v115, %v171
  %173 = vmatmul.f32.gmra.mxu0 %v134
  %v174 = vpop.f32.mrf.mxu0
  %v175 = vadd.f32 %v115, %v174
  %176 = vmatmul.f32.gmra.mxu0 %v137
  %v177 = vpop.f32.mrf.mxu0
  %v178 = vadd.f32 %v115, %v177
  %179 = vmatmul.f32.gmra.mxu0 %v140
  %v180 = vpop.f32.mrf.mxu0
  %v181 = vadd.f32 %v115, %v180
  %182 = vdwg.mxu0
  %v183 = vmul.f32 %v160, %v94
  %v184 = vmul.f32 %v163, %v95
  %v185 = vmul.f32 %v166, %v96
  %v186 = vmul.f32 %v169, %v97
  %v187 = vmul.f32 %v172, %v98
  %v188 = vmul.f32 %v175, %v99
  %v189 = vmul.f32 %v178, %v100
  %v190 = vmul.f32 %v181, %v101
  %v191 = vadd.s32 %v50, 4294967295
  %v192 = vadd.s32 %v51, 4294967295
  %v193 = vadd.s32 %v52, 4294967295
  %v194 = vadd.s32 %v53, 4294967295
  %v195 = vadd.s32 %v54, 4294967295
  %v196 = vadd.s32 %v55, 4294967295
  %v197 = vadd.s32 %v56, 4294967295
  %v198 = vadd.s32 %v57, 4294967295
  %vm199 = vcmp.ge.s32.totalorder %v191, 0
  %vm200 = vcmp.ge.s32.totalorder %v192, 0
  %vm201 = vcmp.ge.s32.totalorder %v193, 0
  %vm202 = vcmp.ge.s32.totalorder %v194, 0
  %vm203 = vcmp.ge.s32.totalorder %v195, 0
  %vm204 = vcmp.ge.s32.totalorder %v196, 0
  %vm205 = vcmp.ge.s32.totalorder %v197, 0
  %vm206 = vcmp.ge.s32.totalorder %v198, 0
  %vm207 = vcmp.lt.s32.totalorder %v191, 32
  %vm208 = vcmp.lt.s32.totalorder %v192, 32
  %vm209 = vcmp.lt.s32.totalorder %v193, 32
  %vm210 = vcmp.lt.s32.totalorder %v194, 32
  %vm211 = vcmp.lt.s32.totalorder %v195, 32
  %vm212 = vcmp.lt.s32.totalorder %v196, 32
  %vm213 = vcmp.lt.s32.totalorder %v197, 32
  %vm214 = vcmp.lt.s32.totalorder %v198, 32
  %vm215 = vmand %vm199, %vm207
  %vm216 = vmand %vm200, %vm208
  %vm217 = vmand %vm201, %vm209
  %vm218 = vmand %vm202, %vm210
  %vm219 = vmand %vm203, %vm211
  %vm220 = vmand %vm204, %vm212
  %vm221 = vmand %vm205, %vm213
  %vm222 = vmand %vm206, %vm214
  %v223 = vsel %vm215, 1, 0
  %v224 = vsel %vm216, 1, 0
  %v225 = vsel %vm217, 1, 0
  %v226 = vsel %vm218, 1, 0
  %v227 = vsel %vm219, 1, 0
  %v228 = vsel %vm220, 1, 0
  %v229 = vsel %vm221, 1, 0
  %v230 = vsel %vm222, 1, 0
  %v231 = vcvt.s32.f32 %v223
  %v232 = vcvt.s32.f32 %v224
  %v233 = vcvt.s32.f32 %v225
  %v234 = vcvt.s32.f32 %v226
  %v235 = vcvt.s32.f32 %v227
  %v236 = vcvt.s32.f32 %v228
  %v237 = vcvt.s32.f32 %v229
  %v238 = vcvt.s32.f32 %v230
  %v239 = vrot.slane %v183, 7
  %v240 = vrot.slane %v184, 7
  %v241 = vrot.slane %v185, 7
  %v242 = vrot.slane %v186, 7
  %v243 = vrot.slane %v187, 7
  %v244 = vrot.slane %v188, 7
  %v245 = vrot.slane %v189, 7
  %v246 = vrot.slane %v190, 7
  %vm247 = vcmp.lt.s32.totalorder %v42, 1
  %v248 = vsel %vm247, %v245, %v246
  %v249 = vsel %vm247, %v244, %v245
  %v250 = vsel %vm247, %v243, %v244
  %v251 = vsel %vm247, %v242, %v243
  %v252 = vsel %vm247, %v241, %v242
  %v253 = vsel %vm247, %v240, %v241
  %v254 = vsel %vm247, %v239, %v240
  %v255 = vsel %vm247, %v246, %v239
  %v256 = vmul.f32 %v255, %v231
  %v257 = vmul.f32 %v254, %v232
  %v258 = vmul.f32 %v253, %v233
  %v259 = vmul.f32 %v252, %v234
  %v260 = vmul.f32 %v251, %v235
  %v261 = vmul.f32 %v250, %v236
  %v262 = vmul.f32 %v249, %v237
  %v263 = vmul.f32 %v248, %v238
  %v264 = vadd.s32 %v50, 1
  %v265 = vadd.s32 %v51, 1
  %v266 = vadd.s32 %v52, 1
  %v267 = vadd.s32 %v53, 1
  %v268 = vadd.s32 %v54, 1
  %v269 = vadd.s32 %v55, 1
  %v270 = vadd.s32 %v56, 1
  %v271 = vadd.s32 %v57, 1
  %vm272 = vcmp.ge.s32.totalorder %v264, 0
  %vm273 = vcmp.ge.s32.totalorder %v265, 0
  %vm274 = vcmp.ge.s32.totalorder %v266, 0
  %vm275 = vcmp.ge.s32.totalorder %v267, 0
  %vm276 = vcmp.ge.s32.totalorder %v268, 0
  %vm277 = vcmp.ge.s32.totalorder %v269, 0
  %vm278 = vcmp.ge.s32.totalorder %v270, 0
  %vm279 = vcmp.ge.s32.totalorder %v271, 0
  %vm280 = vcmp.lt.s32.totalorder %v264, 32
  %vm281 = vcmp.lt.s32.totalorder %v265, 32
  %vm282 = vcmp.lt.s32.totalorder %v266, 32
  %vm283 = vcmp.lt.s32.totalorder %v267, 32
  %vm284 = vcmp.lt.s32.totalorder %v268, 32
  %vm285 = vcmp.lt.s32.totalorder %v269, 32
  %vm286 = vcmp.lt.s32.totalorder %v270, 32
  %vm287 = vcmp.lt.s32.totalorder %v271, 32
  %vm288 = vmand %vm272, %vm280
  %vm289 = vmand %vm273, %vm281
  %vm290 = vmand %vm274, %vm282
  %vm291 = vmand %vm275, %vm283
  %vm292 = vmand %vm276, %vm284
  %vm293 = vmand %vm277, %vm285
  %vm294 = vmand %vm278, %vm286
  %vm295 = vmand %vm279, %vm287
  %v296 = vsel %vm288, 1, 0
  %v297 = vsel %vm289, 1, 0
  %v298 = vsel %vm290, 1, 0
  %v299 = vsel %vm291, 1, 0
  %v300 = vsel %vm292, 1, 0
  %v301 = vsel %vm293, 1, 0
  %v302 = vsel %vm294, 1, 0
  %v303 = vsel %vm295, 1, 0
  %v304 = vcvt.s32.f32 %v296
  %v305 = vcvt.s32.f32 %v297
  %v306 = vcvt.s32.f32 %v298
  %v307 = vcvt.s32.f32 %v299
  %v308 = vcvt.s32.f32 %v300
  %v309 = vcvt.s32.f32 %v301
  %v310 = vcvt.s32.f32 %v302
  %v311 = vcvt.s32.f32 %v303
  %v312 = vrot.slane %v183, 1
  %v313 = vrot.slane %v184, 1
  %v314 = vrot.slane %v185, 1
  %v315 = vrot.slane %v186, 1
  %v316 = vrot.slane %v187, 1
  %v317 = vrot.slane %v188, 1
  %v318 = vrot.slane %v189, 1
  %v319 = vrot.slane %v190, 1
  %vm320 = vcmp.lt.s32.totalorder %v42, 7
  %v321 = vsel %vm320, %v318, %v319
  %v322 = vsel %vm320, %v317, %v318
  %v323 = vsel %vm320, %v316, %v317
  %v324 = vsel %vm320, %v315, %v316
  %v325 = vsel %vm320, %v314, %v315
  %v326 = vsel %vm320, %v313, %v314
  %v327 = vsel %vm320, %v312, %v313
  %v328 = vsel %vm320, %v319, %v312
  %v329 = vmul.f32 %v327, %v304
  %v330 = vmul.f32 %v326, %v305
  %v331 = vmul.f32 %v325, %v306
  %v332 = vmul.f32 %v324, %v307
  %v333 = vmul.f32 %v323, %v308
  %v334 = vmul.f32 %v322, %v309
  %v335 = vmul.f32 %v321, %v310
  %v336 = vmul.f32 %v328, %v311
  %345 = vrot.lane.b32.xlu0 %v183, 32
  %v346 = vpop.permute.xlu0 %345
  %347 = vrot.lane.b32.xlu0 %v184, 32
  %v348 = vpop.permute.xlu0 %347
  %349 = vrot.lane.b32.xlu0 %v185, 32
  %v350 = vpop.permute.xlu0 %349
  %351 = vrot.lane.b32.xlu0 %v186, 32
  %v352 = vpop.permute.xlu0 %351
  %353 = vrot.lane.b32.xlu0 %v187, 32
  %v354 = vpop.permute.xlu0 %353
  %355 = vrot.lane.b32.xlu0 %v188, 32
  %v356 = vpop.permute.xlu0 %355
  %357 = vrot.lane.b32.xlu0 %v189, 32
  %v358 = vpop.permute.xlu0 %357
  %359 = vrot.lane.b32.xlu0 %v190, 32
  %v360 = vpop.permute.xlu0 %359
  %377 = vrot.lane.b32.xlu0 %v329, 64
  %v378 = vpop.permute.xlu0 %377
  %379 = vrot.lane.b32.xlu0 %v330, 64
  %v380 = vpop.permute.xlu0 %379
  %381 = vrot.lane.b32.xlu0 %v331, 64
  %v382 = vpop.permute.xlu0 %381
  %383 = vrot.lane.b32.xlu0 %v332, 64
  %v384 = vpop.permute.xlu0 %383
  %385 = vrot.lane.b32.xlu0 %v333, 64
  %v386 = vpop.permute.xlu0 %385
  %387 = vrot.lane.b32.xlu0 %v334, 64
  %v388 = vpop.permute.xlu0 %387
  %389 = vrot.lane.b32.xlu0 %v335, 64
  %v390 = vpop.permute.xlu0 %389
  %391 = vrot.lane.b32.xlu0 %v336, 64
  %v392 = vpop.permute.xlu0 %391
  %vm401 = vcmask 261120
  %v402 = vsel %vm401, %v256, %v346
  %v403 = vsel %vm401, %v257, %v348
  %v404 = vsel %vm401, %v258, %v350
  %v405 = vsel %vm401, %v259, %v352
  %v406 = vsel %vm401, %v260, %v354
  %v407 = vsel %vm401, %v261, %v356
  %v408 = vsel %vm401, %v262, %v358
  %v409 = vsel %vm401, %v263, %v360
  %vm410 = vcmask 523264
  %v411 = vsel %vm410, %v402, %v378
  %v412 = vsel %vm410, %v403, %v380
  %v413 = vsel %vm410, %v404, %v382
  %v414 = vsel %vm410, %v405, %v384
  %v415 = vsel %vm410, %v406, %v386
  %v416 = vsel %vm410, %v407, %v388
  %v417 = vsel %vm410, %v408, %v390
  %v418 = vsel %vm410, %v409, %v392
  %v419 = vld [vmem:[%s4] sm:$0xff]
  %v420 = vld [vmem:[%s4 + $0x8] sm:$0xff]
  %v421 = vld [vmem:[%s4 + $0x10] sm:$0xff]
  %v422 = vld [vmem:[%s4 + $0x18] sm:$0xff]
  %v423 = vld [vmem:[%s4 + $0x20] sm:$0xff]
  %v424 = vld [vmem:[%s4 + $0x28] sm:$0xff]
  %v425 = vld [vmem:[%s4 + $0x30] sm:$0xff]
  %v426 = vld [vmem:[%s4 + $0x38] sm:$0xff]
  %v427 = vld [vmem:[%s4 + $0x40] sm:$0xff]
  %v428 = vld [vmem:[%s4 + $0x48] sm:$0xff]
  %v429 = vld [vmem:[%s4 + $0x50] sm:$0xff]
  %v430 = vld [vmem:[%s4 + $0x58] sm:$0xff]
  %v431 = vld [vmem:[%s6] sm:$0x1]
  %v433 = vperm.slane %v431, 0
  %vm435 = vcmask 785408
  %v437 = vsel %vm435, %v411, 0
  %v440 = vsel %vm435, %v412, 0
  %v443 = vsel %vm435, %v413, 0
  %v446 = vsel %vm435, %v414, 0
  %v449 = vsel %vm435, %v415, 0
  %v452 = vsel %vm435, %v416, 0
  %v455 = vsel %vm435, %v417, 0
  %v458 = vsel %vm435, %v418, 0
  %460 = vmatpush.msra.mxu0 0.0
  %461 = vmatpush.msra.mxu0 0.0
  %462 = vmatpush.msra.mxu0 0.0
  %463 = vmatpush.msra.mxu0 0.0
  %464 = vmatpush.msra.mxu0 %v430
  %465 = vmatpush.msra.mxu0 %v429
  %466 = vmatpush.msra.mxu0 %v428
  %467 = vmatpush.msra.mxu0 %v427
  %468 = vmatpush.msra.mxu0 %v426
  %469 = vmatpush.msra.mxu0 %v425
  %470 = vmatpush.msra.mxu0 %v424
  %471 = vmatpush.msra.mxu0 %v423
  %472 = vmatpush.msra.mxu0 %v422
  %473 = vmatpush.msra.mxu0 %v421
  %474 = vmatpush.msra.mxu0 %v420
  %475 = vmatpush.msra.mxu0 %v419
  %476 = vmatmul.f32.gmra.mxu0 %v437
  %v477 = vpop.f32.mrf.mxu0
  %v478 = vadd.f32 %v433, %v477
  %479 = vmatmul.f32.gmra.mxu0 %v440
  %v480 = vpop.f32.mrf.mxu0
  %v481 = vadd.f32 %v433, %v480
  %482 = vmatmul.f32.gmra.mxu0 %v443
  %v483 = vpop.f32.mrf.mxu0
  %v484 = vadd.f32 %v433, %v483
  %485 = vmatmul.f32.gmra.mxu0 %v446
  %v486 = vpop.f32.mrf.mxu0
  %v487 = vadd.f32 %v433, %v486
  %488 = vmatmul.f32.gmra.mxu0 %v449
  %v489 = vpop.f32.mrf.mxu0
  %v490 = vadd.f32 %v433, %v489
  %491 = vmatmul.f32.gmra.mxu0 %v452
  %v492 = vpop.f32.mrf.mxu0
  %v493 = vadd.f32 %v433, %v492
  %494 = vmatmul.f32.gmra.mxu0 %v455
  %v495 = vpop.f32.mrf.mxu0
  %v496 = vadd.f32 %v433, %v495
  %497 = vmatmul.f32.gmra.mxu0 %v458
  %v498 = vpop.f32.mrf.mxu0
  %v499 = vadd.f32 %v433, %v498
  %500 = vdwg.mxu0
  %v501 = vtanh.pop %v478
  %v502 = vtanh.pop %v481
  %v503 = vtanh.pop %v484
  %v504 = vtanh.pop %v487
  %v505 = vtanh.pop %v490
  %v506 = vtanh.pop %v493
  %v507 = vtanh.pop %v496
  %v508 = vtanh.pop %v499
  %v509 = vxor.u32 %v478, 2147483648
  %v510 = vxor.u32 %v481, 2147483648
  %v511 = vxor.u32 %v484, 2147483648
  %v512 = vxor.u32 %v487, 2147483648
  %v513 = vxor.u32 %v490, 2147483648
  %v514 = vxor.u32 %v493, 2147483648
  %v515 = vxor.u32 %v496, 2147483648
  %v516 = vxor.u32 %v499, 2147483648
  %v517 = vmul.f32 %v509, 1.442695
  %v518 = vpow.pop %v517
  %v519 = vmul.f32 %v510, 1.442695
  %v520 = vpow.pop %v519
  %v521 = vmul.f32 %v511, 1.442695
  %v522 = vpow.pop %v521
  %v523 = vmul.f32 %v512, 1.442695
  %v524 = vpow.pop %v523
  %v525 = vmul.f32 %v513, 1.442695
  %v526 = vpow.pop %v525
  %v527 = vmul.f32 %v514, 1.442695
  %v528 = vpow.pop %v527
  %v529 = vmul.f32 %v515, 1.442695
  %v530 = vpow.pop %v529
  %v531 = vmul.f32 %v516, 1.442695
  %v532 = vpow.pop %v531
  %v533 = vadd.f32 %v518, 1.0
  %v534 = vadd.f32 %v520, 1.0
  %v535 = vadd.f32 %v522, 1.0
  %v536 = vadd.f32 %v524, 1.0
  %v537 = vadd.f32 %v526, 1.0
  %v538 = vadd.f32 %v528, 1.0
  %v539 = vadd.f32 %v530, 1.0
  %v540 = vadd.f32 %v532, 1.0
  %v541 = vrcp.pop %v533
  %v542 = vmul.f32 %v533, %v541
  %v543 = vsub.f32 1.0, %v542
  %v544 = vmul.f32 %v541, %v543
  %v545 = vadd.f32 %v541, %v544
  %vm546 = vweird.f32 %v533
  %vm547 = vweird.f32 %v541
  %vm548 = vmor %vm546, %vm547
  %v549 = vsel %vm548, %v541, %v545
  %v550 = vand.u32 2147483647, %v533
  %vm551 = vcmp.eq.f32.partialorder %v550, 8.507059e+37
  %v552 = vand.u32 %v533, 2147483648
  %v553 = vor.u32 1.1754944e-38, %v552
  %v554 = vsel %vm551, %v553, %v549
  %v555 = vmul.f32 1.0, %v554
  %v556 = vrcp.pop %v534
  %v557 = vmul.f32 %v534, %v556
  %v558 = vsub.f32 1.0, %v557
  %v559 = vmul.f32 %v556, %v558
  %v560 = vadd.f32 %v556, %v559
  %vm561 = vweird.f32 %v534
  %vm562 = vweird.f32 %v556
  %vm563 = vmor %vm561, %vm562
  %v564 = vsel %vm563, %v556, %v560
  %v565 = vand.u32 2147483647, %v534
  %vm566 = vcmp.eq.f32.partialorder %v565, 8.507059e+37
  %v567 = vand.u32 %v534, 2147483648
  %v568 = vor.u32 1.1754944e-38, %v567
  %v569 = vsel %vm566, %v568, %v564
  %v570 = vmul.f32 1.0, %v569
  %v571 = vrcp.pop %v535
  %v572 = vmul.f32 %v535, %v571
  %v573 = vsub.f32 1.0, %v572
  %v574 = vmul.f32 %v571, %v573
  %v575 = vadd.f32 %v571, %v574
  %vm576 = vweird.f32 %v535
  %vm577 = vweird.f32 %v571
  %vm578 = vmor %vm576, %vm577
  %v579 = vsel %vm578, %v571, %v575
  %v580 = vand.u32 2147483647, %v535
  %vm581 = vcmp.eq.f32.partialorder %v580, 8.507059e+37
  %v582 = vand.u32 %v535, 2147483648
  %v583 = vor.u32 1.1754944e-38, %v582
  %v584 = vsel %vm581, %v583, %v579
  %v585 = vmul.f32 1.0, %v584
  %v586 = vrcp.pop %v536
  %v587 = vmul.f32 %v536, %v586
  %v588 = vsub.f32 1.0, %v587
  %v589 = vmul.f32 %v586, %v588
  %v590 = vadd.f32 %v586, %v589
  %vm591 = vweird.f32 %v536
  %vm592 = vweird.f32 %v586
  %vm593 = vmor %vm591, %vm592
  %v594 = vsel %vm593, %v586, %v590
  %v595 = vand.u32 2147483647, %v536
  %vm596 = vcmp.eq.f32.partialorder %v595, 8.507059e+37
  %v597 = vand.u32 %v536, 2147483648
  %v598 = vor.u32 1.1754944e-38, %v597
  %v599 = vsel %vm596, %v598, %v594
  %v600 = vmul.f32 1.0, %v599
  %v601 = vrcp.pop %v537
  %v602 = vmul.f32 %v537, %v601
  %v603 = vsub.f32 1.0, %v602
  %v604 = vmul.f32 %v601, %v603
  %v605 = vadd.f32 %v601, %v604
  %vm606 = vweird.f32 %v537
  %vm607 = vweird.f32 %v601
  %vm608 = vmor %vm606, %vm607
  %v609 = vsel %vm608, %v601, %v605
  %v610 = vand.u32 2147483647, %v537
  %vm611 = vcmp.eq.f32.partialorder %v610, 8.507059e+37
  %v612 = vand.u32 %v537, 2147483648
  %v613 = vor.u32 1.1754944e-38, %v612
  %v614 = vsel %vm611, %v613, %v609
  %v615 = vmul.f32 1.0, %v614
  %v616 = vrcp.pop %v538
  %v617 = vmul.f32 %v538, %v616
  %v618 = vsub.f32 1.0, %v617
  %v619 = vmul.f32 %v616, %v618
  %v620 = vadd.f32 %v616, %v619
  %vm621 = vweird.f32 %v538
  %vm622 = vweird.f32 %v616
  %vm623 = vmor %vm621, %vm622
  %v624 = vsel %vm623, %v616, %v620
  %v625 = vand.u32 2147483647, %v538
  %vm626 = vcmp.eq.f32.partialorder %v625, 8.507059e+37
  %v627 = vand.u32 %v538, 2147483648
  %v628 = vor.u32 1.1754944e-38, %v627
  %v629 = vsel %vm626, %v628, %v624
  %v630 = vmul.f32 1.0, %v629
  %v631 = vrcp.pop %v539
  %v632 = vmul.f32 %v539, %v631
  %v633 = vsub.f32 1.0, %v632
  %v634 = vmul.f32 %v631, %v633
  %v635 = vadd.f32 %v631, %v634
  %vm636 = vweird.f32 %v539
  %vm637 = vweird.f32 %v631
  %vm638 = vmor %vm636, %vm637
  %v639 = vsel %vm638, %v631, %v635
  %v640 = vand.u32 2147483647, %v539
  %vm641 = vcmp.eq.f32.partialorder %v640, 8.507059e+37
  %v642 = vand.u32 %v539, 2147483648
  %v643 = vor.u32 1.1754944e-38, %v642
  %v644 = vsel %vm641, %v643, %v639
  %v645 = vmul.f32 1.0, %v644
  %v646 = vrcp.pop %v540
  %v647 = vmul.f32 %v540, %v646
  %v648 = vsub.f32 1.0, %v647
  %v649 = vmul.f32 %v646, %v648
  %v650 = vadd.f32 %v646, %v649
  %vm651 = vweird.f32 %v540
  %vm652 = vweird.f32 %v646
  %vm653 = vmor %vm651, %vm652
  %v654 = vsel %vm653, %v646, %v650
  %v655 = vand.u32 2147483647, %v540
  %vm656 = vcmp.eq.f32.partialorder %v655, 8.507059e+37
  %v657 = vand.u32 %v540, 2147483648
  %v658 = vor.u32 1.1754944e-38, %v657
  %v659 = vsel %vm656, %v658, %v654
  %v660 = vmul.f32 1.0, %v659
  %669 = vrot.lane.b32.xlu0 %v555, 112
  %v670 = vpop.permute.xlu0 %669
  %671 = vrot.lane.b32.xlu0 %v570, 112
  %v672 = vpop.permute.xlu0 %671
  %673 = vrot.lane.b32.xlu0 %v585, 112
  %v674 = vpop.permute.xlu0 %673
  %675 = vrot.lane.b32.xlu0 %v600, 112
  %v676 = vpop.permute.xlu0 %675
  %677 = vrot.lane.b32.xlu0 %v615, 112
  %v678 = vpop.permute.xlu0 %677
  %679 = vrot.lane.b32.xlu0 %v630, 112
  %v680 = vpop.permute.xlu0 %679
  %681 = vrot.lane.b32.xlu0 %v645, 112
  %v682 = vpop.permute.xlu0 %681
  %683 = vrot.lane.b32.xlu0 %v660, 112
  %v684 = vpop.permute.xlu0 %683
  %v693 = vmul.f32 %v501, %v670
  %v694 = vmul.f32 %v502, %v672
  %v695 = vmul.f32 %v503, %v674
  %v696 = vmul.f32 %v504, %v676
  %v697 = vmul.f32 %v505, %v678
  %v698 = vmul.f32 %v506, %v680
  %v699 = vmul.f32 %v507, %v682
  %v700 = vmul.f32 %v508, %v684
  %v701 = vld [vmem:[%s5] sm:$0xff]
  %v702 = vld [vmem:[%s5 + $0x8] sm:$0xff]
  %v703 = vld [vmem:[%s7] sm:$0x1]
  %v705 = vperm.slane %v703, 0
  %vm707 = vcmask 130048
  %v709 = vsel %vm707, %v693, 0
  %v712 = vsel %vm707, %v694, 0
  %v715 = vsel %vm707, %v695, 0
  %v718 = vsel %vm707, %v696, 0
  %v721 = vsel %vm707, %v697, 0
  %v724 = vsel %vm707, %v698, 0
  %v727 = vsel %vm707, %v699, 0
  %v730 = vsel %vm707, %v700, 0
  %732 = vmatpush.msra.mxu0 0.0
  %733 = vmatpush.msra.mxu0 0.0
  %734 = vmatpush.msra.mxu0 0.0
  %735 = vmatpush.msra.mxu0 0.0
  %736 = vmatpush.msra.mxu0 0.0
  %737 = vmatpush.msra.mxu0 0.0
  %738 = vmatpush.msra.mxu0 0.0
  %739 = vmatpush.msra.mxu0 0.0
  %740 = vmatpush.msra.mxu0 0.0
  %741 = vmatpush.msra.mxu0 0.0
  %742 = vmatpush.msra.mxu0 0.0
  %743 = vmatpush.msra.mxu0 0.0
  %744 = vmatpush.msra.mxu0 0.0
  %745 = vmatpush.msra.mxu0 0.0
  %746 = vmatpush.msra.mxu0 %v702
  %747 = vmatpush.msra.mxu0 %v701
  %748 = vmatmul.f32.gmra.mxu0 %v709
  %v749 = vpop.f32.mrf.mxu0
  %v750 = vadd.f32 %v705, %v749
  %751 = vmatmul.f32.gmra.mxu0 %v712
  %v752 = vpop.f32.mrf.mxu0
  %v753 = vadd.f32 %v705, %v752
  %754 = vmatmul.f32.gmra.mxu0 %v715
  %v755 = vpop.f32.mrf.mxu0
  %v756 = vadd.f32 %v705, %v755
  %757 = vmatmul.f32.gmra.mxu0 %v718
  %v758 = vpop.f32.mrf.mxu0
  %v759 = vadd.f32 %v705, %v758
  %760 = vmatmul.f32.gmra.mxu0 %v721
  %v761 = vpop.f32.mrf.mxu0
  %v762 = vadd.f32 %v705, %v761
  %763 = vmatmul.f32.gmra.mxu0 %v724
  %v764 = vpop.f32.mrf.mxu0
  %v765 = vadd.f32 %v705, %v764
  %766 = vmatmul.f32.gmra.mxu0 %v727
  %v767 = vpop.f32.mrf.mxu0
  %v768 = vadd.f32 %v705, %v767
  %769 = vmatmul.f32.gmra.mxu0 %v730
  %v770 = vpop.f32.mrf.mxu0
  %v771 = vadd.f32 %v705, %v770
  %772 = vdwg.mxu0
  %v773 = vadd.f32 %v183, %v750
  %v774 = vadd.f32 %v184, %v753
  %v775 = vadd.f32 %v185, %v756
  %v776 = vadd.f32 %v186, %v759
  %v777 = vadd.f32 %v187, %v762
  %v778 = vadd.f32 %v188, %v765
  %v779 = vadd.f32 %v189, %v768
  %v780 = vadd.f32 %v190, %v771
  %v781 = vmul.f32 %v773, %v94
  %v782 = vmul.f32 %v774, %v95
  %v783 = vmul.f32 %v775, %v96
  %v784 = vmul.f32 %v776, %v97
  %v785 = vmul.f32 %v777, %v98
  %v786 = vmul.f32 %v778, %v99
  %v787 = vmul.f32 %v779, %v100
  %v788 = vmul.f32 %v780, %v101
  %v789 = vadd.s32 %v50, 4294967294
  %v790 = vadd.s32 %v51, 4294967294
  %v791 = vadd.s32 %v52, 4294967294
  %v792 = vadd.s32 %v53, 4294967294
  %v793 = vadd.s32 %v54, 4294967294
  %v794 = vadd.s32 %v55, 4294967294
  %v795 = vadd.s32 %v56, 4294967294
  %v796 = vadd.s32 %v57, 4294967294
  %vm797 = vcmp.ge.s32.totalorder %v789, 0
  %vm798 = vcmp.ge.s32.totalorder %v790, 0
  %vm799 = vcmp.ge.s32.totalorder %v791, 0
  %vm800 = vcmp.ge.s32.totalorder %v792, 0
  %vm801 = vcmp.ge.s32.totalorder %v793, 0
  %vm802 = vcmp.ge.s32.totalorder %v794, 0
  %vm803 = vcmp.ge.s32.totalorder %v795, 0
  %vm804 = vcmp.ge.s32.totalorder %v796, 0
  %vm805 = vcmp.lt.s32.totalorder %v789, 32
  %vm806 = vcmp.lt.s32.totalorder %v790, 32
  %vm807 = vcmp.lt.s32.totalorder %v791, 32
  %vm808 = vcmp.lt.s32.totalorder %v792, 32
  %vm809 = vcmp.lt.s32.totalorder %v793, 32
  %vm810 = vcmp.lt.s32.totalorder %v794, 32
  %vm811 = vcmp.lt.s32.totalorder %v795, 32
  %vm812 = vcmp.lt.s32.totalorder %v796, 32
  %vm813 = vmand %vm797, %vm805
  %vm814 = vmand %vm798, %vm806
  %vm815 = vmand %vm799, %vm807
  %vm816 = vmand %vm800, %vm808
  %vm817 = vmand %vm801, %vm809
  %vm818 = vmand %vm802, %vm810
  %vm819 = vmand %vm803, %vm811
  %vm820 = vmand %vm804, %vm812
  %v821 = vsel %vm813, 1, 0
  %v822 = vsel %vm814, 1, 0
  %v823 = vsel %vm815, 1, 0
  %v824 = vsel %vm816, 1, 0
  %v825 = vsel %vm817, 1, 0
  %v826 = vsel %vm818, 1, 0
  %v827 = vsel %vm819, 1, 0
  %v828 = vsel %vm820, 1, 0
  %v829 = vcvt.s32.f32 %v821
  %v830 = vcvt.s32.f32 %v822
  %v831 = vcvt.s32.f32 %v823
  %v832 = vcvt.s32.f32 %v824
  %v833 = vcvt.s32.f32 %v825
  %v834 = vcvt.s32.f32 %v826
  %v835 = vcvt.s32.f32 %v827
  %v836 = vcvt.s32.f32 %v828
  %v837 = vrot.slane %v781, 6
  %v838 = vrot.slane %v782, 6
  %v839 = vrot.slane %v783, 6
  %v840 = vrot.slane %v784, 6
  %v841 = vrot.slane %v785, 6
  %v842 = vrot.slane %v786, 6
  %v843 = vrot.slane %v787, 6
  %v844 = vrot.slane %v788, 6
  %vm845 = vcmp.lt.s32.totalorder %v42, 2
  %v846 = vsel %vm845, %v843, %v844
  %v847 = vsel %vm845, %v842, %v843
  %v848 = vsel %vm845, %v841, %v842
  %v849 = vsel %vm845, %v840, %v841
  %v850 = vsel %vm845, %v839, %v840
  %v851 = vsel %vm845, %v838, %v839
  %v852 = vsel %vm845, %v837, %v838
  %v853 = vsel %vm845, %v844, %v837
  %v854 = vmul.f32 %v853, %v829
  %v855 = vmul.f32 %v852, %v830
  %v856 = vmul.f32 %v851, %v831
  %v857 = vmul.f32 %v850, %v832
  %v858 = vmul.f32 %v849, %v833
  %v859 = vmul.f32 %v848, %v834
  %v860 = vmul.f32 %v847, %v835
  %v861 = vmul.f32 %v846, %v836
  %v862 = vadd.s32 %v50, 2
  %v863 = vadd.s32 %v51, 2
  %v864 = vadd.s32 %v52, 2
  %v865 = vadd.s32 %v53, 2
  %v866 = vadd.s32 %v54, 2
  %v867 = vadd.s32 %v55, 2
  %v868 = vadd.s32 %v56, 2
  %v869 = vadd.s32 %v57, 2
  %vm870 = vcmp.ge.s32.totalorder %v862, 0
  %vm871 = vcmp.ge.s32.totalorder %v863, 0
  %vm872 = vcmp.ge.s32.totalorder %v864, 0
  %vm873 = vcmp.ge.s32.totalorder %v865, 0
  %vm874 = vcmp.ge.s32.totalorder %v866, 0
  %vm875 = vcmp.ge.s32.totalorder %v867, 0
  %vm876 = vcmp.ge.s32.totalorder %v868, 0
  %vm877 = vcmp.ge.s32.totalorder %v869, 0
  %vm878 = vcmp.lt.s32.totalorder %v862, 32
  %vm879 = vcmp.lt.s32.totalorder %v863, 32
  %vm880 = vcmp.lt.s32.totalorder %v864, 32
  %vm881 = vcmp.lt.s32.totalorder %v865, 32
  %vm882 = vcmp.lt.s32.totalorder %v866, 32
  %vm883 = vcmp.lt.s32.totalorder %v867, 32
  %vm884 = vcmp.lt.s32.totalorder %v868, 32
  %vm885 = vcmp.lt.s32.totalorder %v869, 32
  %vm886 = vmand %vm870, %vm878
  %vm887 = vmand %vm871, %vm879
  %vm888 = vmand %vm872, %vm880
  %vm889 = vmand %vm873, %vm881
  %vm890 = vmand %vm874, %vm882
  %vm891 = vmand %vm875, %vm883
  %vm892 = vmand %vm876, %vm884
  %vm893 = vmand %vm877, %vm885
  %v894 = vsel %vm886, 1, 0
  %v895 = vsel %vm887, 1, 0
  %v896 = vsel %vm888, 1, 0
  %v897 = vsel %vm889, 1, 0
  %v898 = vsel %vm890, 1, 0
  %v899 = vsel %vm891, 1, 0
  %v900 = vsel %vm892, 1, 0
  %v901 = vsel %vm893, 1, 0
  %v902 = vcvt.s32.f32 %v894
  %v903 = vcvt.s32.f32 %v895
  %v904 = vcvt.s32.f32 %v896
  %v905 = vcvt.s32.f32 %v897
  %v906 = vcvt.s32.f32 %v898
  %v907 = vcvt.s32.f32 %v899
  %v908 = vcvt.s32.f32 %v900
  %v909 = vcvt.s32.f32 %v901
  %v910 = vrot.slane %v781, 2
  %v911 = vrot.slane %v782, 2
  %v912 = vrot.slane %v783, 2
  %v913 = vrot.slane %v784, 2
  %v914 = vrot.slane %v785, 2
  %v915 = vrot.slane %v786, 2
  %v916 = vrot.slane %v787, 2
  %v917 = vrot.slane %v788, 2
  %vm918 = vcmp.lt.s32.totalorder %v42, 6
  %v919 = vsel %vm918, %v916, %v917
  %v920 = vsel %vm918, %v915, %v916
  %v921 = vsel %vm918, %v914, %v915
  %v922 = vsel %vm918, %v913, %v914
  %v923 = vsel %vm918, %v912, %v913
  %v924 = vsel %vm918, %v911, %v912
  %v925 = vsel %vm918, %v910, %v911
  %v926 = vsel %vm918, %v917, %v910
  %v927 = vmul.f32 %v925, %v902
  %v928 = vmul.f32 %v924, %v903
  %v929 = vmul.f32 %v923, %v904
  %v930 = vmul.f32 %v922, %v905
  %v931 = vmul.f32 %v921, %v906
  %v932 = vmul.f32 %v920, %v907
  %v933 = vmul.f32 %v919, %v908
  %v934 = vmul.f32 %v926, %v909
  %943 = vrot.lane.b32.xlu0 %v781, 32
  %v944 = vpop.permute.xlu0 %943
  %945 = vrot.lane.b32.xlu0 %v782, 32
  %v946 = vpop.permute.xlu0 %945
  %947 = vrot.lane.b32.xlu0 %v783, 32
  %v948 = vpop.permute.xlu0 %947
  %949 = vrot.lane.b32.xlu0 %v784, 32
  %v950 = vpop.permute.xlu0 %949
  %951 = vrot.lane.b32.xlu0 %v785, 32
  %v952 = vpop.permute.xlu0 %951
  %953 = vrot.lane.b32.xlu0 %v786, 32
  %v954 = vpop.permute.xlu0 %953
  %955 = vrot.lane.b32.xlu0 %v787, 32
  %v956 = vpop.permute.xlu0 %955
  %957 = vrot.lane.b32.xlu0 %v788, 32
  %v958 = vpop.permute.xlu0 %957
  %975 = vrot.lane.b32.xlu0 %v927, 64
  %v976 = vpop.permute.xlu0 %975
  %977 = vrot.lane.b32.xlu0 %v928, 64
  %v978 = vpop.permute.xlu0 %977
  %979 = vrot.lane.b32.xlu0 %v929, 64
  %v980 = vpop.permute.xlu0 %979
  %981 = vrot.lane.b32.xlu0 %v930, 64
  %v982 = vpop.permute.xlu0 %981
  %983 = vrot.lane.b32.xlu0 %v931, 64
  %v984 = vpop.permute.xlu0 %983
  %985 = vrot.lane.b32.xlu0 %v932, 64
  %v986 = vpop.permute.xlu0 %985
  %987 = vrot.lane.b32.xlu0 %v933, 64
  %v988 = vpop.permute.xlu0 %987
  %989 = vrot.lane.b32.xlu0 %v934, 64
  %v990 = vpop.permute.xlu0 %989
  %v999 = vsel %vm401, %v854, %v944
  %v1000 = vsel %vm401, %v855, %v946
  %v1001 = vsel %vm401, %v856, %v948
  %v1002 = vsel %vm401, %v857, %v950
  %v1003 = vsel %vm401, %v858, %v952
  %v1004 = vsel %vm401, %v859, %v954
  %v1005 = vsel %vm401, %v860, %v956
  %v1006 = vsel %vm401, %v861, %v958
  %v1007 = vsel %vm410, %v999, %v976
  %v1008 = vsel %vm410, %v1000, %v978
  %v1009 = vsel %vm410, %v1001, %v980
  %v1010 = vsel %vm410, %v1002, %v982
  %v1011 = vsel %vm410, %v1003, %v984
  %v1012 = vsel %vm410, %v1004, %v986
  %v1013 = vsel %vm410, %v1005, %v988
  %v1014 = vsel %vm410, %v1006, %v990
  %s1015 = scalar_lea.vmem %s4, 96
  %v1016 = vld [vmem:[%s1015] sm:$0xff]
  %v1017 = vld [vmem:[%s1015 + $0x8] sm:$0xff]
  %v1018 = vld [vmem:[%s1015 + $0x10] sm:$0xff]
  %v1019 = vld [vmem:[%s1015 + $0x18] sm:$0xff]
  %v1020 = vld [vmem:[%s1015 + $0x20] sm:$0xff]
  %v1021 = vld [vmem:[%s1015 + $0x28] sm:$0xff]
  %v1022 = vld [vmem:[%s1015 + $0x30] sm:$0xff]
  %v1023 = vld [vmem:[%s1015 + $0x38] sm:$0xff]
  %v1024 = vld [vmem:[%s1015 + $0x40] sm:$0xff]
  %v1025 = vld [vmem:[%s1015 + $0x48] sm:$0xff]
  %v1026 = vld [vmem:[%s1015 + $0x50] sm:$0xff]
  %v1027 = vld [vmem:[%s1015 + $0x58] sm:$0xff]
  %s1028 = scalar_lea.vmem %s6, 1
  %v1029 = vld [vmem:[%s1028] sm:$0x1]
  %v1031 = vperm.slane %v1029, 0
  %v1034 = vsel %vm435, %v1007, 0
  %v1037 = vsel %vm435, %v1008, 0
  %v1040 = vsel %vm435, %v1009, 0
  %v1043 = vsel %vm435, %v1010, 0
  %v1046 = vsel %vm435, %v1011, 0
  %v1049 = vsel %vm435, %v1012, 0
  %v1052 = vsel %vm435, %v1013, 0
  %v1055 = vsel %vm435, %v1014, 0
  %1057 = vmatpush.msra.mxu0 0.0
  %1058 = vmatpush.msra.mxu0 0.0
  %1059 = vmatpush.msra.mxu0 0.0
  %1060 = vmatpush.msra.mxu0 0.0
  %1061 = vmatpush.msra.mxu0 %v1027
  %1062 = vmatpush.msra.mxu0 %v1026
  %1063 = vmatpush.msra.mxu0 %v1025
  %1064 = vmatpush.msra.mxu0 %v1024
  %1065 = vmatpush.msra.mxu0 %v1023
  %1066 = vmatpush.msra.mxu0 %v1022
  %1067 = vmatpush.msra.mxu0 %v1021
  %1068 = vmatpush.msra.mxu0 %v1020
  %1069 = vmatpush.msra.mxu0 %v1019
  %1070 = vmatpush.msra.mxu0 %v1018
  %1071 = vmatpush.msra.mxu0 %v1017
  %1072 = vmatpush.msra.mxu0 %v1016
  %1073 = vmatmul.f32.gmra.mxu0 %v1034
  %v1074 = vpop.f32.mrf.mxu0
  %v1075 = vadd.f32 %v1031, %v1074
  %1076 = vmatmul.f32.gmra.mxu0 %v1037
  %v1077 = vpop.f32.mrf.mxu0
  %v1078 = vadd.f32 %v1031, %v1077
  %1079 = vmatmul.f32.gmra.mxu0 %v1040
  %v1080 = vpop.f32.mrf.mxu0
  %v1081 = vadd.f32 %v1031, %v1080
  %1082 = vmatmul.f32.gmra.mxu0 %v1043
  %v1083 = vpop.f32.mrf.mxu0
  %v1084 = vadd.f32 %v1031, %v1083
  %1085 = vmatmul.f32.gmra.mxu0 %v1046
  %v1086 = vpop.f32.mrf.mxu0
  %v1087 = vadd.f32 %v1031, %v1086
  %1088 = vmatmul.f32.gmra.mxu0 %v1049
  %v1089 = vpop.f32.mrf.mxu0
  %v1090 = vadd.f32 %v1031, %v1089
  %1091 = vmatmul.f32.gmra.mxu0 %v1052
  %v1092 = vpop.f32.mrf.mxu0
  %v1093 = vadd.f32 %v1031, %v1092
  %1094 = vmatmul.f32.gmra.mxu0 %v1055
  %v1095 = vpop.f32.mrf.mxu0
  %v1096 = vadd.f32 %v1031, %v1095
  %1097 = vdwg.mxu0
  %v1098 = vtanh.pop %v1075
  %v1099 = vtanh.pop %v1078
  %v1100 = vtanh.pop %v1081
  %v1101 = vtanh.pop %v1084
  %v1102 = vtanh.pop %v1087
  %v1103 = vtanh.pop %v1090
  %v1104 = vtanh.pop %v1093
  %v1105 = vtanh.pop %v1096
  %v1106 = vxor.u32 %v1075, 2147483648
  %v1107 = vxor.u32 %v1078, 2147483648
  %v1108 = vxor.u32 %v1081, 2147483648
  %v1109 = vxor.u32 %v1084, 2147483648
  %v1110 = vxor.u32 %v1087, 2147483648
  %v1111 = vxor.u32 %v1090, 2147483648
  %v1112 = vxor.u32 %v1093, 2147483648
  %v1113 = vxor.u32 %v1096, 2147483648
  %v1114 = vmul.f32 %v1106, 1.442695
  %v1115 = vpow.pop %v1114
  %v1116 = vmul.f32 %v1107, 1.442695
  %v1117 = vpow.pop %v1116
  %v1118 = vmul.f32 %v1108, 1.442695
  %v1119 = vpow.pop %v1118
  %v1120 = vmul.f32 %v1109, 1.442695
  %v1121 = vpow.pop %v1120
  %v1122 = vmul.f32 %v1110, 1.442695
  %v1123 = vpow.pop %v1122
  %v1124 = vmul.f32 %v1111, 1.442695
  %v1125 = vpow.pop %v1124
  %v1126 = vmul.f32 %v1112, 1.442695
  %v1127 = vpow.pop %v1126
  %v1128 = vmul.f32 %v1113, 1.442695
  %v1129 = vpow.pop %v1128
  %v1130 = vadd.f32 %v1115, 1.0
  %v1131 = vadd.f32 %v1117, 1.0
  %v1132 = vadd.f32 %v1119, 1.0
  %v1133 = vadd.f32 %v1121, 1.0
  %v1134 = vadd.f32 %v1123, 1.0
  %v1135 = vadd.f32 %v1125, 1.0
  %v1136 = vadd.f32 %v1127, 1.0
  %v1137 = vadd.f32 %v1129, 1.0
  %v1138 = vrcp.pop %v1130
  %v1139 = vmul.f32 %v1130, %v1138
  %v1140 = vsub.f32 1.0, %v1139
  %v1141 = vmul.f32 %v1138, %v1140
  %v1142 = vadd.f32 %v1138, %v1141
  %vm1143 = vweird.f32 %v1130
  %vm1144 = vweird.f32 %v1138
  %vm1145 = vmor %vm1143, %vm1144
  %v1146 = vsel %vm1145, %v1138, %v1142
  %v1147 = vand.u32 2147483647, %v1130
  %vm1148 = vcmp.eq.f32.partialorder %v1147, 8.507059e+37
  %v1149 = vand.u32 %v1130, 2147483648
  %v1150 = vor.u32 1.1754944e-38, %v1149
  %v1151 = vsel %vm1148, %v1150, %v1146
  %v1152 = vmul.f32 1.0, %v1151
  %v1153 = vrcp.pop %v1131
  %v1154 = vmul.f32 %v1131, %v1153
  %v1155 = vsub.f32 1.0, %v1154
  %v1156 = vmul.f32 %v1153, %v1155
  %v1157 = vadd.f32 %v1153, %v1156
  %vm1158 = vweird.f32 %v1131
  %vm1159 = vweird.f32 %v1153
  %vm1160 = vmor %vm1158, %vm1159
  %v1161 = vsel %vm1160, %v1153, %v1157
  %v1162 = vand.u32 2147483647, %v1131
  %vm1163 = vcmp.eq.f32.partialorder %v1162, 8.507059e+37
  %v1164 = vand.u32 %v1131, 2147483648
  %v1165 = vor.u32 1.1754944e-38, %v1164
  %v1166 = vsel %vm1163, %v1165, %v1161
  %v1167 = vmul.f32 1.0, %v1166
  %v1168 = vrcp.pop %v1132
  %v1169 = vmul.f32 %v1132, %v1168
  %v1170 = vsub.f32 1.0, %v1169
  %v1171 = vmul.f32 %v1168, %v1170
  %v1172 = vadd.f32 %v1168, %v1171
  %vm1173 = vweird.f32 %v1132
  %vm1174 = vweird.f32 %v1168
  %vm1175 = vmor %vm1173, %vm1174
  %v1176 = vsel %vm1175, %v1168, %v1172
  %v1177 = vand.u32 2147483647, %v1132
  %vm1178 = vcmp.eq.f32.partialorder %v1177, 8.507059e+37
  %v1179 = vand.u32 %v1132, 2147483648
  %v1180 = vor.u32 1.1754944e-38, %v1179
  %v1181 = vsel %vm1178, %v1180, %v1176
  %v1182 = vmul.f32 1.0, %v1181
  %v1183 = vrcp.pop %v1133
  %v1184 = vmul.f32 %v1133, %v1183
  %v1185 = vsub.f32 1.0, %v1184
  %v1186 = vmul.f32 %v1183, %v1185
  %v1187 = vadd.f32 %v1183, %v1186
  %vm1188 = vweird.f32 %v1133
  %vm1189 = vweird.f32 %v1183
  %vm1190 = vmor %vm1188, %vm1189
  %v1191 = vsel %vm1190, %v1183, %v1187
  %v1192 = vand.u32 2147483647, %v1133
  %vm1193 = vcmp.eq.f32.partialorder %v1192, 8.507059e+37
  %v1194 = vand.u32 %v1133, 2147483648
  %v1195 = vor.u32 1.1754944e-38, %v1194
  %v1196 = vsel %vm1193, %v1195, %v1191
  %v1197 = vmul.f32 1.0, %v1196
  %v1198 = vrcp.pop %v1134
  %v1199 = vmul.f32 %v1134, %v1198
  %v1200 = vsub.f32 1.0, %v1199
  %v1201 = vmul.f32 %v1198, %v1200
  %v1202 = vadd.f32 %v1198, %v1201
  %vm1203 = vweird.f32 %v1134
  %vm1204 = vweird.f32 %v1198
  %vm1205 = vmor %vm1203, %vm1204
  %v1206 = vsel %vm1205, %v1198, %v1202
  %v1207 = vand.u32 2147483647, %v1134
  %vm1208 = vcmp.eq.f32.partialorder %v1207, 8.507059e+37
  %v1209 = vand.u32 %v1134, 2147483648
  %v1210 = vor.u32 1.1754944e-38, %v1209
  %v1211 = vsel %vm1208, %v1210, %v1206
  %v1212 = vmul.f32 1.0, %v1211
  %v1213 = vrcp.pop %v1135
  %v1214 = vmul.f32 %v1135, %v1213
  %v1215 = vsub.f32 1.0, %v1214
  %v1216 = vmul.f32 %v1213, %v1215
  %v1217 = vadd.f32 %v1213, %v1216
  %vm1218 = vweird.f32 %v1135
  %vm1219 = vweird.f32 %v1213
  %vm1220 = vmor %vm1218, %vm1219
  %v1221 = vsel %vm1220, %v1213, %v1217
  %v1222 = vand.u32 2147483647, %v1135
  %vm1223 = vcmp.eq.f32.partialorder %v1222, 8.507059e+37
  %v1224 = vand.u32 %v1135, 2147483648
  %v1225 = vor.u32 1.1754944e-38, %v1224
  %v1226 = vsel %vm1223, %v1225, %v1221
  %v1227 = vmul.f32 1.0, %v1226
  %v1228 = vrcp.pop %v1136
  %v1229 = vmul.f32 %v1136, %v1228
  %v1230 = vsub.f32 1.0, %v1229
  %v1231 = vmul.f32 %v1228, %v1230
  %v1232 = vadd.f32 %v1228, %v1231
  %vm1233 = vweird.f32 %v1136
  %vm1234 = vweird.f32 %v1228
  %vm1235 = vmor %vm1233, %vm1234
  %v1236 = vsel %vm1235, %v1228, %v1232
  %v1237 = vand.u32 2147483647, %v1136
  %vm1238 = vcmp.eq.f32.partialorder %v1237, 8.507059e+37
  %v1239 = vand.u32 %v1136, 2147483648
  %v1240 = vor.u32 1.1754944e-38, %v1239
  %v1241 = vsel %vm1238, %v1240, %v1236
  %v1242 = vmul.f32 1.0, %v1241
  %v1243 = vrcp.pop %v1137
  %v1244 = vmul.f32 %v1137, %v1243
  %v1245 = vsub.f32 1.0, %v1244
  %v1246 = vmul.f32 %v1243, %v1245
  %v1247 = vadd.f32 %v1243, %v1246
  %vm1248 = vweird.f32 %v1137
  %vm1249 = vweird.f32 %v1243
  %vm1250 = vmor %vm1248, %vm1249
  %v1251 = vsel %vm1250, %v1243, %v1247
  %v1252 = vand.u32 2147483647, %v1137
  %vm1253 = vcmp.eq.f32.partialorder %v1252, 8.507059e+37
  %v1254 = vand.u32 %v1137, 2147483648
  %v1255 = vor.u32 1.1754944e-38, %v1254
  %v1256 = vsel %vm1253, %v1255, %v1251
  %v1257 = vmul.f32 1.0, %v1256
  %1266 = vrot.lane.b32.xlu0 %v1152, 112
  %v1267 = vpop.permute.xlu0 %1266
  %1268 = vrot.lane.b32.xlu0 %v1167, 112
  %v1269 = vpop.permute.xlu0 %1268
  %1270 = vrot.lane.b32.xlu0 %v1182, 112
  %v1271 = vpop.permute.xlu0 %1270
  %1272 = vrot.lane.b32.xlu0 %v1197, 112
  %v1273 = vpop.permute.xlu0 %1272
  %1274 = vrot.lane.b32.xlu0 %v1212, 112
  %v1275 = vpop.permute.xlu0 %1274
  %1276 = vrot.lane.b32.xlu0 %v1227, 112
  %v1277 = vpop.permute.xlu0 %1276
  %1278 = vrot.lane.b32.xlu0 %v1242, 112
  %v1279 = vpop.permute.xlu0 %1278
  %1280 = vrot.lane.b32.xlu0 %v1257, 112
  %v1281 = vpop.permute.xlu0 %1280
  %v1290 = vmul.f32 %v1098, %v1267
  %v1291 = vmul.f32 %v1099, %v1269
  %v1292 = vmul.f32 %v1100, %v1271
  %v1293 = vmul.f32 %v1101, %v1273
  %v1294 = vmul.f32 %v1102, %v1275
  %v1295 = vmul.f32 %v1103, %v1277
  %v1296 = vmul.f32 %v1104, %v1279
  %v1297 = vmul.f32 %v1105, %v1281
  %s1298 = scalar_lea.vmem %s5, 16
  %v1299 = vld [vmem:[%s1298] sm:$0xff]
  %v1300 = vld [vmem:[%s1298 + $0x8] sm:$0xff]
  %s1301 = scalar_lea.vmem %s7, 1
  %v1302 = vld [vmem:[%s1301] sm:$0x1]
  %v1304 = vperm.slane %v1302, 0
  %v1307 = vsel %vm707, %v1290, 0
  %v1310 = vsel %vm707, %v1291, 0
  %v1313 = vsel %vm707, %v1292, 0
  %v1316 = vsel %vm707, %v1293, 0
  %v1319 = vsel %vm707, %v1294, 0
  %v1322 = vsel %vm707, %v1295, 0
  %v1325 = vsel %vm707, %v1296, 0
  %v1328 = vsel %vm707, %v1297, 0
  %1330 = vmatpush.msra.mxu0 0.0
  %1331 = vmatpush.msra.mxu0 0.0
  %1332 = vmatpush.msra.mxu0 0.0
  %1333 = vmatpush.msra.mxu0 0.0
  %1334 = vmatpush.msra.mxu0 0.0
  %1335 = vmatpush.msra.mxu0 0.0
  %1336 = vmatpush.msra.mxu0 0.0
  %1337 = vmatpush.msra.mxu0 0.0
  %1338 = vmatpush.msra.mxu0 0.0
  %1339 = vmatpush.msra.mxu0 0.0
  %1340 = vmatpush.msra.mxu0 0.0
  %1341 = vmatpush.msra.mxu0 0.0
  %1342 = vmatpush.msra.mxu0 0.0
  %1343 = vmatpush.msra.mxu0 0.0
  %1344 = vmatpush.msra.mxu0 %v1300
  %1345 = vmatpush.msra.mxu0 %v1299
  %1346 = vmatmul.f32.gmra.mxu0 %v1307
  %v1347 = vpop.f32.mrf.mxu0
  %v1348 = vadd.f32 %v1304, %v1347
  %1349 = vmatmul.f32.gmra.mxu0 %v1310
  %v1350 = vpop.f32.mrf.mxu0
  %v1351 = vadd.f32 %v1304, %v1350
  %1352 = vmatmul.f32.gmra.mxu0 %v1313
  %v1353 = vpop.f32.mrf.mxu0
  %v1354 = vadd.f32 %v1304, %v1353
  %1355 = vmatmul.f32.gmra.mxu0 %v1316
  %v1356 = vpop.f32.mrf.mxu0
  %v1357 = vadd.f32 %v1304, %v1356
  %1358 = vmatmul.f32.gmra.mxu0 %v1319
  %v1359 = vpop.f32.mrf.mxu0
  %v1360 = vadd.f32 %v1304, %v1359
  %1361 = vmatmul.f32.gmra.mxu0 %v1322
  %v1362 = vpop.f32.mrf.mxu0
  %v1363 = vadd.f32 %v1304, %v1362
  %1364 = vmatmul.f32.gmra.mxu0 %v1325
  %v1365 = vpop.f32.mrf.mxu0
  %v1366 = vadd.f32 %v1304, %v1365
  %1367 = vmatmul.f32.gmra.mxu0 %v1328
  %v1368 = vpop.f32.mrf.mxu0
  %v1369 = vadd.f32 %v1304, %v1368
  %1370 = vdwg.mxu0
  %v1371 = vadd.f32 %v781, %v1348
  %v1372 = vadd.f32 %v782, %v1351
  %v1373 = vadd.f32 %v783, %v1354
  %v1374 = vadd.f32 %v784, %v1357
  %v1375 = vadd.f32 %v785, %v1360
  %v1376 = vadd.f32 %v786, %v1363
  %v1377 = vadd.f32 %v787, %v1366
  %v1378 = vadd.f32 %v788, %v1369
  %v1379 = vmul.f32 %v1371, %v94
  %v1380 = vmul.f32 %v1372, %v95
  %v1381 = vmul.f32 %v1373, %v96
  %v1382 = vmul.f32 %v1374, %v97
  %v1383 = vmul.f32 %v1375, %v98
  %v1384 = vmul.f32 %v1376, %v99
  %v1385 = vmul.f32 %v1377, %v100
  %v1386 = vmul.f32 %v1378, %v101
  %v1387 = vadd.s32 %v50, 4294967292
  %v1388 = vadd.s32 %v51, 4294967292
  %v1389 = vadd.s32 %v52, 4294967292
  %v1390 = vadd.s32 %v53, 4294967292
  %v1391 = vadd.s32 %v54, 4294967292
  %v1392 = vadd.s32 %v55, 4294967292
  %v1393 = vadd.s32 %v56, 4294967292
  %v1394 = vadd.s32 %v57, 4294967292
  %vm1395 = vcmp.ge.s32.totalorder %v1387, 0
  %vm1396 = vcmp.ge.s32.totalorder %v1388, 0
  %vm1397 = vcmp.ge.s32.totalorder %v1389, 0
  %vm1398 = vcmp.ge.s32.totalorder %v1390, 0
  %vm1399 = vcmp.ge.s32.totalorder %v1391, 0
  %vm1400 = vcmp.ge.s32.totalorder %v1392, 0
  %vm1401 = vcmp.ge.s32.totalorder %v1393, 0
  %vm1402 = vcmp.ge.s32.totalorder %v1394, 0
  %vm1403 = vcmp.lt.s32.totalorder %v1387, 32
  %vm1404 = vcmp.lt.s32.totalorder %v1388, 32
  %vm1405 = vcmp.lt.s32.totalorder %v1389, 32
  %vm1406 = vcmp.lt.s32.totalorder %v1390, 32
  %vm1407 = vcmp.lt.s32.totalorder %v1391, 32
  %vm1408 = vcmp.lt.s32.totalorder %v1392, 32
  %vm1409 = vcmp.lt.s32.totalorder %v1393, 32
  %vm1410 = vcmp.lt.s32.totalorder %v1394, 32
  %vm1411 = vmand %vm1395, %vm1403
  %vm1412 = vmand %vm1396, %vm1404
  %vm1413 = vmand %vm1397, %vm1405
  %vm1414 = vmand %vm1398, %vm1406
  %vm1415 = vmand %vm1399, %vm1407
  %vm1416 = vmand %vm1400, %vm1408
  %vm1417 = vmand %vm1401, %vm1409
  %vm1418 = vmand %vm1402, %vm1410
  %v1419 = vsel %vm1411, 1, 0
  %v1420 = vsel %vm1412, 1, 0
  %v1421 = vsel %vm1413, 1, 0
  %v1422 = vsel %vm1414, 1, 0
  %v1423 = vsel %vm1415, 1, 0
  %v1424 = vsel %vm1416, 1, 0
  %v1425 = vsel %vm1417, 1, 0
  %v1426 = vsel %vm1418, 1, 0
  %v1427 = vcvt.s32.f32 %v1419
  %v1428 = vcvt.s32.f32 %v1420
  %v1429 = vcvt.s32.f32 %v1421
  %v1430 = vcvt.s32.f32 %v1422
  %v1431 = vcvt.s32.f32 %v1423
  %v1432 = vcvt.s32.f32 %v1424
  %v1433 = vcvt.s32.f32 %v1425
  %v1434 = vcvt.s32.f32 %v1426
  %v1435 = vrot.slane %v1379, 4
  %v1436 = vrot.slane %v1380, 4
  %v1437 = vrot.slane %v1381, 4
  %v1438 = vrot.slane %v1382, 4
  %v1439 = vrot.slane %v1383, 4
  %v1440 = vrot.slane %v1384, 4
  %v1441 = vrot.slane %v1385, 4
  %v1442 = vrot.slane %v1386, 4
  %vm1443 = vcmp.lt.s32.totalorder %v42, 4
  %v1444 = vsel %vm1443, %v1441, %v1442
  %v1445 = vsel %vm1443, %v1440, %v1441
  %v1446 = vsel %vm1443, %v1439, %v1440
  %v1447 = vsel %vm1443, %v1438, %v1439
  %v1448 = vsel %vm1443, %v1437, %v1438
  %v1449 = vsel %vm1443, %v1436, %v1437
  %v1450 = vsel %vm1443, %v1435, %v1436
  %v1451 = vsel %vm1443, %v1442, %v1435
  %v1452 = vmul.f32 %v1451, %v1427
  %v1453 = vmul.f32 %v1450, %v1428
  %v1454 = vmul.f32 %v1449, %v1429
  %v1455 = vmul.f32 %v1448, %v1430
  %v1456 = vmul.f32 %v1447, %v1431
  %v1457 = vmul.f32 %v1446, %v1432
  %v1458 = vmul.f32 %v1445, %v1433
  %v1459 = vmul.f32 %v1444, %v1434
  %v1460 = vadd.s32 %v50, 4
  %v1461 = vadd.s32 %v51, 4
  %v1462 = vadd.s32 %v52, 4
  %v1463 = vadd.s32 %v53, 4
  %v1464 = vadd.s32 %v54, 4
  %v1465 = vadd.s32 %v55, 4
  %v1466 = vadd.s32 %v56, 4
  %v1467 = vadd.s32 %v57, 4
  %vm1468 = vcmp.ge.s32.totalorder %v1460, 0
  %vm1469 = vcmp.ge.s32.totalorder %v1461, 0
  %vm1470 = vcmp.ge.s32.totalorder %v1462, 0
  %vm1471 = vcmp.ge.s32.totalorder %v1463, 0
  %vm1472 = vcmp.ge.s32.totalorder %v1464, 0
  %vm1473 = vcmp.ge.s32.totalorder %v1465, 0
  %vm1474 = vcmp.ge.s32.totalorder %v1466, 0
  %vm1475 = vcmp.ge.s32.totalorder %v1467, 0
  %vm1476 = vcmp.lt.s32.totalorder %v1460, 32
  %vm1477 = vcmp.lt.s32.totalorder %v1461, 32
  %vm1478 = vcmp.lt.s32.totalorder %v1462, 32
  %vm1479 = vcmp.lt.s32.totalorder %v1463, 32
  %vm1480 = vcmp.lt.s32.totalorder %v1464, 32
  %vm1481 = vcmp.lt.s32.totalorder %v1465, 32
  %vm1482 = vcmp.lt.s32.totalorder %v1466, 32
  %vm1483 = vcmp.lt.s32.totalorder %v1467, 32
  %vm1484 = vmand %vm1468, %vm1476
  %vm1485 = vmand %vm1469, %vm1477
  %vm1486 = vmand %vm1470, %vm1478
  %vm1487 = vmand %vm1471, %vm1479
  %vm1488 = vmand %vm1472, %vm1480
  %vm1489 = vmand %vm1473, %vm1481
  %vm1490 = vmand %vm1474, %vm1482
  %vm1491 = vmand %vm1475, %vm1483
  %v1492 = vsel %vm1484, 1, 0
  %v1493 = vsel %vm1485, 1, 0
  %v1494 = vsel %vm1486, 1, 0
  %v1495 = vsel %vm1487, 1, 0
  %v1496 = vsel %vm1488, 1, 0
  %v1497 = vsel %vm1489, 1, 0
  %v1498 = vsel %vm1490, 1, 0
  %v1499 = vsel %vm1491, 1, 0
  %v1500 = vcvt.s32.f32 %v1492
  %v1501 = vcvt.s32.f32 %v1493
  %v1502 = vcvt.s32.f32 %v1494
  %v1503 = vcvt.s32.f32 %v1495
  %v1504 = vcvt.s32.f32 %v1496
  %v1505 = vcvt.s32.f32 %v1497
  %v1506 = vcvt.s32.f32 %v1498
  %v1507 = vcvt.s32.f32 %v1499
  %v1508 = vmul.f32 %v1450, %v1500
  %v1509 = vmul.f32 %v1449, %v1501
  %v1510 = vmul.f32 %v1448, %v1502
  %v1511 = vmul.f32 %v1447, %v1503
  %v1512 = vmul.f32 %v1446, %v1504
  %v1513 = vmul.f32 %v1445, %v1505
  %v1514 = vmul.f32 %v1444, %v1506
  %v1515 = vmul.f32 %v1451, %v1507
  %1524 = vrot.lane.b32.xlu0 %v1379, 32
  %v1525 = vpop.permute.xlu0 %1524
  %1526 = vrot.lane.b32.xlu0 %v1380, 32
  %v1527 = vpop.permute.xlu0 %1526
  %1528 = vrot.lane.b32.xlu0 %v1381, 32
  %v1529 = vpop.permute.xlu0 %1528
  %1530 = vrot.lane.b32.xlu0 %v1382, 32
  %v1531 = vpop.permute.xlu0 %1530
  %1532 = vrot.lane.b32.xlu0 %v1383, 32
  %v1533 = vpop.permute.xlu0 %1532
  %1534 = vrot.lane.b32.xlu0 %v1384, 32
  %v1535 = vpop.permute.xlu0 %1534
  %1536 = vrot.lane.b32.xlu0 %v1385, 32
  %v1537 = vpop.permute.xlu0 %1536
  %1538 = vrot.lane.b32.xlu0 %v1386, 32
  %v1539 = vpop.permute.xlu0 %1538
  %1556 = vrot.lane.b32.xlu0 %v1508, 64
  %v1557 = vpop.permute.xlu0 %1556
  %1558 = vrot.lane.b32.xlu0 %v1509, 64
  %v1559 = vpop.permute.xlu0 %1558
  %1560 = vrot.lane.b32.xlu0 %v1510, 64
  %v1561 = vpop.permute.xlu0 %1560
  %1562 = vrot.lane.b32.xlu0 %v1511, 64
  %v1563 = vpop.permute.xlu0 %1562
  %1564 = vrot.lane.b32.xlu0 %v1512, 64
  %v1565 = vpop.permute.xlu0 %1564
  %1566 = vrot.lane.b32.xlu0 %v1513, 64
  %v1567 = vpop.permute.xlu0 %1566
  %1568 = vrot.lane.b32.xlu0 %v1514, 64
  %v1569 = vpop.permute.xlu0 %1568
  %1570 = vrot.lane.b32.xlu0 %v1515, 64
  %v1571 = vpop.permute.xlu0 %1570
  %v1580 = vsel %vm401, %v1452, %v1525
  %v1581 = vsel %vm401, %v1453, %v1527
  %v1582 = vsel %vm401, %v1454, %v1529
  %v1583 = vsel %vm401, %v1455, %v1531
  %v1584 = vsel %vm401, %v1456, %v1533
  %v1585 = vsel %vm401, %v1457, %v1535
  %v1586 = vsel %vm401, %v1458, %v1537
  %v1587 = vsel %vm401, %v1459, %v1539
  %v1588 = vsel %vm410, %v1580, %v1557
  %v1589 = vsel %vm410, %v1581, %v1559
  %v1590 = vsel %vm410, %v1582, %v1561
  %v1591 = vsel %vm410, %v1583, %v1563
  %v1592 = vsel %vm410, %v1584, %v1565
  %v1593 = vsel %vm410, %v1585, %v1567
  %v1594 = vsel %vm410, %v1586, %v1569
  %v1595 = vsel %vm410, %v1587, %v1571
  %s1596 = scalar_lea.vmem %s4, 192
  %v1597 = vld [vmem:[%s1596] sm:$0xff]
  %v1598 = vld [vmem:[%s1596 + $0x8] sm:$0xff]
  %v1599 = vld [vmem:[%s1596 + $0x10] sm:$0xff]
  %v1600 = vld [vmem:[%s1596 + $0x18] sm:$0xff]
  %v1601 = vld [vmem:[%s1596 + $0x20] sm:$0xff]
  %v1602 = vld [vmem:[%s1596 + $0x28] sm:$0xff]
  %v1603 = vld [vmem:[%s1596 + $0x30] sm:$0xff]
  %v1604 = vld [vmem:[%s1596 + $0x38] sm:$0xff]
  %v1605 = vld [vmem:[%s1596 + $0x40] sm:$0xff]
  %v1606 = vld [vmem:[%s1596 + $0x48] sm:$0xff]
  %v1607 = vld [vmem:[%s1596 + $0x50] sm:$0xff]
  %v1608 = vld [vmem:[%s1596 + $0x58] sm:$0xff]
  %s1609 = scalar_lea.vmem %s6, 2
  %v1610 = vld [vmem:[%s1609] sm:$0x1]
  %v1612 = vperm.slane %v1610, 0
  %v1615 = vsel %vm435, %v1588, 0
  %v1618 = vsel %vm435, %v1589, 0
  %v1621 = vsel %vm435, %v1590, 0
  %v1624 = vsel %vm435, %v1591, 0
  %v1627 = vsel %vm435, %v1592, 0
  %v1630 = vsel %vm435, %v1593, 0
  %v1633 = vsel %vm435, %v1594, 0
  %v1636 = vsel %vm435, %v1595, 0
  %1638 = vmatpush.msra.mxu0 0.0
  %1639 = vmatpush.msra.mxu0 0.0
  %1640 = vmatpush.msra.mxu0 0.0
  %1641 = vmatpush.msra.mxu0 0.0
  %1642 = vmatpush.msra.mxu0 %v1608
  %1643 = vmatpush.msra.mxu0 %v1607
  %1644 = vmatpush.msra.mxu0 %v1606
  %1645 = vmatpush.msra.mxu0 %v1605
  %1646 = vmatpush.msra.mxu0 %v1604
  %1647 = vmatpush.msra.mxu0 %v1603
  %1648 = vmatpush.msra.mxu0 %v1602
  %1649 = vmatpush.msra.mxu0 %v1601
  %1650 = vmatpush.msra.mxu0 %v1600
  %1651 = vmatpush.msra.mxu0 %v1599
  %1652 = vmatpush.msra.mxu0 %v1598
  %1653 = vmatpush.msra.mxu0 %v1597
  %1654 = vmatmul.f32.gmra.mxu0 %v1615
  %v1655 = vpop.f32.mrf.mxu0
  %v1656 = vadd.f32 %v1612, %v1655
  %1657 = vmatmul.f32.gmra.mxu0 %v1618
  %v1658 = vpop.f32.mrf.mxu0
  %v1659 = vadd.f32 %v1612, %v1658
  %1660 = vmatmul.f32.gmra.mxu0 %v1621
  %v1661 = vpop.f32.mrf.mxu0
  %v1662 = vadd.f32 %v1612, %v1661
  %1663 = vmatmul.f32.gmra.mxu0 %v1624
  %v1664 = vpop.f32.mrf.mxu0
  %v1665 = vadd.f32 %v1612, %v1664
  %1666 = vmatmul.f32.gmra.mxu0 %v1627
  %v1667 = vpop.f32.mrf.mxu0
  %v1668 = vadd.f32 %v1612, %v1667
  %1669 = vmatmul.f32.gmra.mxu0 %v1630
  %v1670 = vpop.f32.mrf.mxu0
  %v1671 = vadd.f32 %v1612, %v1670
  %1672 = vmatmul.f32.gmra.mxu0 %v1633
  %v1673 = vpop.f32.mrf.mxu0
  %v1674 = vadd.f32 %v1612, %v1673
  %1675 = vmatmul.f32.gmra.mxu0 %v1636
  %v1676 = vpop.f32.mrf.mxu0
  %v1677 = vadd.f32 %v1612, %v1676
  %1678 = vdwg.mxu0
  %v1679 = vtanh.pop %v1656
  %v1680 = vtanh.pop %v1659
  %v1681 = vtanh.pop %v1662
  %v1682 = vtanh.pop %v1665
  %v1683 = vtanh.pop %v1668
  %v1684 = vtanh.pop %v1671
  %v1685 = vtanh.pop %v1674
  %v1686 = vtanh.pop %v1677
  %v1687 = vxor.u32 %v1656, 2147483648
  %v1688 = vxor.u32 %v1659, 2147483648
  %v1689 = vxor.u32 %v1662, 2147483648
  %v1690 = vxor.u32 %v1665, 2147483648
  %v1691 = vxor.u32 %v1668, 2147483648
  %v1692 = vxor.u32 %v1671, 2147483648
  %v1693 = vxor.u32 %v1674, 2147483648
  %v1694 = vxor.u32 %v1677, 2147483648
  %v1695 = vmul.f32 %v1687, 1.442695
  %v1696 = vpow.pop %v1695
  %v1697 = vmul.f32 %v1688, 1.442695
  %v1698 = vpow.pop %v1697
  %v1699 = vmul.f32 %v1689, 1.442695
  %v1700 = vpow.pop %v1699
  %v1701 = vmul.f32 %v1690, 1.442695
  %v1702 = vpow.pop %v1701
  %v1703 = vmul.f32 %v1691, 1.442695
  %v1704 = vpow.pop %v1703
  %v1705 = vmul.f32 %v1692, 1.442695
  %v1706 = vpow.pop %v1705
  %v1707 = vmul.f32 %v1693, 1.442695
  %v1708 = vpow.pop %v1707
  %v1709 = vmul.f32 %v1694, 1.442695
  %v1710 = vpow.pop %v1709
  %v1711 = vadd.f32 %v1696, 1.0
  %v1712 = vadd.f32 %v1698, 1.0
  %v1713 = vadd.f32 %v1700, 1.0
  %v1714 = vadd.f32 %v1702, 1.0
  %v1715 = vadd.f32 %v1704, 1.0
  %v1716 = vadd.f32 %v1706, 1.0
  %v1717 = vadd.f32 %v1708, 1.0
  %v1718 = vadd.f32 %v1710, 1.0
  %v1719 = vrcp.pop %v1711
  %v1720 = vmul.f32 %v1711, %v1719
  %v1721 = vsub.f32 1.0, %v1720
  %v1722 = vmul.f32 %v1719, %v1721
  %v1723 = vadd.f32 %v1719, %v1722
  %vm1724 = vweird.f32 %v1711
  %vm1725 = vweird.f32 %v1719
  %vm1726 = vmor %vm1724, %vm1725
  %v1727 = vsel %vm1726, %v1719, %v1723
  %v1728 = vand.u32 2147483647, %v1711
  %vm1729 = vcmp.eq.f32.partialorder %v1728, 8.507059e+37
  %v1730 = vand.u32 %v1711, 2147483648
  %v1731 = vor.u32 1.1754944e-38, %v1730
  %v1732 = vsel %vm1729, %v1731, %v1727
  %v1733 = vmul.f32 1.0, %v1732
  %v1734 = vrcp.pop %v1712
  %v1735 = vmul.f32 %v1712, %v1734
  %v1736 = vsub.f32 1.0, %v1735
  %v1737 = vmul.f32 %v1734, %v1736
  %v1738 = vadd.f32 %v1734, %v1737
  %vm1739 = vweird.f32 %v1712
  %vm1740 = vweird.f32 %v1734
  %vm1741 = vmor %vm1739, %vm1740
  %v1742 = vsel %vm1741, %v1734, %v1738
  %v1743 = vand.u32 2147483647, %v1712
  %vm1744 = vcmp.eq.f32.partialorder %v1743, 8.507059e+37
  %v1745 = vand.u32 %v1712, 2147483648
  %v1746 = vor.u32 1.1754944e-38, %v1745
  %v1747 = vsel %vm1744, %v1746, %v1742
  %v1748 = vmul.f32 1.0, %v1747
  %v1749 = vrcp.pop %v1713
  %v1750 = vmul.f32 %v1713, %v1749
  %v1751 = vsub.f32 1.0, %v1750
  %v1752 = vmul.f32 %v1749, %v1751
  %v1753 = vadd.f32 %v1749, %v1752
  %vm1754 = vweird.f32 %v1713
  %vm1755 = vweird.f32 %v1749
  %vm1756 = vmor %vm1754, %vm1755
  %v1757 = vsel %vm1756, %v1749, %v1753
  %v1758 = vand.u32 2147483647, %v1713
  %vm1759 = vcmp.eq.f32.partialorder %v1758, 8.507059e+37
  %v1760 = vand.u32 %v1713, 2147483648
  %v1761 = vor.u32 1.1754944e-38, %v1760
  %v1762 = vsel %vm1759, %v1761, %v1757
  %v1763 = vmul.f32 1.0, %v1762
  %v1764 = vrcp.pop %v1714
  %v1765 = vmul.f32 %v1714, %v1764
  %v1766 = vsub.f32 1.0, %v1765
  %v1767 = vmul.f32 %v1764, %v1766
  %v1768 = vadd.f32 %v1764, %v1767
  %vm1769 = vweird.f32 %v1714
  %vm1770 = vweird.f32 %v1764
  %vm1771 = vmor %vm1769, %vm1770
  %v1772 = vsel %vm1771, %v1764, %v1768
  %v1773 = vand.u32 2147483647, %v1714
  %vm1774 = vcmp.eq.f32.partialorder %v1773, 8.507059e+37
  %v1775 = vand.u32 %v1714, 2147483648
  %v1776 = vor.u32 1.1754944e-38, %v1775
  %v1777 = vsel %vm1774, %v1776, %v1772
  %v1778 = vmul.f32 1.0, %v1777
  %v1779 = vrcp.pop %v1715
  %v1780 = vmul.f32 %v1715, %v1779
  %v1781 = vsub.f32 1.0, %v1780
  %v1782 = vmul.f32 %v1779, %v1781
  %v1783 = vadd.f32 %v1779, %v1782
  %vm1784 = vweird.f32 %v1715
  %vm1785 = vweird.f32 %v1779
  %vm1786 = vmor %vm1784, %vm1785
  %v1787 = vsel %vm1786, %v1779, %v1783
  %v1788 = vand.u32 2147483647, %v1715
  %vm1789 = vcmp.eq.f32.partialorder %v1788, 8.507059e+37
  %v1790 = vand.u32 %v1715, 2147483648
  %v1791 = vor.u32 1.1754944e-38, %v1790
  %v1792 = vsel %vm1789, %v1791, %v1787
  %v1793 = vmul.f32 1.0, %v1792
  %v1794 = vrcp.pop %v1716
  %v1795 = vmul.f32 %v1716, %v1794
  %v1796 = vsub.f32 1.0, %v1795
  %v1797 = vmul.f32 %v1794, %v1796
  %v1798 = vadd.f32 %v1794, %v1797
  %vm1799 = vweird.f32 %v1716
  %vm1800 = vweird.f32 %v1794
  %vm1801 = vmor %vm1799, %vm1800
  %v1802 = vsel %vm1801, %v1794, %v1798
  %v1803 = vand.u32 2147483647, %v1716
  %vm1804 = vcmp.eq.f32.partialorder %v1803, 8.507059e+37
  %v1805 = vand.u32 %v1716, 2147483648
  %v1806 = vor.u32 1.1754944e-38, %v1805
  %v1807 = vsel %vm1804, %v1806, %v1802
  %v1808 = vmul.f32 1.0, %v1807
  %v1809 = vrcp.pop %v1717
  %v1810 = vmul.f32 %v1717, %v1809
  %v1811 = vsub.f32 1.0, %v1810
  %v1812 = vmul.f32 %v1809, %v1811
  %v1813 = vadd.f32 %v1809, %v1812
  %vm1814 = vweird.f32 %v1717
  %vm1815 = vweird.f32 %v1809
  %vm1816 = vmor %vm1814, %vm1815
  %v1817 = vsel %vm1816, %v1809, %v1813
  %v1818 = vand.u32 2147483647, %v1717
  %vm1819 = vcmp.eq.f32.partialorder %v1818, 8.507059e+37
  %v1820 = vand.u32 %v1717, 2147483648
  %v1821 = vor.u32 1.1754944e-38, %v1820
  %v1822 = vsel %vm1819, %v1821, %v1817
  %v1823 = vmul.f32 1.0, %v1822
  %v1824 = vrcp.pop %v1718
  %v1825 = vmul.f32 %v1718, %v1824
  %v1826 = vsub.f32 1.0, %v1825
  %v1827 = vmul.f32 %v1824, %v1826
  %v1828 = vadd.f32 %v1824, %v1827
  %vm1829 = vweird.f32 %v1718
  %vm1830 = vweird.f32 %v1824
  %vm1831 = vmor %vm1829, %vm1830
  %v1832 = vsel %vm1831, %v1824, %v1828
  %v1833 = vand.u32 2147483647, %v1718
  %vm1834 = vcmp.eq.f32.partialorder %v1833, 8.507059e+37
  %v1835 = vand.u32 %v1718, 2147483648
  %v1836 = vor.u32 1.1754944e-38, %v1835
  %v1837 = vsel %vm1834, %v1836, %v1832
  %v1838 = vmul.f32 1.0, %v1837
  %1847 = vrot.lane.b32.xlu0 %v1733, 112
  %v1848 = vpop.permute.xlu0 %1847
  %1849 = vrot.lane.b32.xlu0 %v1748, 112
  %v1850 = vpop.permute.xlu0 %1849
  %1851 = vrot.lane.b32.xlu0 %v1763, 112
  %v1852 = vpop.permute.xlu0 %1851
  %1853 = vrot.lane.b32.xlu0 %v1778, 112
  %v1854 = vpop.permute.xlu0 %1853
  %1855 = vrot.lane.b32.xlu0 %v1793, 112
  %v1856 = vpop.permute.xlu0 %1855
  %1857 = vrot.lane.b32.xlu0 %v1808, 112
  %v1858 = vpop.permute.xlu0 %1857
  %1859 = vrot.lane.b32.xlu0 %v1823, 112
  %v1860 = vpop.permute.xlu0 %1859
  %1861 = vrot.lane.b32.xlu0 %v1838, 112
  %v1862 = vpop.permute.xlu0 %1861
  %v1871 = vmul.f32 %v1679, %v1848
  %v1872 = vmul.f32 %v1680, %v1850
  %v1873 = vmul.f32 %v1681, %v1852
  %v1874 = vmul.f32 %v1682, %v1854
  %v1875 = vmul.f32 %v1683, %v1856
  %v1876 = vmul.f32 %v1684, %v1858
  %v1877 = vmul.f32 %v1685, %v1860
  %v1878 = vmul.f32 %v1686, %v1862
  %s1879 = scalar_lea.vmem %s5, 32
  %v1880 = vld [vmem:[%s1879] sm:$0xff]
  %v1881 = vld [vmem:[%s1879 + $0x8] sm:$0xff]
  %s1882 = scalar_lea.vmem %s7, 2
  %v1883 = vld [vmem:[%s1882] sm:$0x1]
  %v1885 = vperm.slane %v1883, 0
  %v1888 = vsel %vm707, %v1871, 0
  %v1891 = vsel %vm707, %v1872, 0
  %v1894 = vsel %vm707, %v1873, 0
  %v1897 = vsel %vm707, %v1874, 0
  %v1900 = vsel %vm707, %v1875, 0
  %v1903 = vsel %vm707, %v1876, 0
  %v1906 = vsel %vm707, %v1877, 0
  %v1909 = vsel %vm707, %v1878, 0
  %1911 = vmatpush.msra.mxu0 0.0
  %1912 = vmatpush.msra.mxu0 0.0
  %1913 = vmatpush.msra.mxu0 0.0
  %1914 = vmatpush.msra.mxu0 0.0
  %1915 = vmatpush.msra.mxu0 0.0
  %1916 = vmatpush.msra.mxu0 0.0
  %1917 = vmatpush.msra.mxu0 0.0
  %1918 = vmatpush.msra.mxu0 0.0
  %1919 = vmatpush.msra.mxu0 0.0
  %1920 = vmatpush.msra.mxu0 0.0
  %1921 = vmatpush.msra.mxu0 0.0
  %1922 = vmatpush.msra.mxu0 0.0
  %1923 = vmatpush.msra.mxu0 0.0
  %1924 = vmatpush.msra.mxu0 0.0
  %1925 = vmatpush.msra.mxu0 %v1881
  %1926 = vmatpush.msra.mxu0 %v1880
  %1927 = vmatmul.f32.gmra.mxu0 %v1888
  %v1928 = vpop.f32.mrf.mxu0
  %v1929 = vadd.f32 %v1885, %v1928
  %1930 = vmatmul.f32.gmra.mxu0 %v1891
  %v1931 = vpop.f32.mrf.mxu0
  %v1932 = vadd.f32 %v1885, %v1931
  %1933 = vmatmul.f32.gmra.mxu0 %v1894
  %v1934 = vpop.f32.mrf.mxu0
  %v1935 = vadd.f32 %v1885, %v1934
  %1936 = vmatmul.f32.gmra.mxu0 %v1897
  %v1937 = vpop.f32.mrf.mxu0
  %v1938 = vadd.f32 %v1885, %v1937
  %1939 = vmatmul.f32.gmra.mxu0 %v1900
  %v1940 = vpop.f32.mrf.mxu0
  %v1941 = vadd.f32 %v1885, %v1940
  %1942 = vmatmul.f32.gmra.mxu0 %v1903
  %v1943 = vpop.f32.mrf.mxu0
  %v1944 = vadd.f32 %v1885, %v1943
  %1945 = vmatmul.f32.gmra.mxu0 %v1906
  %v1946 = vpop.f32.mrf.mxu0
  %v1947 = vadd.f32 %v1885, %v1946
  %1948 = vmatmul.f32.gmra.mxu0 %v1909
  %v1949 = vpop.f32.mrf.mxu0
  %v1950 = vadd.f32 %v1885, %v1949
  %1951 = vdwg.mxu0
  %v1952 = vadd.f32 %v1379, %v1929
  %v1953 = vadd.f32 %v1380, %v1932
  %v1954 = vadd.f32 %v1381, %v1935
  %v1955 = vadd.f32 %v1382, %v1938
  %v1956 = vadd.f32 %v1383, %v1941
  %v1957 = vadd.f32 %v1384, %v1944
  %v1958 = vadd.f32 %v1385, %v1947
  %v1959 = vadd.f32 %v1386, %v1950
  %v1960 = vmul.f32 %v1952, %v94
  %v1961 = vmul.f32 %v1953, %v95
  %v1962 = vmul.f32 %v1954, %v96
  %v1963 = vmul.f32 %v1955, %v97
  %v1964 = vmul.f32 %v1956, %v98
  %v1965 = vmul.f32 %v1957, %v99
  %v1966 = vmul.f32 %v1958, %v100
  %v1967 = vmul.f32 %v1959, %v101
  %vm1968 = vcmp.ge.s32.totalorder %v103, 16
  %vm1969 = vcmp.lt.s32.totalorder %v103, 32
  %vm1970 = vmand %vm1968, %vm1969
  %v1971 = vsel %vm1970, 1, 0
  %v1972 = vcvt.s32.f32 %v1971
  %v1973 = vmul.f32 %v1960, %v1972
  %v1974 = vmul.f32 %v1961, %v1972
  %v1975 = vmul.f32 %v1962, %v1972
  %v1976 = vmul.f32 %v1963, %v1972
  %v1977 = vmul.f32 %v1964, %v1972
  %v1978 = vmul.f32 %v1965, %v1972
  %v1979 = vmul.f32 %v1966, %v1972
  %v1980 = vmul.f32 %v1967, %v1972
  %v1981 = vrot.slane %v1973, 7
  %v1982 = vrot.slane %v1974, 7
  %v1983 = vrot.slane %v1975, 7
  %v1984 = vrot.slane %v1976, 7
  %v1985 = vrot.slane %v1977, 7
  %v1986 = vrot.slane %v1978, 7
  %v1987 = vrot.slane %v1979, 7
  %v1988 = vrot.slane %v1980, 7
  %v1989 = vsel %vm247, %v1987, %v1988
  %v1990 = vsel %vm247, %v1986, %v1987
  %v1991 = vsel %vm247, %v1985, %v1986
  %v1992 = vsel %vm247, %v1984, %v1985
  %v1993 = vsel %vm247, %v1983, %v1984
  %v1994 = vsel %vm247, %v1982, %v1983
  %v1995 = vsel %vm247, %v1981, %v1982
  %v1996 = vsel %vm247, %v1988, %v1981
  %v1997 = vmul.f32 %v1996, %v231
  %v1998 = vmul.f32 %v1995, %v232
  %v1999 = vmul.f32 %v1994, %v233
  %v2000 = vmul.f32 %v1993, %v234
  %v2001 = vmul.f32 %v1992, %v235
  %v2002 = vmul.f32 %v1991, %v236
  %v2003 = vmul.f32 %v1990, %v237
  %v2004 = vmul.f32 %v1989, %v238
  %v2005 = vrot.slane %v1973, 1
  %v2006 = vrot.slane %v1974, 1
  %v2007 = vrot.slane %v1975, 1
  %v2008 = vrot.slane %v1976, 1
  %v2009 = vrot.slane %v1977, 1
  %v2010 = vrot.slane %v1978, 1
  %v2011 = vrot.slane %v1979, 1
  %v2012 = vrot.slane %v1980, 1
  %v2013 = vsel %vm320, %v2011, %v2012
  %v2014 = vsel %vm320, %v2010, %v2011
  %v2015 = vsel %vm320, %v2009, %v2010
  %v2016 = vsel %vm320, %v2008, %v2009
  %v2017 = vsel %vm320, %v2007, %v2008
  %v2018 = vsel %vm320, %v2006, %v2007
  %v2019 = vsel %vm320, %v2005, %v2006
  %v2020 = vsel %vm320, %v2012, %v2005
  %v2021 = vmul.f32 %v2019, %v304
  %v2022 = vmul.f32 %v2018, %v305
  %v2023 = vmul.f32 %v2017, %v306
  %v2024 = vmul.f32 %v2016, %v307
  %v2025 = vmul.f32 %v2015, %v308
  %v2026 = vmul.f32 %v2014, %v309
  %v2027 = vmul.f32 %v2013, %v310
  %v2028 = vmul.f32 %v2020, %v311
  %2037 = vrot.lane.b32.xlu0 %v1973, 32
  %v2038 = vpop.permute.xlu0 %2037
  %2039 = vrot.lane.b32.xlu0 %v1974, 32
  %v2040 = vpop.permute.xlu0 %2039
  %2041 = vrot.lane.b32.xlu0 %v1975, 32
  %v2042 = vpop.permute.xlu0 %2041
  %2043 = vrot.lane.b32.xlu0 %v1976, 32
  %v2044 = vpop.permute.xlu0 %2043
  %2045 = vrot.lane.b32.xlu0 %v1977, 32
  %v2046 = vpop.permute.xlu0 %2045
  %2047 = vrot.lane.b32.xlu0 %v1978, 32
  %v2048 = vpop.permute.xlu0 %2047
  %2049 = vrot.lane.b32.xlu0 %v1979, 32
  %v2050 = vpop.permute.xlu0 %2049
  %2051 = vrot.lane.b32.xlu0 %v1980, 32
  %v2052 = vpop.permute.xlu0 %2051
  %2069 = vrot.lane.b32.xlu0 %v2021, 64
  %v2070 = vpop.permute.xlu0 %2069
  %2071 = vrot.lane.b32.xlu0 %v2022, 64
  %v2072 = vpop.permute.xlu0 %2071
  %2073 = vrot.lane.b32.xlu0 %v2023, 64
  %v2074 = vpop.permute.xlu0 %2073
  %2075 = vrot.lane.b32.xlu0 %v2024, 64
  %v2076 = vpop.permute.xlu0 %2075
  %2077 = vrot.lane.b32.xlu0 %v2025, 64
  %v2078 = vpop.permute.xlu0 %2077
  %2079 = vrot.lane.b32.xlu0 %v2026, 64
  %v2080 = vpop.permute.xlu0 %2079
  %2081 = vrot.lane.b32.xlu0 %v2027, 64
  %v2082 = vpop.permute.xlu0 %2081
  %2083 = vrot.lane.b32.xlu0 %v2028, 64
  %v2084 = vpop.permute.xlu0 %2083
  %v2093 = vsel %vm401, %v1997, %v2038
  %v2094 = vsel %vm401, %v1998, %v2040
  %v2095 = vsel %vm401, %v1999, %v2042
  %v2096 = vsel %vm401, %v2000, %v2044
  %v2097 = vsel %vm401, %v2001, %v2046
  %v2098 = vsel %vm401, %v2002, %v2048
  %v2099 = vsel %vm401, %v2003, %v2050
  %v2100 = vsel %vm401, %v2004, %v2052
  %v2101 = vsel %vm410, %v2093, %v2070
  %v2102 = vsel %vm410, %v2094, %v2072
  %v2103 = vsel %vm410, %v2095, %v2074
  %v2104 = vsel %vm410, %v2096, %v2076
  %v2105 = vsel %vm410, %v2097, %v2078
  %v2106 = vsel %vm410, %v2098, %v2080
  %v2107 = vsel %vm410, %v2099, %v2082
  %v2108 = vsel %vm410, %v2100, %v2084
  %s2109 = scalar_lea.vmem %s4, 288
  %v2110 = vld [vmem:[%s2109] sm:$0xff]
  %v2111 = vld [vmem:[%s2109 + $0x8] sm:$0xff]
  %v2112 = vld [vmem:[%s2109 + $0x10] sm:$0xff]
  %v2113 = vld [vmem:[%s2109 + $0x18] sm:$0xff]
  %v2114 = vld [vmem:[%s2109 + $0x20] sm:$0xff]
  %v2115 = vld [vmem:[%s2109 + $0x28] sm:$0xff]
  %v2116 = vld [vmem:[%s2109 + $0x30] sm:$0xff]
  %v2117 = vld [vmem:[%s2109 + $0x38] sm:$0xff]
  %v2118 = vld [vmem:[%s2109 + $0x40] sm:$0xff]
  %v2119 = vld [vmem:[%s2109 + $0x48] sm:$0xff]
  %v2120 = vld [vmem:[%s2109 + $0x50] sm:$0xff]
  %v2121 = vld [vmem:[%s2109 + $0x58] sm:$0xff]
  %s2122 = scalar_lea.vmem %s6, 3
  %v2123 = vld [vmem:[%s2122] sm:$0x1]
  %v2125 = vperm.slane %v2123, 0
  %v2128 = vsel %vm435, %v2101, 0
  %v2131 = vsel %vm435, %v2102, 0
  %v2134 = vsel %vm435, %v2103, 0
  %v2137 = vsel %vm435, %v2104, 0
  %v2140 = vsel %vm435, %v2105, 0
  %v2143 = vsel %vm435, %v2106, 0
  %v2146 = vsel %vm435, %v2107, 0
  %v2149 = vsel %vm435, %v2108, 0
  %2151 = vmatpush.msra.mxu0 0.0
  %2152 = vmatpush.msra.mxu0 0.0
  %2153 = vmatpush.msra.mxu0 0.0
  %2154 = vmatpush.msra.mxu0 0.0
  %2155 = vmatpush.msra.mxu0 %v2121
  %2156 = vmatpush.msra.mxu0 %v2120
  %2157 = vmatpush.msra.mxu0 %v2119
  %2158 = vmatpush.msra.mxu0 %v2118
  %2159 = vmatpush.msra.mxu0 %v2117
  %2160 = vmatpush.msra.mxu0 %v2116
  %2161 = vmatpush.msra.mxu0 %v2115
  %2162 = vmatpush.msra.mxu0 %v2114
  %2163 = vmatpush.msra.mxu0 %v2113
  %2164 = vmatpush.msra.mxu0 %v2112
  %2165 = vmatpush.msra.mxu0 %v2111
  %2166 = vmatpush.msra.mxu0 %v2110
  %2167 = vmatmul.f32.gmra.mxu0 %v2128
  %v2168 = vpop.f32.mrf.mxu0
  %v2169 = vadd.f32 %v2125, %v2168
  %2170 = vmatmul.f32.gmra.mxu0 %v2131
  %v2171 = vpop.f32.mrf.mxu0
  %v2172 = vadd.f32 %v2125, %v2171
  %2173 = vmatmul.f32.gmra.mxu0 %v2134
  %v2174 = vpop.f32.mrf.mxu0
  %v2175 = vadd.f32 %v2125, %v2174
  %2176 = vmatmul.f32.gmra.mxu0 %v2137
  %v2177 = vpop.f32.mrf.mxu0
  %v2178 = vadd.f32 %v2125, %v2177
  %2179 = vmatmul.f32.gmra.mxu0 %v2140
  %v2180 = vpop.f32.mrf.mxu0
  %v2181 = vadd.f32 %v2125, %v2180
  %2182 = vmatmul.f32.gmra.mxu0 %v2143
  %v2183 = vpop.f32.mrf.mxu0
  %v2184 = vadd.f32 %v2125, %v2183
  %2185 = vmatmul.f32.gmra.mxu0 %v2146
  %v2186 = vpop.f32.mrf.mxu0
  %v2187 = vadd.f32 %v2125, %v2186
  %2188 = vmatmul.f32.gmra.mxu0 %v2149
  %v2189 = vpop.f32.mrf.mxu0
  %v2190 = vadd.f32 %v2125, %v2189
  %2191 = vdwg.mxu0
  %v2192 = vtanh.pop %v2169
  %v2193 = vtanh.pop %v2172
  %v2194 = vtanh.pop %v2175
  %v2195 = vtanh.pop %v2178
  %v2196 = vtanh.pop %v2181
  %v2197 = vtanh.pop %v2184
  %v2198 = vtanh.pop %v2187
  %v2199 = vtanh.pop %v2190
  %v2200 = vxor.u32 %v2169, 2147483648
  %v2201 = vxor.u32 %v2172, 2147483648
  %v2202 = vxor.u32 %v2175, 2147483648
  %v2203 = vxor.u32 %v2178, 2147483648
  %v2204 = vxor.u32 %v2181, 2147483648
  %v2205 = vxor.u32 %v2184, 2147483648
  %v2206 = vxor.u32 %v2187, 2147483648
  %v2207 = vxor.u32 %v2190, 2147483648
  %v2208 = vmul.f32 %v2200, 1.442695
  %v2209 = vpow.pop %v2208
  %v2210 = vmul.f32 %v2201, 1.442695
  %v2211 = vpow.pop %v2210
  %v2212 = vmul.f32 %v2202, 1.442695
  %v2213 = vpow.pop %v2212
  %v2214 = vmul.f32 %v2203, 1.442695
  %v2215 = vpow.pop %v2214
  %v2216 = vmul.f32 %v2204, 1.442695
  %v2217 = vpow.pop %v2216
  %v2218 = vmul.f32 %v2205, 1.442695
  %v2219 = vpow.pop %v2218
  %v2220 = vmul.f32 %v2206, 1.442695
  %v2221 = vpow.pop %v2220
  %v2222 = vmul.f32 %v2207, 1.442695
  %v2223 = vpow.pop %v2222
  %v2224 = vadd.f32 %v2209, 1.0
  %v2225 = vadd.f32 %v2211, 1.0
  %v2226 = vadd.f32 %v2213, 1.0
  %v2227 = vadd.f32 %v2215, 1.0
  %v2228 = vadd.f32 %v2217, 1.0
  %v2229 = vadd.f32 %v2219, 1.0
  %v2230 = vadd.f32 %v2221, 1.0
  %v2231 = vadd.f32 %v2223, 1.0
  %v2232 = vrcp.pop %v2224
  %v2233 = vmul.f32 %v2224, %v2232
  %v2234 = vsub.f32 1.0, %v2233
  %v2235 = vmul.f32 %v2232, %v2234
  %v2236 = vadd.f32 %v2232, %v2235
  %vm2237 = vweird.f32 %v2224
  %vm2238 = vweird.f32 %v2232
  %vm2239 = vmor %vm2237, %vm2238
  %v2240 = vsel %vm2239, %v2232, %v2236
  %v2241 = vand.u32 2147483647, %v2224
  %vm2242 = vcmp.eq.f32.partialorder %v2241, 8.507059e+37
  %v2243 = vand.u32 %v2224, 2147483648
  %v2244 = vor.u32 1.1754944e-38, %v2243
  %v2245 = vsel %vm2242, %v2244, %v2240
  %v2246 = vmul.f32 1.0, %v2245
  %v2247 = vrcp.pop %v2225
  %v2248 = vmul.f32 %v2225, %v2247
  %v2249 = vsub.f32 1.0, %v2248
  %v2250 = vmul.f32 %v2247, %v2249
  %v2251 = vadd.f32 %v2247, %v2250
  %vm2252 = vweird.f32 %v2225
  %vm2253 = vweird.f32 %v2247
  %vm2254 = vmor %vm2252, %vm2253
  %v2255 = vsel %vm2254, %v2247, %v2251
  %v2256 = vand.u32 2147483647, %v2225
  %vm2257 = vcmp.eq.f32.partialorder %v2256, 8.507059e+37
  %v2258 = vand.u32 %v2225, 2147483648
  %v2259 = vor.u32 1.1754944e-38, %v2258
  %v2260 = vsel %vm2257, %v2259, %v2255
  %v2261 = vmul.f32 1.0, %v2260
  %v2262 = vrcp.pop %v2226
  %v2263 = vmul.f32 %v2226, %v2262
  %v2264 = vsub.f32 1.0, %v2263
  %v2265 = vmul.f32 %v2262, %v2264
  %v2266 = vadd.f32 %v2262, %v2265
  %vm2267 = vweird.f32 %v2226
  %vm2268 = vweird.f32 %v2262
  %vm2269 = vmor %vm2267, %vm2268
  %v2270 = vsel %vm2269, %v2262, %v2266
  %v2271 = vand.u32 2147483647, %v2226
  %vm2272 = vcmp.eq.f32.partialorder %v2271, 8.507059e+37
  %v2273 = vand.u32 %v2226, 2147483648
  %v2274 = vor.u32 1.1754944e-38, %v2273
  %v2275 = vsel %vm2272, %v2274, %v2270
  %v2276 = vmul.f32 1.0, %v2275
  %v2277 = vrcp.pop %v2227
  %v2278 = vmul.f32 %v2227, %v2277
  %v2279 = vsub.f32 1.0, %v2278
  %v2280 = vmul.f32 %v2277, %v2279
  %v2281 = vadd.f32 %v2277, %v2280
  %vm2282 = vweird.f32 %v2227
  %vm2283 = vweird.f32 %v2277
  %vm2284 = vmor %vm2282, %vm2283
  %v2285 = vsel %vm2284, %v2277, %v2281
  %v2286 = vand.u32 2147483647, %v2227
  %vm2287 = vcmp.eq.f32.partialorder %v2286, 8.507059e+37
  %v2288 = vand.u32 %v2227, 2147483648
  %v2289 = vor.u32 1.1754944e-38, %v2288
  %v2290 = vsel %vm2287, %v2289, %v2285
  %v2291 = vmul.f32 1.0, %v2290
  %v2292 = vrcp.pop %v2228
  %v2293 = vmul.f32 %v2228, %v2292
  %v2294 = vsub.f32 1.0, %v2293
  %v2295 = vmul.f32 %v2292, %v2294
  %v2296 = vadd.f32 %v2292, %v2295
  %vm2297 = vweird.f32 %v2228
  %vm2298 = vweird.f32 %v2292
  %vm2299 = vmor %vm2297, %vm2298
  %v2300 = vsel %vm2299, %v2292, %v2296
  %v2301 = vand.u32 2147483647, %v2228
  %vm2302 = vcmp.eq.f32.partialorder %v2301, 8.507059e+37
  %v2303 = vand.u32 %v2228, 2147483648
  %v2304 = vor.u32 1.1754944e-38, %v2303
  %v2305 = vsel %vm2302, %v2304, %v2300
  %v2306 = vmul.f32 1.0, %v2305
  %v2307 = vrcp.pop %v2229
  %v2308 = vmul.f32 %v2229, %v2307
  %v2309 = vsub.f32 1.0, %v2308
  %v2310 = vmul.f32 %v2307, %v2309
  %v2311 = vadd.f32 %v2307, %v2310
  %vm2312 = vweird.f32 %v2229
  %vm2313 = vweird.f32 %v2307
  %vm2314 = vmor %vm2312, %vm2313
  %v2315 = vsel %vm2314, %v2307, %v2311
  %v2316 = vand.u32 2147483647, %v2229
  %vm2317 = vcmp.eq.f32.partialorder %v2316, 8.507059e+37
  %v2318 = vand.u32 %v2229, 2147483648
  %v2319 = vor.u32 1.1754944e-38, %v2318
  %v2320 = vsel %vm2317, %v2319, %v2315
  %v2321 = vmul.f32 1.0, %v2320
  %v2322 = vrcp.pop %v2230
  %v2323 = vmul.f32 %v2230, %v2322
  %v2324 = vsub.f32 1.0, %v2323
  %v2325 = vmul.f32 %v2322, %v2324
  %v2326 = vadd.f32 %v2322, %v2325
  %vm2327 = vweird.f32 %v2230
  %vm2328 = vweird.f32 %v2322
  %vm2329 = vmor %vm2327, %vm2328
  %v2330 = vsel %vm2329, %v2322, %v2326
  %v2331 = vand.u32 2147483647, %v2230
  %vm2332 = vcmp.eq.f32.partialorder %v2331, 8.507059e+37
  %v2333 = vand.u32 %v2230, 2147483648
  %v2334 = vor.u32 1.1754944e-38, %v2333
  %v2335 = vsel %vm2332, %v2334, %v2330
  %v2336 = vmul.f32 1.0, %v2335
  %v2337 = vrcp.pop %v2231
  %v2338 = vmul.f32 %v2231, %v2337
  %v2339 = vsub.f32 1.0, %v2338
  %v2340 = vmul.f32 %v2337, %v2339
  %v2341 = vadd.f32 %v2337, %v2340
  %vm2342 = vweird.f32 %v2231
  %vm2343 = vweird.f32 %v2337
  %vm2344 = vmor %vm2342, %vm2343
  %v2345 = vsel %vm2344, %v2337, %v2341
  %v2346 = vand.u32 2147483647, %v2231
  %vm2347 = vcmp.eq.f32.partialorder %v2346, 8.507059e+37
  %v2348 = vand.u32 %v2231, 2147483648
  %v2349 = vor.u32 1.1754944e-38, %v2348
  %v2350 = vsel %vm2347, %v2349, %v2345
  %v2351 = vmul.f32 1.0, %v2350
  %2360 = vrot.lane.b32.xlu0 %v2246, 112
  %v2361 = vpop.permute.xlu0 %2360
  %2362 = vrot.lane.b32.xlu0 %v2261, 112
  %v2363 = vpop.permute.xlu0 %2362
  %2364 = vrot.lane.b32.xlu0 %v2276, 112
  %v2365 = vpop.permute.xlu0 %2364
  %2366 = vrot.lane.b32.xlu0 %v2291, 112
  %v2367 = vpop.permute.xlu0 %2366
  %2368 = vrot.lane.b32.xlu0 %v2306, 112
  %v2369 = vpop.permute.xlu0 %2368
  %2370 = vrot.lane.b32.xlu0 %v2321, 112
  %v2371 = vpop.permute.xlu0 %2370
  %2372 = vrot.lane.b32.xlu0 %v2336, 112
  %v2373 = vpop.permute.xlu0 %2372
  %2374 = vrot.lane.b32.xlu0 %v2351, 112
  %v2375 = vpop.permute.xlu0 %2374
  %v2384 = vmul.f32 %v2192, %v2361
  %v2385 = vmul.f32 %v2193, %v2363
  %v2386 = vmul.f32 %v2194, %v2365
  %v2387 = vmul.f32 %v2195, %v2367
  %v2388 = vmul.f32 %v2196, %v2369
  %v2389 = vmul.f32 %v2197, %v2371
  %v2390 = vmul.f32 %v2198, %v2373
  %v2391 = vmul.f32 %v2199, %v2375
  %s2392 = scalar_lea.vmem %s5, 48
  %v2393 = vld [vmem:[%s2392] sm:$0xff]
  %v2394 = vld [vmem:[%s2392 + $0x8] sm:$0xff]
  %s2395 = scalar_lea.vmem %s7, 3
  %v2396 = vld [vmem:[%s2395] sm:$0x1]
  %v2398 = vperm.slane %v2396, 0
  %v2401 = vsel %vm707, %v2384, 0
  %v2404 = vsel %vm707, %v2385, 0
  %v2407 = vsel %vm707, %v2386, 0
  %v2410 = vsel %vm707, %v2387, 0
  %v2413 = vsel %vm707, %v2388, 0
  %v2416 = vsel %vm707, %v2389, 0
  %v2419 = vsel %vm707, %v2390, 0
  %v2422 = vsel %vm707, %v2391, 0
  %2424 = vmatpush.msra.mxu0 0.0
  %2425 = vmatpush.msra.mxu0 0.0
  %2426 = vmatpush.msra.mxu0 0.0
  %2427 = vmatpush.msra.mxu0 0.0
  %2428 = vmatpush.msra.mxu0 0.0
  %2429 = vmatpush.msra.mxu0 0.0
  %2430 = vmatpush.msra.mxu0 0.0
  %2431 = vmatpush.msra.mxu0 0.0
  %2432 = vmatpush.msra.mxu0 0.0
  %2433 = vmatpush.msra.mxu0 0.0
  %2434 = vmatpush.msra.mxu0 0.0
  %2435 = vmatpush.msra.mxu0 0.0
  %2436 = vmatpush.msra.mxu0 0.0
  %2437 = vmatpush.msra.mxu0 0.0
  %2438 = vmatpush.msra.mxu0 %v2394
  %2439 = vmatpush.msra.mxu0 %v2393
  %2440 = vmatmul.f32.gmra.mxu0 %v2401
  %v2441 = vpop.f32.mrf.mxu0
  %v2442 = vadd.f32 %v2398, %v2441
  %2443 = vmatmul.f32.gmra.mxu0 %v2404
  %v2444 = vpop.f32.mrf.mxu0
  %v2445 = vadd.f32 %v2398, %v2444
  %2446 = vmatmul.f32.gmra.mxu0 %v2407
  %v2447 = vpop.f32.mrf.mxu0
  %v2448 = vadd.f32 %v2398, %v2447
  %2449 = vmatmul.f32.gmra.mxu0 %v2410
  %v2450 = vpop.f32.mrf.mxu0
  %v2451 = vadd.f32 %v2398, %v2450
  %2452 = vmatmul.f32.gmra.mxu0 %v2413
  %v2453 = vpop.f32.mrf.mxu0
  %v2454 = vadd.f32 %v2398, %v2453
  %2455 = vmatmul.f32.gmra.mxu0 %v2416
  %v2456 = vpop.f32.mrf.mxu0
  %v2457 = vadd.f32 %v2398, %v2456
  %2458 = vmatmul.f32.gmra.mxu0 %v2419
  %v2459 = vpop.f32.mrf.mxu0
  %v2460 = vadd.f32 %v2398, %v2459
  %2461 = vmatmul.f32.gmra.mxu0 %v2422
  %v2462 = vpop.f32.mrf.mxu0
  %v2463 = vadd.f32 %v2398, %v2462
  %2464 = vdwg.mxu0
  %v2465 = vadd.f32 %v1973, %v2442
  %v2466 = vadd.f32 %v1974, %v2445
  %v2467 = vadd.f32 %v1975, %v2448
  %v2468 = vadd.f32 %v1976, %v2451
  %v2469 = vadd.f32 %v1977, %v2454
  %v2470 = vadd.f32 %v1978, %v2457
  %v2471 = vadd.f32 %v1979, %v2460
  %v2472 = vadd.f32 %v1980, %v2463
  %v2473 = vmul.f32 %v2465, %v94
  %v2474 = vmul.f32 %v2466, %v95
  %v2475 = vmul.f32 %v2467, %v96
  %v2476 = vmul.f32 %v2468, %v97
  %v2477 = vmul.f32 %v2469, %v98
  %v2478 = vmul.f32 %v2470, %v99
  %v2479 = vmul.f32 %v2471, %v100
  %v2480 = vmul.f32 %v2472, %v101
  %v2481 = vrot.slane %v2473, 6
  %v2482 = vrot.slane %v2474, 6
  %v2483 = vrot.slane %v2475, 6
  %v2484 = vrot.slane %v2476, 6
  %v2485 = vrot.slane %v2477, 6
  %v2486 = vrot.slane %v2478, 6
  %v2487 = vrot.slane %v2479, 6
  %v2488 = vrot.slane %v2480, 6
  %v2489 = vsel %vm845, %v2487, %v2488
  %v2490 = vsel %vm845, %v2486, %v2487
  %v2491 = vsel %vm845, %v2485, %v2486
  %v2492 = vsel %vm845, %v2484, %v2485
  %v2493 = vsel %vm845, %v2483, %v2484
  %v2494 = vsel %vm845, %v2482, %v2483
  %v2495 = vsel %vm845, %v2481, %v2482
  %v2496 = vsel %vm845, %v2488, %v2481
  %v2497 = vmul.f32 %v2496, %v829
  %v2498 = vmul.f32 %v2495, %v830
  %v2499 = vmul.f32 %v2494, %v831
  %v2500 = vmul.f32 %v2493, %v832
  %v2501 = vmul.f32 %v2492, %v833
  %v2502 = vmul.f32 %v2491, %v834
  %v2503 = vmul.f32 %v2490, %v835
  %v2504 = vmul.f32 %v2489, %v836
  %v2505 = vrot.slane %v2473, 2
  %v2506 = vrot.slane %v2474, 2
  %v2507 = vrot.slane %v2475, 2
  %v2508 = vrot.slane %v2476, 2
  %v2509 = vrot.slane %v2477, 2
  %v2510 = vrot.slane %v2478, 2
  %v2511 = vrot.slane %v2479, 2
  %v2512 = vrot.slane %v2480, 2
  %v2513 = vsel %vm918, %v2511, %v2512
  %v2514 = vsel %vm918, %v2510, %v2511
  %v2515 = vsel %vm918, %v2509, %v2510
  %v2516 = vsel %vm918, %v2508, %v2509
  %v2517 = vsel %vm918, %v2507, %v2508
  %v2518 = vsel %vm918, %v2506, %v2507
  %v2519 = vsel %vm918, %v2505, %v2506
  %v2520 = vsel %vm918, %v2512, %v2505
  %v2521 = vmul.f32 %v2519, %v902
  %v2522 = vmul.f32 %v2518, %v903
  %v2523 = vmul.f32 %v2517, %v904
  %v2524 = vmul.f32 %v2516, %v905
  %v2525 = vmul.f32 %v2515, %v906
  %v2526 = vmul.f32 %v2514, %v907
  %v2527 = vmul.f32 %v2513, %v908
  %v2528 = vmul.f32 %v2520, %v909
  %2537 = vrot.lane.b32.xlu0 %v2473, 32
  %v2538 = vpop.permute.xlu0 %2537
  %2539 = vrot.lane.b32.xlu0 %v2474, 32
  %v2540 = vpop.permute.xlu0 %2539
  %2541 = vrot.lane.b32.xlu0 %v2475, 32
  %v2542 = vpop.permute.xlu0 %2541
  %2543 = vrot.lane.b32.xlu0 %v2476, 32
  %v2544 = vpop.permute.xlu0 %2543
  %2545 = vrot.lane.b32.xlu0 %v2477, 32
  %v2546 = vpop.permute.xlu0 %2545
  %2547 = vrot.lane.b32.xlu0 %v2478, 32
  %v2548 = vpop.permute.xlu0 %2547
  %2549 = vrot.lane.b32.xlu0 %v2479, 32
  %v2550 = vpop.permute.xlu0 %2549
  %2551 = vrot.lane.b32.xlu0 %v2480, 32
  %v2552 = vpop.permute.xlu0 %2551
  %2569 = vrot.lane.b32.xlu0 %v2521, 64
  %v2570 = vpop.permute.xlu0 %2569
  %2571 = vrot.lane.b32.xlu0 %v2522, 64
  %v2572 = vpop.permute.xlu0 %2571
  %2573 = vrot.lane.b32.xlu0 %v2523, 64
  %v2574 = vpop.permute.xlu0 %2573
  %2575 = vrot.lane.b32.xlu0 %v2524, 64
  %v2576 = vpop.permute.xlu0 %2575
  %2577 = vrot.lane.b32.xlu0 %v2525, 64
  %v2578 = vpop.permute.xlu0 %2577
  %2579 = vrot.lane.b32.xlu0 %v2526, 64
  %v2580 = vpop.permute.xlu0 %2579
  %2581 = vrot.lane.b32.xlu0 %v2527, 64
  %v2582 = vpop.permute.xlu0 %2581
  %2583 = vrot.lane.b32.xlu0 %v2528, 64
  %v2584 = vpop.permute.xlu0 %2583
  %v2593 = vsel %vm401, %v2497, %v2538
  %v2594 = vsel %vm401, %v2498, %v2540
  %v2595 = vsel %vm401, %v2499, %v2542
  %v2596 = vsel %vm401, %v2500, %v2544
  %v2597 = vsel %vm401, %v2501, %v2546
  %v2598 = vsel %vm401, %v2502, %v2548
  %v2599 = vsel %vm401, %v2503, %v2550
  %v2600 = vsel %vm401, %v2504, %v2552
  %v2601 = vsel %vm410, %v2593, %v2570
  %v2602 = vsel %vm410, %v2594, %v2572
  %v2603 = vsel %vm410, %v2595, %v2574
  %v2604 = vsel %vm410, %v2596, %v2576
  %v2605 = vsel %vm410, %v2597, %v2578
  %v2606 = vsel %vm410, %v2598, %v2580
  %v2607 = vsel %vm410, %v2599, %v2582
  %v2608 = vsel %vm410, %v2600, %v2584
  %s2609 = scalar_lea.vmem %s4, 384
  %v2610 = vld [vmem:[%s2609] sm:$0xff]
  %v2611 = vld [vmem:[%s2609 + $0x8] sm:$0xff]
  %v2612 = vld [vmem:[%s2609 + $0x10] sm:$0xff]
  %v2613 = vld [vmem:[%s2609 + $0x18] sm:$0xff]
  %v2614 = vld [vmem:[%s2609 + $0x20] sm:$0xff]
  %v2615 = vld [vmem:[%s2609 + $0x28] sm:$0xff]
  %v2616 = vld [vmem:[%s2609 + $0x30] sm:$0xff]
  %v2617 = vld [vmem:[%s2609 + $0x38] sm:$0xff]
  %v2618 = vld [vmem:[%s2609 + $0x40] sm:$0xff]
  %v2619 = vld [vmem:[%s2609 + $0x48] sm:$0xff]
  %v2620 = vld [vmem:[%s2609 + $0x50] sm:$0xff]
  %v2621 = vld [vmem:[%s2609 + $0x58] sm:$0xff]
  %s2622 = scalar_lea.vmem %s6, 4
  %v2623 = vld [vmem:[%s2622] sm:$0x1]
  %v2625 = vperm.slane %v2623, 0
  %v2628 = vsel %vm435, %v2601, 0
  %v2631 = vsel %vm435, %v2602, 0
  %v2634 = vsel %vm435, %v2603, 0
  %v2637 = vsel %vm435, %v2604, 0
  %v2640 = vsel %vm435, %v2605, 0
  %v2643 = vsel %vm435, %v2606, 0
  %v2646 = vsel %vm435, %v2607, 0
  %v2649 = vsel %vm435, %v2608, 0
  %2651 = vmatpush.msra.mxu0 0.0
  %2652 = vmatpush.msra.mxu0 0.0
  %2653 = vmatpush.msra.mxu0 0.0
  %2654 = vmatpush.msra.mxu0 0.0
  %2655 = vmatpush.msra.mxu0 %v2621
  %2656 = vmatpush.msra.mxu0 %v2620
  %2657 = vmatpush.msra.mxu0 %v2619
  %2658 = vmatpush.msra.mxu0 %v2618
  %2659 = vmatpush.msra.mxu0 %v2617
  %2660 = vmatpush.msra.mxu0 %v2616
  %2661 = vmatpush.msra.mxu0 %v2615
  %2662 = vmatpush.msra.mxu0 %v2614
  %2663 = vmatpush.msra.mxu0 %v2613
  %2664 = vmatpush.msra.mxu0 %v2612
  %2665 = vmatpush.msra.mxu0 %v2611
  %2666 = vmatpush.msra.mxu0 %v2610
  %2667 = vmatmul.f32.gmra.mxu0 %v2628
  %v2668 = vpop.f32.mrf.mxu0
  %v2669 = vadd.f32 %v2625, %v2668
  %2670 = vmatmul.f32.gmra.mxu0 %v2631
  %v2671 = vpop.f32.mrf.mxu0
  %v2672 = vadd.f32 %v2625, %v2671
  %2673 = vmatmul.f32.gmra.mxu0 %v2634
  %v2674 = vpop.f32.mrf.mxu0
  %v2675 = vadd.f32 %v2625, %v2674
  %2676 = vmatmul.f32.gmra.mxu0 %v2637
  %v2677 = vpop.f32.mrf.mxu0
  %v2678 = vadd.f32 %v2625, %v2677
  %2679 = vmatmul.f32.gmra.mxu0 %v2640
  %v2680 = vpop.f32.mrf.mxu0
  %v2681 = vadd.f32 %v2625, %v2680
  %2682 = vmatmul.f32.gmra.mxu0 %v2643
  %v2683 = vpop.f32.mrf.mxu0
  %v2684 = vadd.f32 %v2625, %v2683
  %2685 = vmatmul.f32.gmra.mxu0 %v2646
  %v2686 = vpop.f32.mrf.mxu0
  %v2687 = vadd.f32 %v2625, %v2686
  %2688 = vmatmul.f32.gmra.mxu0 %v2649
  %v2689 = vpop.f32.mrf.mxu0
  %v2690 = vadd.f32 %v2625, %v2689
  %2691 = vdwg.mxu0
  %v2692 = vtanh.pop %v2669
  %v2693 = vtanh.pop %v2672
  %v2694 = vtanh.pop %v2675
  %v2695 = vtanh.pop %v2678
  %v2696 = vtanh.pop %v2681
  %v2697 = vtanh.pop %v2684
  %v2698 = vtanh.pop %v2687
  %v2699 = vtanh.pop %v2690
  %v2700 = vxor.u32 %v2669, 2147483648
  %v2701 = vxor.u32 %v2672, 2147483648
  %v2702 = vxor.u32 %v2675, 2147483648
  %v2703 = vxor.u32 %v2678, 2147483648
  %v2704 = vxor.u32 %v2681, 2147483648
  %v2705 = vxor.u32 %v2684, 2147483648
  %v2706 = vxor.u32 %v2687, 2147483648
  %v2707 = vxor.u32 %v2690, 2147483648
  %v2708 = vmul.f32 %v2700, 1.442695
  %v2709 = vpow.pop %v2708
  %v2710 = vmul.f32 %v2701, 1.442695
  %v2711 = vpow.pop %v2710
  %v2712 = vmul.f32 %v2702, 1.442695
  %v2713 = vpow.pop %v2712
  %v2714 = vmul.f32 %v2703, 1.442695
  %v2715 = vpow.pop %v2714
  %v2716 = vmul.f32 %v2704, 1.442695
  %v2717 = vpow.pop %v2716
  %v2718 = vmul.f32 %v2705, 1.442695
  %v2719 = vpow.pop %v2718
  %v2720 = vmul.f32 %v2706, 1.442695
  %v2721 = vpow.pop %v2720
  %v2722 = vmul.f32 %v2707, 1.442695
  %v2723 = vpow.pop %v2722
  %v2724 = vadd.f32 %v2709, 1.0
  %v2725 = vadd.f32 %v2711, 1.0
  %v2726 = vadd.f32 %v2713, 1.0
  %v2727 = vadd.f32 %v2715, 1.0
  %v2728 = vadd.f32 %v2717, 1.0
  %v2729 = vadd.f32 %v2719, 1.0
  %v2730 = vadd.f32 %v2721, 1.0
  %v2731 = vadd.f32 %v2723, 1.0
  %v2732 = vrcp.pop %v2724
  %v2733 = vmul.f32 %v2724, %v2732
  %v2734 = vsub.f32 1.0, %v2733
  %v2735 = vmul.f32 %v2732, %v2734
  %v2736 = vadd.f32 %v2732, %v2735
  %vm2737 = vweird.f32 %v2724
  %vm2738 = vweird.f32 %v2732
  %vm2739 = vmor %vm2737, %vm2738
  %v2740 = vsel %vm2739, %v2732, %v2736
  %v2741 = vand.u32 2147483647, %v2724
  %vm2742 = vcmp.eq.f32.partialorder %v2741, 8.507059e+37
  %v2743 = vand.u32 %v2724, 2147483648
  %v2744 = vor.u32 1.1754944e-38, %v2743
  %v2745 = vsel %vm2742, %v2744, %v2740
  %v2746 = vmul.f32 1.0, %v2745
  %v2747 = vrcp.pop %v2725
  %v2748 = vmul.f32 %v2725, %v2747
  %v2749 = vsub.f32 1.0, %v2748
  %v2750 = vmul.f32 %v2747, %v2749
  %v2751 = vadd.f32 %v2747, %v2750
  %vm2752 = vweird.f32 %v2725
  %vm2753 = vweird.f32 %v2747
  %vm2754 = vmor %vm2752, %vm2753
  %v2755 = vsel %vm2754, %v2747, %v2751
  %v2756 = vand.u32 2147483647, %v2725
  %vm2757 = vcmp.eq.f32.partialorder %v2756, 8.507059e+37
  %v2758 = vand.u32 %v2725, 2147483648
  %v2759 = vor.u32 1.1754944e-38, %v2758
  %v2760 = vsel %vm2757, %v2759, %v2755
  %v2761 = vmul.f32 1.0, %v2760
  %v2762 = vrcp.pop %v2726
  %v2763 = vmul.f32 %v2726, %v2762
  %v2764 = vsub.f32 1.0, %v2763
  %v2765 = vmul.f32 %v2762, %v2764
  %v2766 = vadd.f32 %v2762, %v2765
  %vm2767 = vweird.f32 %v2726
  %vm2768 = vweird.f32 %v2762
  %vm2769 = vmor %vm2767, %vm2768
  %v2770 = vsel %vm2769, %v2762, %v2766
  %v2771 = vand.u32 2147483647, %v2726
  %vm2772 = vcmp.eq.f32.partialorder %v2771, 8.507059e+37
  %v2773 = vand.u32 %v2726, 2147483648
  %v2774 = vor.u32 1.1754944e-38, %v2773
  %v2775 = vsel %vm2772, %v2774, %v2770
  %v2776 = vmul.f32 1.0, %v2775
  %v2777 = vrcp.pop %v2727
  %v2778 = vmul.f32 %v2727, %v2777
  %v2779 = vsub.f32 1.0, %v2778
  %v2780 = vmul.f32 %v2777, %v2779
  %v2781 = vadd.f32 %v2777, %v2780
  %vm2782 = vweird.f32 %v2727
  %vm2783 = vweird.f32 %v2777
  %vm2784 = vmor %vm2782, %vm2783
  %v2785 = vsel %vm2784, %v2777, %v2781
  %v2786 = vand.u32 2147483647, %v2727
  %vm2787 = vcmp.eq.f32.partialorder %v2786, 8.507059e+37
  %v2788 = vand.u32 %v2727, 2147483648
  %v2789 = vor.u32 1.1754944e-38, %v2788
  %v2790 = vsel %vm2787, %v2789, %v2785
  %v2791 = vmul.f32 1.0, %v2790
  %v2792 = vrcp.pop %v2728
  %v2793 = vmul.f32 %v2728, %v2792
  %v2794 = vsub.f32 1.0, %v2793
  %v2795 = vmul.f32 %v2792, %v2794
  %v2796 = vadd.f32 %v2792, %v2795
  %vm2797 = vweird.f32 %v2728
  %vm2798 = vweird.f32 %v2792
  %vm2799 = vmor %vm2797, %vm2798
  %v2800 = vsel %vm2799, %v2792, %v2796
  %v2801 = vand.u32 2147483647, %v2728
  %vm2802 = vcmp.eq.f32.partialorder %v2801, 8.507059e+37
  %v2803 = vand.u32 %v2728, 2147483648
  %v2804 = vor.u32 1.1754944e-38, %v2803
  %v2805 = vsel %vm2802, %v2804, %v2800
  %v2806 = vmul.f32 1.0, %v2805
  %v2807 = vrcp.pop %v2729
  %v2808 = vmul.f32 %v2729, %v2807
  %v2809 = vsub.f32 1.0, %v2808
  %v2810 = vmul.f32 %v2807, %v2809
  %v2811 = vadd.f32 %v2807, %v2810
  %vm2812 = vweird.f32 %v2729
  %vm2813 = vweird.f32 %v2807
  %vm2814 = vmor %vm2812, %vm2813
  %v2815 = vsel %vm2814, %v2807, %v2811
  %v2816 = vand.u32 2147483647, %v2729
  %vm2817 = vcmp.eq.f32.partialorder %v2816, 8.507059e+37
  %v2818 = vand.u32 %v2729, 2147483648
  %v2819 = vor.u32 1.1754944e-38, %v2818
  %v2820 = vsel %vm2817, %v2819, %v2815
  %v2821 = vmul.f32 1.0, %v2820
  %v2822 = vrcp.pop %v2730
  %v2823 = vmul.f32 %v2730, %v2822
  %v2824 = vsub.f32 1.0, %v2823
  %v2825 = vmul.f32 %v2822, %v2824
  %v2826 = vadd.f32 %v2822, %v2825
  %vm2827 = vweird.f32 %v2730
  %vm2828 = vweird.f32 %v2822
  %vm2829 = vmor %vm2827, %vm2828
  %v2830 = vsel %vm2829, %v2822, %v2826
  %v2831 = vand.u32 2147483647, %v2730
  %vm2832 = vcmp.eq.f32.partialorder %v2831, 8.507059e+37
  %v2833 = vand.u32 %v2730, 2147483648
  %v2834 = vor.u32 1.1754944e-38, %v2833
  %v2835 = vsel %vm2832, %v2834, %v2830
  %v2836 = vmul.f32 1.0, %v2835
  %v2837 = vrcp.pop %v2731
  %v2838 = vmul.f32 %v2731, %v2837
  %v2839 = vsub.f32 1.0, %v2838
  %v2840 = vmul.f32 %v2837, %v2839
  %v2841 = vadd.f32 %v2837, %v2840
  %vm2842 = vweird.f32 %v2731
  %vm2843 = vweird.f32 %v2837
  %vm2844 = vmor %vm2842, %vm2843
  %v2845 = vsel %vm2844, %v2837, %v2841
  %v2846 = vand.u32 2147483647, %v2731
  %vm2847 = vcmp.eq.f32.partialorder %v2846, 8.507059e+37
  %v2848 = vand.u32 %v2731, 2147483648
  %v2849 = vor.u32 1.1754944e-38, %v2848
  %v2850 = vsel %vm2847, %v2849, %v2845
  %v2851 = vmul.f32 1.0, %v2850
  %2860 = vrot.lane.b32.xlu0 %v2746, 112
  %v2861 = vpop.permute.xlu0 %2860
  %2862 = vrot.lane.b32.xlu0 %v2761, 112
  %v2863 = vpop.permute.xlu0 %2862
  %2864 = vrot.lane.b32.xlu0 %v2776, 112
  %v2865 = vpop.permute.xlu0 %2864
  %2866 = vrot.lane.b32.xlu0 %v2791, 112
  %v2867 = vpop.permute.xlu0 %2866
  %2868 = vrot.lane.b32.xlu0 %v2806, 112
  %v2869 = vpop.permute.xlu0 %2868
  %2870 = vrot.lane.b32.xlu0 %v2821, 112
  %v2871 = vpop.permute.xlu0 %2870
  %2872 = vrot.lane.b32.xlu0 %v2836, 112
  %v2873 = vpop.permute.xlu0 %2872
  %2874 = vrot.lane.b32.xlu0 %v2851, 112
  %v2875 = vpop.permute.xlu0 %2874
  %v2884 = vmul.f32 %v2692, %v2861
  %v2885 = vmul.f32 %v2693, %v2863
  %v2886 = vmul.f32 %v2694, %v2865
  %v2887 = vmul.f32 %v2695, %v2867
  %v2888 = vmul.f32 %v2696, %v2869
  %v2889 = vmul.f32 %v2697, %v2871
  %v2890 = vmul.f32 %v2698, %v2873
  %v2891 = vmul.f32 %v2699, %v2875
  %s2892 = scalar_lea.vmem %s5, 64
  %v2893 = vld [vmem:[%s2892] sm:$0xff]
  %v2894 = vld [vmem:[%s2892 + $0x8] sm:$0xff]
  %s2895 = scalar_lea.vmem %s7, 4
  %v2896 = vld [vmem:[%s2895] sm:$0x1]
  %v2898 = vperm.slane %v2896, 0
  %v2901 = vsel %vm707, %v2884, 0
  %v2904 = vsel %vm707, %v2885, 0
  %v2907 = vsel %vm707, %v2886, 0
  %v2910 = vsel %vm707, %v2887, 0
  %v2913 = vsel %vm707, %v2888, 0
  %v2916 = vsel %vm707, %v2889, 0
  %v2919 = vsel %vm707, %v2890, 0
  %v2922 = vsel %vm707, %v2891, 0
  %2924 = vmatpush.msra.mxu0 0.0
  %2925 = vmatpush.msra.mxu0 0.0
  %2926 = vmatpush.msra.mxu0 0.0
  %2927 = vmatpush.msra.mxu0 0.0
  %2928 = vmatpush.msra.mxu0 0.0
  %2929 = vmatpush.msra.mxu0 0.0
  %2930 = vmatpush.msra.mxu0 0.0
  %2931 = vmatpush.msra.mxu0 0.0
  %2932 = vmatpush.msra.mxu0 0.0
  %2933 = vmatpush.msra.mxu0 0.0
  %2934 = vmatpush.msra.mxu0 0.0
  %2935 = vmatpush.msra.mxu0 0.0
  %2936 = vmatpush.msra.mxu0 0.0
  %2937 = vmatpush.msra.mxu0 0.0
  %2938 = vmatpush.msra.mxu0 %v2894
  %2939 = vmatpush.msra.mxu0 %v2893
  %2940 = vmatmul.f32.gmra.mxu0 %v2901
  %v2941 = vpop.f32.mrf.mxu0
  %v2942 = vadd.f32 %v2898, %v2941
  %2943 = vmatmul.f32.gmra.mxu0 %v2904
  %v2944 = vpop.f32.mrf.mxu0
  %v2945 = vadd.f32 %v2898, %v2944
  %2946 = vmatmul.f32.gmra.mxu0 %v2907
  %v2947 = vpop.f32.mrf.mxu0
  %v2948 = vadd.f32 %v2898, %v2947
  %2949 = vmatmul.f32.gmra.mxu0 %v2910
  %v2950 = vpop.f32.mrf.mxu0
  %v2951 = vadd.f32 %v2898, %v2950
  %2952 = vmatmul.f32.gmra.mxu0 %v2913
  %v2953 = vpop.f32.mrf.mxu0
  %v2954 = vadd.f32 %v2898, %v2953
  %2955 = vmatmul.f32.gmra.mxu0 %v2916
  %v2956 = vpop.f32.mrf.mxu0
  %v2957 = vadd.f32 %v2898, %v2956
  %2958 = vmatmul.f32.gmra.mxu0 %v2919
  %v2959 = vpop.f32.mrf.mxu0
  %v2960 = vadd.f32 %v2898, %v2959
  %2961 = vmatmul.f32.gmra.mxu0 %v2922
  %v2962 = vpop.f32.mrf.mxu0
  %v2963 = vadd.f32 %v2898, %v2962
  %2964 = vdwg.mxu0
  %v2965 = vadd.f32 %v2473, %v2942
  %v2966 = vadd.f32 %v2474, %v2945
  %v2967 = vadd.f32 %v2475, %v2948
  %v2968 = vadd.f32 %v2476, %v2951
  %v2969 = vadd.f32 %v2477, %v2954
  %v2970 = vadd.f32 %v2478, %v2957
  %v2971 = vadd.f32 %v2479, %v2960
  %v2972 = vadd.f32 %v2480, %v2963
  %v2973 = vmul.f32 %v2965, %v94
  %v2974 = vmul.f32 %v2966, %v95
  %v2975 = vmul.f32 %v2967, %v96
  %v2976 = vmul.f32 %v2968, %v97
  %v2977 = vmul.f32 %v2969, %v98
  %v2978 = vmul.f32 %v2970, %v99
  %v2979 = vmul.f32 %v2971, %v100
  %v2980 = vmul.f32 %v2972, %v101
  %v2981 = vrot.slane %v2973, 4
  %v2982 = vrot.slane %v2974, 4
  %v2983 = vrot.slane %v2975, 4
  %v2984 = vrot.slane %v2976, 4
  %v2985 = vrot.slane %v2977, 4
  %v2986 = vrot.slane %v2978, 4
  %v2987 = vrot.slane %v2979, 4
  %v2988 = vrot.slane %v2980, 4
  %v2989 = vsel %vm1443, %v2987, %v2988
  %v2990 = vsel %vm1443, %v2986, %v2987
  %v2991 = vsel %vm1443, %v2985, %v2986
  %v2992 = vsel %vm1443, %v2984, %v2985
  %v2993 = vsel %vm1443, %v2983, %v2984
  %v2994 = vsel %vm1443, %v2982, %v2983
  %v2995 = vsel %vm1443, %v2981, %v2982
  %v2996 = vsel %vm1443, %v2988, %v2981
  %v2997 = vmul.f32 %v2996, %v1427
  %v2998 = vmul.f32 %v2995, %v1428
  %v2999 = vmul.f32 %v2994, %v1429
  %v3000 = vmul.f32 %v2993, %v1430
  %v3001 = vmul.f32 %v2992, %v1431
  %v3002 = vmul.f32 %v2991, %v1432
  %v3003 = vmul.f32 %v2990, %v1433
  %v3004 = vmul.f32 %v2989, %v1434
  %v3005 = vmul.f32 %v2995, %v1500
  %v3006 = vmul.f32 %v2994, %v1501
  %v3007 = vmul.f32 %v2993, %v1502
  %v3008 = vmul.f32 %v2992, %v1503
  %v3009 = vmul.f32 %v2991, %v1504
  %v3010 = vmul.f32 %v2990, %v1505
  %v3011 = vmul.f32 %v2989, %v1506
  %v3012 = vmul.f32 %v2996, %v1507
  %3021 = vrot.lane.b32.xlu0 %v2973, 32
  %v3022 = vpop.permute.xlu0 %3021
  %3023 = vrot.lane.b32.xlu0 %v2974, 32
  %v3024 = vpop.permute.xlu0 %3023
  %3025 = vrot.lane.b32.xlu0 %v2975, 32
  %v3026 = vpop.permute.xlu0 %3025
  %3027 = vrot.lane.b32.xlu0 %v2976, 32
  %v3028 = vpop.permute.xlu0 %3027
  %3029 = vrot.lane.b32.xlu0 %v2977, 32
  %v3030 = vpop.permute.xlu0 %3029
  %3031 = vrot.lane.b32.xlu0 %v2978, 32
  %v3032 = vpop.permute.xlu0 %3031
  %3033 = vrot.lane.b32.xlu0 %v2979, 32
  %v3034 = vpop.permute.xlu0 %3033
  %3035 = vrot.lane.b32.xlu0 %v2980, 32
  %v3036 = vpop.permute.xlu0 %3035
  %3053 = vrot.lane.b32.xlu0 %v3005, 64
  %v3054 = vpop.permute.xlu0 %3053
  %3055 = vrot.lane.b32.xlu0 %v3006, 64
  %v3056 = vpop.permute.xlu0 %3055
  %3057 = vrot.lane.b32.xlu0 %v3007, 64
  %v3058 = vpop.permute.xlu0 %3057
  %3059 = vrot.lane.b32.xlu0 %v3008, 64
  %v3060 = vpop.permute.xlu0 %3059
  %3061 = vrot.lane.b32.xlu0 %v3009, 64
  %v3062 = vpop.permute.xlu0 %3061
  %3063 = vrot.lane.b32.xlu0 %v3010, 64
  %v3064 = vpop.permute.xlu0 %3063
  %3065 = vrot.lane.b32.xlu0 %v3011, 64
  %v3066 = vpop.permute.xlu0 %3065
  %3067 = vrot.lane.b32.xlu0 %v3012, 64
  %v3068 = vpop.permute.xlu0 %3067
  %v3077 = vsel %vm401, %v2997, %v3022
  %v3078 = vsel %vm401, %v2998, %v3024
  %v3079 = vsel %vm401, %v2999, %v3026
  %v3080 = vsel %vm401, %v3000, %v3028
  %v3081 = vsel %vm401, %v3001, %v3030
  %v3082 = vsel %vm401, %v3002, %v3032
  %v3083 = vsel %vm401, %v3003, %v3034
  %v3084 = vsel %vm401, %v3004, %v3036
  %v3085 = vsel %vm410, %v3077, %v3054
  %v3086 = vsel %vm410, %v3078, %v3056
  %v3087 = vsel %vm410, %v3079, %v3058
  %v3088 = vsel %vm410, %v3080, %v3060
  %v3089 = vsel %vm410, %v3081, %v3062
  %v3090 = vsel %vm410, %v3082, %v3064
  %v3091 = vsel %vm410, %v3083, %v3066
  %v3092 = vsel %vm410, %v3084, %v3068
  %s3093 = scalar_lea.vmem %s4, 480
  %v3094 = vld [vmem:[%s3093] sm:$0xff]
  %v3095 = vld [vmem:[%s3093 + $0x8] sm:$0xff]
  %v3096 = vld [vmem:[%s3093 + $0x10] sm:$0xff]
  %v3097 = vld [vmem:[%s3093 + $0x18] sm:$0xff]
  %v3098 = vld [vmem:[%s3093 + $0x20] sm:$0xff]
  %v3099 = vld [vmem:[%s3093 + $0x28] sm:$0xff]
  %v3100 = vld [vmem:[%s3093 + $0x30] sm:$0xff]
  %v3101 = vld [vmem:[%s3093 + $0x38] sm:$0xff]
  %v3102 = vld [vmem:[%s3093 + $0x40] sm:$0xff]
  %v3103 = vld [vmem:[%s3093 + $0x48] sm:$0xff]
  %v3104 = vld [vmem:[%s3093 + $0x50] sm:$0xff]
  %v3105 = vld [vmem:[%s3093 + $0x58] sm:$0xff]
  %s3106 = scalar_lea.vmem %s6, 5
  %v3107 = vld [vmem:[%s3106] sm:$0x1]
  %v3109 = vperm.slane %v3107, 0
  %v3112 = vsel %vm435, %v3085, 0
  %v3115 = vsel %vm435, %v3086, 0
  %v3118 = vsel %vm435, %v3087, 0
  %v3121 = vsel %vm435, %v3088, 0
  %v3124 = vsel %vm435, %v3089, 0
  %v3127 = vsel %vm435, %v3090, 0
  %v3130 = vsel %vm435, %v3091, 0
  %v3133 = vsel %vm435, %v3092, 0
  %3135 = vmatpush.msra.mxu0 0.0
  %3136 = vmatpush.msra.mxu0 0.0
  %3137 = vmatpush.msra.mxu0 0.0
  %3138 = vmatpush.msra.mxu0 0.0
  %3139 = vmatpush.msra.mxu0 %v3105
  %3140 = vmatpush.msra.mxu0 %v3104
  %3141 = vmatpush.msra.mxu0 %v3103
  %3142 = vmatpush.msra.mxu0 %v3102
  %3143 = vmatpush.msra.mxu0 %v3101
  %3144 = vmatpush.msra.mxu0 %v3100
  %3145 = vmatpush.msra.mxu0 %v3099
  %3146 = vmatpush.msra.mxu0 %v3098
  %3147 = vmatpush.msra.mxu0 %v3097
  %3148 = vmatpush.msra.mxu0 %v3096
  %3149 = vmatpush.msra.mxu0 %v3095
  %3150 = vmatpush.msra.mxu0 %v3094
  %3151 = vmatmul.f32.gmra.mxu0 %v3112
  %v3152 = vpop.f32.mrf.mxu0
  %v3153 = vadd.f32 %v3109, %v3152
  %3154 = vmatmul.f32.gmra.mxu0 %v3115
  %v3155 = vpop.f32.mrf.mxu0
  %v3156 = vadd.f32 %v3109, %v3155
  %3157 = vmatmul.f32.gmra.mxu0 %v3118
  %v3158 = vpop.f32.mrf.mxu0
  %v3159 = vadd.f32 %v3109, %v3158
  %3160 = vmatmul.f32.gmra.mxu0 %v3121
  %v3161 = vpop.f32.mrf.mxu0
  %v3162 = vadd.f32 %v3109, %v3161
  %3163 = vmatmul.f32.gmra.mxu0 %v3124
  %v3164 = vpop.f32.mrf.mxu0
  %v3165 = vadd.f32 %v3109, %v3164
  %3166 = vmatmul.f32.gmra.mxu0 %v3127
  %v3167 = vpop.f32.mrf.mxu0
  %v3168 = vadd.f32 %v3109, %v3167
  %3169 = vmatmul.f32.gmra.mxu0 %v3130
  %v3170 = vpop.f32.mrf.mxu0
  %v3171 = vadd.f32 %v3109, %v3170
  %3172 = vmatmul.f32.gmra.mxu0 %v3133
  %v3173 = vpop.f32.mrf.mxu0
  %v3174 = vadd.f32 %v3109, %v3173
  %3175 = vdwg.mxu0
  %v3176 = vtanh.pop %v3153
  %v3177 = vtanh.pop %v3156
  %v3178 = vtanh.pop %v3159
  %v3179 = vtanh.pop %v3162
  %v3180 = vtanh.pop %v3165
  %v3181 = vtanh.pop %v3168
  %v3182 = vtanh.pop %v3171
  %v3183 = vtanh.pop %v3174
  %v3184 = vxor.u32 %v3153, 2147483648
  %v3185 = vxor.u32 %v3156, 2147483648
  %v3186 = vxor.u32 %v3159, 2147483648
  %v3187 = vxor.u32 %v3162, 2147483648
  %v3188 = vxor.u32 %v3165, 2147483648
  %v3189 = vxor.u32 %v3168, 2147483648
  %v3190 = vxor.u32 %v3171, 2147483648
  %v3191 = vxor.u32 %v3174, 2147483648
  %v3192 = vmul.f32 %v3184, 1.442695
  %v3193 = vpow.pop %v3192
  %v3194 = vmul.f32 %v3185, 1.442695
  %v3195 = vpow.pop %v3194
  %v3196 = vmul.f32 %v3186, 1.442695
  %v3197 = vpow.pop %v3196
  %v3198 = vmul.f32 %v3187, 1.442695
  %v3199 = vpow.pop %v3198
  %v3200 = vmul.f32 %v3188, 1.442695
  %v3201 = vpow.pop %v3200
  %v3202 = vmul.f32 %v3189, 1.442695
  %v3203 = vpow.pop %v3202
  %v3204 = vmul.f32 %v3190, 1.442695
  %v3205 = vpow.pop %v3204
  %v3206 = vmul.f32 %v3191, 1.442695
  %v3207 = vpow.pop %v3206
  %v3208 = vadd.f32 %v3193, 1.0
  %v3209 = vadd.f32 %v3195, 1.0
  %v3210 = vadd.f32 %v3197, 1.0
  %v3211 = vadd.f32 %v3199, 1.0
  %v3212 = vadd.f32 %v3201, 1.0
  %v3213 = vadd.f32 %v3203, 1.0
  %v3214 = vadd.f32 %v3205, 1.0
  %v3215 = vadd.f32 %v3207, 1.0
  %v3216 = vrcp.pop %v3208
  %v3217 = vmul.f32 %v3208, %v3216
  %v3218 = vsub.f32 1.0, %v3217
  %v3219 = vmul.f32 %v3216, %v3218
  %v3220 = vadd.f32 %v3216, %v3219
  %vm3221 = vweird.f32 %v3208
  %vm3222 = vweird.f32 %v3216
  %vm3223 = vmor %vm3221, %vm3222
  %v3224 = vsel %vm3223, %v3216, %v3220
  %v3225 = vand.u32 2147483647, %v3208
  %vm3226 = vcmp.eq.f32.partialorder %v3225, 8.507059e+37
  %v3227 = vand.u32 %v3208, 2147483648
  %v3228 = vor.u32 1.1754944e-38, %v3227
  %v3229 = vsel %vm3226, %v3228, %v3224
  %v3230 = vmul.f32 1.0, %v3229
  %v3231 = vrcp.pop %v3209
  %v3232 = vmul.f32 %v3209, %v3231
  %v3233 = vsub.f32 1.0, %v3232
  %v3234 = vmul.f32 %v3231, %v3233
  %v3235 = vadd.f32 %v3231, %v3234
  %vm3236 = vweird.f32 %v3209
  %vm3237 = vweird.f32 %v3231
  %vm3238 = vmor %vm3236, %vm3237
  %v3239 = vsel %vm3238, %v3231, %v3235
  %v3240 = vand.u32 2147483647, %v3209
  %vm3241 = vcmp.eq.f32.partialorder %v3240, 8.507059e+37
  %v3242 = vand.u32 %v3209, 2147483648
  %v3243 = vor.u32 1.1754944e-38, %v3242
  %v3244 = vsel %vm3241, %v3243, %v3239
  %v3245 = vmul.f32 1.0, %v3244
  %v3246 = vrcp.pop %v3210
  %v3247 = vmul.f32 %v3210, %v3246
  %v3248 = vsub.f32 1.0, %v3247
  %v3249 = vmul.f32 %v3246, %v3248
  %v3250 = vadd.f32 %v3246, %v3249
  %vm3251 = vweird.f32 %v3210
  %vm3252 = vweird.f32 %v3246
  %vm3253 = vmor %vm3251, %vm3252
  %v3254 = vsel %vm3253, %v3246, %v3250
  %v3255 = vand.u32 2147483647, %v3210
  %vm3256 = vcmp.eq.f32.partialorder %v3255, 8.507059e+37
  %v3257 = vand.u32 %v3210, 2147483648
  %v3258 = vor.u32 1.1754944e-38, %v3257
  %v3259 = vsel %vm3256, %v3258, %v3254
  %v3260 = vmul.f32 1.0, %v3259
  %v3261 = vrcp.pop %v3211
  %v3262 = vmul.f32 %v3211, %v3261
  %v3263 = vsub.f32 1.0, %v3262
  %v3264 = vmul.f32 %v3261, %v3263
  %v3265 = vadd.f32 %v3261, %v3264
  %vm3266 = vweird.f32 %v3211
  %vm3267 = vweird.f32 %v3261
  %vm3268 = vmor %vm3266, %vm3267
  %v3269 = vsel %vm3268, %v3261, %v3265
  %v3270 = vand.u32 2147483647, %v3211
  %vm3271 = vcmp.eq.f32.partialorder %v3270, 8.507059e+37
  %v3272 = vand.u32 %v3211, 2147483648
  %v3273 = vor.u32 1.1754944e-38, %v3272
  %v3274 = vsel %vm3271, %v3273, %v3269
  %v3275 = vmul.f32 1.0, %v3274
  %v3276 = vrcp.pop %v3212
  %v3277 = vmul.f32 %v3212, %v3276
  %v3278 = vsub.f32 1.0, %v3277
  %v3279 = vmul.f32 %v3276, %v3278
  %v3280 = vadd.f32 %v3276, %v3279
  %vm3281 = vweird.f32 %v3212
  %vm3282 = vweird.f32 %v3276
  %vm3283 = vmor %vm3281, %vm3282
  %v3284 = vsel %vm3283, %v3276, %v3280
  %v3285 = vand.u32 2147483647, %v3212
  %vm3286 = vcmp.eq.f32.partialorder %v3285, 8.507059e+37
  %v3287 = vand.u32 %v3212, 2147483648
  %v3288 = vor.u32 1.1754944e-38, %v3287
  %v3289 = vsel %vm3286, %v3288, %v3284
  %v3290 = vmul.f32 1.0, %v3289
  %v3291 = vrcp.pop %v3213
  %v3292 = vmul.f32 %v3213, %v3291
  %v3293 = vsub.f32 1.0, %v3292
  %v3294 = vmul.f32 %v3291, %v3293
  %v3295 = vadd.f32 %v3291, %v3294
  %vm3296 = vweird.f32 %v3213
  %vm3297 = vweird.f32 %v3291
  %vm3298 = vmor %vm3296, %vm3297
  %v3299 = vsel %vm3298, %v3291, %v3295
  %v3300 = vand.u32 2147483647, %v3213
  %vm3301 = vcmp.eq.f32.partialorder %v3300, 8.507059e+37
  %v3302 = vand.u32 %v3213, 2147483648
  %v3303 = vor.u32 1.1754944e-38, %v3302
  %v3304 = vsel %vm3301, %v3303, %v3299
  %v3305 = vmul.f32 1.0, %v3304
  %v3306 = vrcp.pop %v3214
  %v3307 = vmul.f32 %v3214, %v3306
  %v3308 = vsub.f32 1.0, %v3307
  %v3309 = vmul.f32 %v3306, %v3308
  %v3310 = vadd.f32 %v3306, %v3309
  %vm3311 = vweird.f32 %v3214
  %vm3312 = vweird.f32 %v3306
  %vm3313 = vmor %vm3311, %vm3312
  %v3314 = vsel %vm3313, %v3306, %v3310
  %v3315 = vand.u32 2147483647, %v3214
  %vm3316 = vcmp.eq.f32.partialorder %v3315, 8.507059e+37
  %v3317 = vand.u32 %v3214, 2147483648
  %v3318 = vor.u32 1.1754944e-38, %v3317
  %v3319 = vsel %vm3316, %v3318, %v3314
  %v3320 = vmul.f32 1.0, %v3319
  %v3321 = vrcp.pop %v3215
  %v3322 = vmul.f32 %v3215, %v3321
  %v3323 = vsub.f32 1.0, %v3322
  %v3324 = vmul.f32 %v3321, %v3323
  %v3325 = vadd.f32 %v3321, %v3324
  %vm3326 = vweird.f32 %v3215
  %vm3327 = vweird.f32 %v3321
  %vm3328 = vmor %vm3326, %vm3327
  %v3329 = vsel %vm3328, %v3321, %v3325
  %v3330 = vand.u32 2147483647, %v3215
  %vm3331 = vcmp.eq.f32.partialorder %v3330, 8.507059e+37
  %v3332 = vand.u32 %v3215, 2147483648
  %v3333 = vor.u32 1.1754944e-38, %v3332
  %v3334 = vsel %vm3331, %v3333, %v3329
  %v3335 = vmul.f32 1.0, %v3334
  %3344 = vrot.lane.b32.xlu0 %v3230, 112
  %v3345 = vpop.permute.xlu0 %3344
  %3346 = vrot.lane.b32.xlu0 %v3245, 112
  %v3347 = vpop.permute.xlu0 %3346
  %3348 = vrot.lane.b32.xlu0 %v3260, 112
  %v3349 = vpop.permute.xlu0 %3348
  %3350 = vrot.lane.b32.xlu0 %v3275, 112
  %v3351 = vpop.permute.xlu0 %3350
  %3352 = vrot.lane.b32.xlu0 %v3290, 112
  %v3353 = vpop.permute.xlu0 %3352
  %3354 = vrot.lane.b32.xlu0 %v3305, 112
  %v3355 = vpop.permute.xlu0 %3354
  %3356 = vrot.lane.b32.xlu0 %v3320, 112
  %v3357 = vpop.permute.xlu0 %3356
  %3358 = vrot.lane.b32.xlu0 %v3335, 112
  %v3359 = vpop.permute.xlu0 %3358
  %v3368 = vmul.f32 %v3176, %v3345
  %v3369 = vmul.f32 %v3177, %v3347
  %v3370 = vmul.f32 %v3178, %v3349
  %v3371 = vmul.f32 %v3179, %v3351
  %v3372 = vmul.f32 %v3180, %v3353
  %v3373 = vmul.f32 %v3181, %v3355
  %v3374 = vmul.f32 %v3182, %v3357
  %v3375 = vmul.f32 %v3183, %v3359
  %s3376 = scalar_lea.vmem %s5, 80
  %v3377 = vld [vmem:[%s3376] sm:$0xff]
  %v3378 = vld [vmem:[%s3376 + $0x8] sm:$0xff]
  %s3379 = scalar_lea.vmem %s7, 5
  %v3380 = vld [vmem:[%s3379] sm:$0x1]
  %v3382 = vperm.slane %v3380, 0
  %v3385 = vsel %vm707, %v3368, 0
  %v3388 = vsel %vm707, %v3369, 0
  %v3391 = vsel %vm707, %v3370, 0
  %v3394 = vsel %vm707, %v3371, 0
  %v3397 = vsel %vm707, %v3372, 0
  %v3400 = vsel %vm707, %v3373, 0
  %v3403 = vsel %vm707, %v3374, 0
  %v3406 = vsel %vm707, %v3375, 0
  %3408 = vmatpush.msra.mxu0 0.0
  %3409 = vmatpush.msra.mxu0 0.0
  %3410 = vmatpush.msra.mxu0 0.0
  %3411 = vmatpush.msra.mxu0 0.0
  %3412 = vmatpush.msra.mxu0 0.0
  %3413 = vmatpush.msra.mxu0 0.0
  %3414 = vmatpush.msra.mxu0 0.0
  %3415 = vmatpush.msra.mxu0 0.0
  %3416 = vmatpush.msra.mxu0 0.0
  %3417 = vmatpush.msra.mxu0 0.0
  %3418 = vmatpush.msra.mxu0 0.0
  %3419 = vmatpush.msra.mxu0 0.0
  %3420 = vmatpush.msra.mxu0 0.0
  %3421 = vmatpush.msra.mxu0 0.0
  %3422 = vmatpush.msra.mxu0 %v3378
  %3423 = vmatpush.msra.mxu0 %v3377
  %3424 = vmatmul.f32.gmra.mxu0 %v3385
  %v3425 = vpop.f32.mrf.mxu0
  %v3426 = vadd.f32 %v3382, %v3425
  %3427 = vmatmul.f32.gmra.mxu0 %v3388
  %v3428 = vpop.f32.mrf.mxu0
  %v3429 = vadd.f32 %v3382, %v3428
  %3430 = vmatmul.f32.gmra.mxu0 %v3391
  %v3431 = vpop.f32.mrf.mxu0
  %v3432 = vadd.f32 %v3382, %v3431
  %3433 = vmatmul.f32.gmra.mxu0 %v3394
  %v3434 = vpop.f32.mrf.mxu0
  %v3435 = vadd.f32 %v3382, %v3434
  %3436 = vmatmul.f32.gmra.mxu0 %v3397
  %v3437 = vpop.f32.mrf.mxu0
  %v3438 = vadd.f32 %v3382, %v3437
  %3439 = vmatmul.f32.gmra.mxu0 %v3400
  %v3440 = vpop.f32.mrf.mxu0
  %v3441 = vadd.f32 %v3382, %v3440
  %3442 = vmatmul.f32.gmra.mxu0 %v3403
  %v3443 = vpop.f32.mrf.mxu0
  %v3444 = vadd.f32 %v3382, %v3443
  %3445 = vmatmul.f32.gmra.mxu0 %v3406
  %v3446 = vpop.f32.mrf.mxu0
  %v3447 = vadd.f32 %v3382, %v3446
  %3448 = vdwg.mxu0
  %v3449 = vadd.f32 %v2973, %v3426
  %v3450 = vadd.f32 %v2974, %v3429
  %v3451 = vadd.f32 %v2975, %v3432
  %v3452 = vadd.f32 %v2976, %v3435
  %v3453 = vadd.f32 %v2977, %v3438
  %v3454 = vadd.f32 %v2978, %v3441
  %v3455 = vadd.f32 %v2979, %v3444
  %v3456 = vadd.f32 %v2980, %v3447
  %v3457 = vmul.f32 %v3449, %v94
  %v3458 = vmul.f32 %v3450, %v95
  %v3459 = vmul.f32 %v3451, %v96
  %v3460 = vmul.f32 %v3452, %v97
  %v3461 = vmul.f32 %v3453, %v98
  %v3462 = vmul.f32 %v3454, %v99
  %v3463 = vmul.f32 %v3455, %v100
  %v3464 = vmul.f32 %v3456, %v101
  %v3465 = vld [vmem:[%s8] sm:$0xff]
  %v3466 = vld [vmem:[%s8 + $0x8] sm:$0xff]
  %v3467 = vld [vmem:[%s8 + $0x10] sm:$0xff]
  %v3468 = vld [vmem:[%s8 + $0x18] sm:$0xff]
  %v3469 = vld [vmem:[%s9] sm:$0x1]
  %v3471 = vperm.slane %v3469, 0
  %v3474 = vsel %vm401, %v3457, 0
  %v3477 = vsel %vm401, %v3458, 0
  %v3480 = vsel %vm401, %v3459, 0
  %v3483 = vsel %vm401, %v3460, 0
  %v3486 = vsel %vm401, %v3461, 0
  %v3489 = vsel %vm401, %v3462, 0
  %v3492 = vsel %vm401, %v3463, 0
  %v3495 = vsel %vm401, %v3464, 0
  %3497 = vmatpush.msra.mxu0 0.0
  %3498 = vmatpush.msra.mxu0 0.0
  %3499 = vmatpush.msra.mxu0 0.0
  %3500 = vmatpush.msra.mxu0 0.0
  %3501 = vmatpush.msra.mxu0 0.0
  %3502 = vmatpush.msra.mxu0 0.0
  %3503 = vmatpush.msra.mxu0 0.0
  %3504 = vmatpush.msra.mxu0 0.0
  %3505 = vmatpush.msra.mxu0 0.0
  %3506 = vmatpush.msra.mxu0 0.0
  %3507 = vmatpush.msra.mxu0 0.0
  %3508 = vmatpush.msra.mxu0 0.0
  %3509 = vmatpush.msra.mxu0 %v3468
  %3510 = vmatpush.msra.mxu0 %v3467
  %3511 = vmatpush.msra.mxu0 %v3466
  %3512 = vmatpush.msra.mxu0 %v3465
  %3513 = vmatmul.f32.gmra.mxu0 %v3474
  %v3514 = vpop.f32.mrf.mxu0
  %v3515 = vadd.f32 %v3471, %v3514
  %3516 = vmatmul.f32.gmra.mxu0 %v3477
  %v3517 = vpop.f32.mrf.mxu0
  %v3518 = vadd.f32 %v3471, %v3517
  %3519 = vmatmul.f32.gmra.mxu0 %v3480
  %v3520 = vpop.f32.mrf.mxu0
  %v3521 = vadd.f32 %v3471, %v3520
  %3522 = vmatmul.f32.gmra.mxu0 %v3483
  %v3523 = vpop.f32.mrf.mxu0
  %v3524 = vadd.f32 %v3471, %v3523
  %3525 = vmatmul.f32.gmra.mxu0 %v3486
  %v3526 = vpop.f32.mrf.mxu0
  %v3527 = vadd.f32 %v3471, %v3526
  %3528 = vmatmul.f32.gmra.mxu0 %v3489
  %v3529 = vpop.f32.mrf.mxu0
  %v3530 = vadd.f32 %v3471, %v3529
  %3531 = vmatmul.f32.gmra.mxu0 %v3492
  %v3532 = vpop.f32.mrf.mxu0
  %v3533 = vadd.f32 %v3471, %v3532
  %3534 = vmatmul.f32.gmra.mxu0 %v3495
  %v3535 = vpop.f32.mrf.mxu0
  %v3536 = vadd.f32 %v3471, %v3535
  %3537 = vdwg.mxu0
  %v3538 = vmax.f32 %v3515, 0.0
  %v3539 = vmax.f32 %v3518, 0.0
  %v3540 = vmax.f32 %v3521, 0.0
  %v3541 = vmax.f32 %v3524, 0.0
  %v3542 = vmax.f32 %v3527, 0.0
  %v3543 = vmax.f32 %v3530, 0.0
  %v3544 = vmax.f32 %v3533, 0.0
  %v3545 = vmax.f32 %v3536, 0.0
  %v3546 = vand.u32 2147483647, %v3515
  %v3547 = vand.u32 2147483647, %v3518
  %v3548 = vand.u32 2147483647, %v3521
  %v3549 = vand.u32 2147483647, %v3524
  %v3550 = vand.u32 2147483647, %v3527
  %v3551 = vand.u32 2147483647, %v3530
  %v3552 = vand.u32 2147483647, %v3533
  %v3553 = vand.u32 2147483647, %v3536
  %v3554 = vsub.f32 0.0, %v3546
  %v3555 = vsub.f32 0.0, %v3547
  %v3556 = vsub.f32 0.0, %v3548
  %v3557 = vsub.f32 0.0, %v3549
  %v3558 = vsub.f32 0.0, %v3550
  %v3559 = vsub.f32 0.0, %v3551
  %v3560 = vsub.f32 0.0, %v3552
  %v3561 = vsub.f32 0.0, %v3553
  %v3562 = vmul.f32 %v3554, 1.442695
  %v3563 = vpow.pop %v3562
  %v3564 = vmul.f32 %v3555, 1.442695
  %v3565 = vpow.pop %v3564
  %v3566 = vmul.f32 %v3556, 1.442695
  %v3567 = vpow.pop %v3566
  %v3568 = vmul.f32 %v3557, 1.442695
  %v3569 = vpow.pop %v3568
  %v3570 = vmul.f32 %v3558, 1.442695
  %v3571 = vpow.pop %v3570
  %v3572 = vmul.f32 %v3559, 1.442695
  %v3573 = vpow.pop %v3572
  %v3574 = vmul.f32 %v3560, 1.442695
  %v3575 = vpow.pop %v3574
  %v3576 = vmul.f32 %v3561, 1.442695
  %v3577 = vpow.pop %v3576
  %v3578 = vadd.f32 %v3563, 1.0
  %v3579 = vlog2.pop %v3578
  %v3580 = vmul.f32 %v3579, 0.6931472
  %v3581 = vmul.f32 -0.5, %v3563
  %v3582 = vadd.f32 %v3581, 1.0
  %v3583 = vmul.f32 %v3582, %v3563
  %v3584 = vand.u32 2147483647, %v3563
  %vm3585 = vcmp.lt.f32.partialorder %v3584, 0.0004427343
  %v3586 = vsel %vm3585, %v3583, %v3580
  %v3587 = vadd.f32 %v3565, 1.0
  %v3588 = vlog2.pop %v3587
  %v3589 = vmul.f32 %v3588, 0.6931472
  %v3590 = vmul.f32 -0.5, %v3565
  %v3591 = vadd.f32 %v3590, 1.0
  %v3592 = vmul.f32 %v3591, %v3565
  %v3593 = vand.u32 2147483647, %v3565
  %vm3594 = vcmp.lt.f32.partialorder %v3593, 0.0004427343
  %v3595 = vsel %vm3594, %v3592, %v3589
  %v3596 = vadd.f32 %v3567, 1.0
  %v3597 = vlog2.pop %v3596
  %v3598 = vmul.f32 %v3597, 0.6931472
  %v3599 = vmul.f32 -0.5, %v3567
  %v3600 = vadd.f32 %v3599, 1.0
  %v3601 = vmul.f32 %v3600, %v3567
  %v3602 = vand.u32 2147483647, %v3567
  %vm3603 = vcmp.lt.f32.partialorder %v3602, 0.0004427343
  %v3604 = vsel %vm3603, %v3601, %v3598
  %v3605 = vadd.f32 %v3569, 1.0
  %v3606 = vlog2.pop %v3605
  %v3607 = vmul.f32 %v3606, 0.6931472
  %v3608 = vmul.f32 -0.5, %v3569
  %v3609 = vadd.f32 %v3608, 1.0
  %v3610 = vmul.f32 %v3609, %v3569
  %v3611 = vand.u32 2147483647, %v3569
  %vm3612 = vcmp.lt.f32.partialorder %v3611, 0.0004427343
  %v3613 = vsel %vm3612, %v3610, %v3607
  %v3614 = vadd.f32 %v3571, 1.0
  %v3615 = vlog2.pop %v3614
  %v3616 = vmul.f32 %v3615, 0.6931472
  %v3617 = vmul.f32 -0.5, %v3571
  %v3618 = vadd.f32 %v3617, 1.0
  %v3619 = vmul.f32 %v3618, %v3571
  %v3620 = vand.u32 2147483647, %v3571
  %vm3621 = vcmp.lt.f32.partialorder %v3620, 0.0004427343
  %v3622 = vsel %vm3621, %v3619, %v3616
  %v3623 = vadd.f32 %v3573, 1.0
  %v3624 = vlog2.pop %v3623
  %v3625 = vmul.f32 %v3624, 0.6931472
  %v3626 = vmul.f32 -0.5, %v3573
  %v3627 = vadd.f32 %v3626, 1.0
  %v3628 = vmul.f32 %v3627, %v3573
  %v3629 = vand.u32 2147483647, %v3573
  %vm3630 = vcmp.lt.f32.partialorder %v3629, 0.0004427343
  %v3631 = vsel %vm3630, %v3628, %v3625
  %v3632 = vadd.f32 %v3575, 1.0
  %v3633 = vlog2.pop %v3632
  %v3634 = vmul.f32 %v3633, 0.6931472
  %v3635 = vmul.f32 -0.5, %v3575
  %v3636 = vadd.f32 %v3635, 1.0
  %v3637 = vmul.f32 %v3636, %v3575
  %v3638 = vand.u32 2147483647, %v3575
  %vm3639 = vcmp.lt.f32.partialorder %v3638, 0.0004427343
  %v3640 = vsel %vm3639, %v3637, %v3634
  %v3641 = vadd.f32 %v3577, 1.0
  %v3642 = vlog2.pop %v3641
  %v3643 = vmul.f32 %v3642, 0.6931472
  %v3644 = vmul.f32 -0.5, %v3577
  %v3645 = vadd.f32 %v3644, 1.0
  %v3646 = vmul.f32 %v3645, %v3577
  %v3647 = vand.u32 2147483647, %v3577
  %vm3648 = vcmp.lt.f32.partialorder %v3647, 0.0004427343
  %v3649 = vsel %vm3648, %v3646, %v3643
  %v3650 = vadd.f32 %v3538, %v3586
  %v3651 = vadd.f32 %v3539, %v3595
  %v3652 = vadd.f32 %v3540, %v3604
  %v3653 = vadd.f32 %v3541, %v3613
  %v3654 = vadd.f32 %v3542, %v3622
  %v3655 = vadd.f32 %v3543, %v3631
  %v3656 = vadd.f32 %v3544, %v3640
  %v3657 = vadd.f32 %v3545, %v3649
  %v3658 = vsel %vm1968, 1, 0
  %vm3659 = vcmp.eq.s32.totalorder %v3658, 1
  %v3660 = vsel %vm3659, %v3650, %v3515
  %v3661 = vsel %vm3659, %v3651, %v3518
  %v3662 = vsel %vm3659, %v3652, %v3521
  %v3663 = vsel %vm3659, %v3653, %v3524
  %v3664 = vsel %vm3659, %v3654, %v3527
  %v3665 = vsel %vm3659, %v3655, %v3530
  %v3666 = vsel %vm3659, %v3656, %v3533
  %v3667 = vsel %vm3659, %v3657, %v3536
  %3668 = vst [vmem:[%s10] sm:$0xff] %v3660
  %3669 = vst [vmem:[%s10 + $0x8] sm:$0xff] %v3661
  %3670 = vst [vmem:[%s10 + $0x10] sm:$0xff] %v3662
  %3671 = vst [vmem:[%s10 + $0x18] sm:$0xff] %v3663
  %3672 = vst [vmem:[%s10 + $0x20] sm:$0xff] %v3664
  %3673 = vst [vmem:[%s10 + $0x28] sm:$0xff] %v3665
  %3674 = vst [vmem:[%s10 + $0x30] sm:$0xff] %v3666
  %3675 = vst [vmem:[%s10 + $0x38] sm:$0xff] %v3667
  // Predicated region
  $region38: #{feature_encoder.1} parent=0 // pred_check
    _
  $region39: #{feature_encoder.1} parent=0 // pred_check_branch
    %3677 = sbr.rel (0) target = $region41
  $region40: #{feature_encoder.1} parent=0 // pred_region
    _
  $region41: #{feature_encoder.1} parent=0 // pred_fallthru
    _
  // Predicated region
  $region42: #{feature_encoder.1} parent=0 // pred_check
    _
  $region43: #{feature_encoder.1} parent=0 // pred_check_branch
    %3679 = sbr.rel (0) target = $region45
  $region44: #{feature_encoder.1} parent=0 // pred_region
    _
  $region45: #{feature_encoder.1} parent=0 // pred_fallthru
    _

</llo_original>
